<compile_context>
chip_gen: v6e
topology: v6e:2x2x1
jax: 0.10.0
libtpu: 0.0.40
codegen_flags: <defaults>
</compile_context>

<pallas_src>
import math

import jax
import jax.numpy as jnp
from jax.experimental import pallas as pl
from jax.experimental.pallas import tpu as pltpu


# ---------------------------------------------------------------------------
# fused forward kernel (embedding -> n_layers x GraphSage -> readout)
# ---------------------------------------------------------------------------
def _make_fused_kernel(n_layers):
    def kernel(*refs):
        # refs: x[M,node_dim](bf16), a[B,N,N](bf16, row-normalized),
        #       emb_w(bf16), emb_b(f32),
        #       (w_h, w_c, b, gamma, beta) * n_layers   (w_* bf16, rest f32),
        #       ro_w(bf16), out[B,out_dim](f32)
        x_ref, a_ref, emb_w_ref, emb_b_ref = refs[:4]
        layer_refs = refs[4:4 + 5 * n_layers]
        ro_w_ref = refs[4 + 5 * n_layers]
        o_ref = refs[4 + 5 * n_layers + 1]

        B, N, _ = a_ref.shape
        M = B * N

        a = a_ref[...]                                   # bf16 [B, N, N]

        # --- embedding_h: Linear(node_dim, in_dim) --------------------------
        h = (jnp.dot(x_ref[...], emb_w_ref[...],
                     preferred_element_type=jnp.float32)
             + emb_b_ref[...])                           # [M, in_dim] f32

        # --- GraphSage layers (unrolled at trace time) ----------------------
        for l in range(n_layers):
            w_h_ref, w_c_ref, b_ref, g_ref, be_ref = layer_refs[5 * l:5 * l + 5]
            din = h.shape[-1]

            hb = h.astype(jnp.bfloat16)                  # MXU operand

            # MeanAggregator: per-graph mean over in-neighbours
            # (1/deg folded into `a` in the wrapper) -> batched MXU matmul.
            c = jnp.einsum("bij,bjd->bid", a, hb.reshape(B, N, din),
                           preferred_element_type=jnp.float32
                           ).reshape(M, din)             # [M, din] f32

            # NodeApply: Linear(concat(h, c)) == h @ W_h + c @ W_c + b
            z = (jnp.dot(hb, w_h_ref[...],
                         preferred_element_type=jnp.float32)
                 + jnp.dot(c.astype(jnp.bfloat16), w_c_ref[...],
                           preferred_element_type=jnp.float32)
                 + b_ref[...])                           # [M, dout] f32

            # F.normalize(p=2, dim=1), eps=1e-12  (rsqrt(max(ss, eps^2)))
            ss = jnp.sum(z * z, axis=-1, keepdims=True)
            z = z * jax.lax.rsqrt(jnp.maximum(ss, 1e-24))

            # relu
            z = jnp.maximum(z, 0.0)

            # BatchNorm1d over all B*N nodes, one-pass batch statistics
            mean = jnp.mean(z, axis=0, keepdims=True)
            meansq = jnp.mean(z * z, axis=0, keepdims=True)
            var = jnp.maximum(meansq - mean * mean, 0.0)
            h = (z - mean) * jax.lax.rsqrt(var + 1e-5) * g_ref[...] + be_ref[...]

        # --- readout: dgl.mean_nodes + Linear(no bias) ----------------------
        hid = h.shape[-1]
        hg = jnp.mean(h.reshape(B, N, hid), axis=1)      # [B, hid] f32
        o_ref[...] = jnp.dot(hg.astype(jnp.bfloat16), ro_w_ref[...],
                             preferred_element_type=jnp.float32
                             ).astype(o_ref.dtype)

    return kernel


# ---------------------------------------------------------------------------
# Parameter init (deterministic, PyTorch-Linear-style uniform)
# ---------------------------------------------------------------------------
def _linear_init(key, fan_in, fan_out, bias=True):
    bound = 1.0 / float(fan_in) ** 0.5
    kw, kb = jax.random.split(key)
    w = jax.random.uniform(kw, (fan_in, fan_out), jnp.float32, -bound, bound)
    b = (jax.random.uniform(kb, (1, fan_out), jnp.float32, -bound, bound)
         if bias else None)
    return w, b


def init_params(key, node_dim, in_dim, hidden_dims, out_dim):
    keys = jax.random.split(key, len(hidden_dims) + 2)
    emb_w, emb_b = _linear_init(keys[0], node_dim, in_dim)
    layers = []
    d_in = in_dim
    for i, d_out in enumerate(hidden_dims):
        # PyTorch NodeApply: Linear(2*din, dout); split into the block acting
        # on h and the block acting on the aggregate c (no concat in-kernel).
        w_full, b = _linear_init(keys[1 + i], 2 * d_in, d_out)
        layers.append(dict(
            w_h=w_full[:d_in],
            w_c=w_full[d_in:],
            b=b,
            gamma=jnp.ones((1, d_out), jnp.float32),
            beta=jnp.zeros((1, d_out), jnp.float32),
        ))
        d_in = d_out
    ro_w, _ = _linear_init(keys[-1], hidden_dims[-1], out_dim, bias=False)
    return dict(emb_w=emb_w, emb_b=emb_b, layers=layers, ro_w=ro_w)


# ---------------------------------------------------------------------------
# Full GraphSageNet forward (one fused pallas_call, single invocation)
# ---------------------------------------------------------------------------
def _nbytes(x):
    return math.prod(x.shape) * x.dtype.itemsize


@jax.jit
def graphsage_net_forward(params, adj, nodes_feat, edges_feat=None,
                          nodes_num_norm_sqrt=None, edges_num_norm_sqrt=None):
    # edges_feat / *_norm_sqrt accepted for signature parity but unused,
    # exactly as in the reference forward.
    B, N, node_dim = nodes_feat.shape
    M = B * N
    bf = jnp.bfloat16

    # ---- one-time graph preprocessing (plain JAX, hoisted out of the kernel)
    # Row-normalize A so mean aggregation is a single batched matmul.
    # TODO(synk): DGL leaves zero-in-degree nodes' aggregate undefined; here we
    # clamp degree to 1 (c=0 for isolated nodes).
    deg = jnp.maximum(jnp.sum(adj, axis=-1, keepdims=True), 1.0)
    a = (adj / deg).astype(bf)                           # [B, N, N] bf16
    x = nodes_feat.reshape(M, node_dim).astype(bf)       # [M, node_dim] bf16

    layers = params["layers"]
    n_layers = len(layers)
    in_dim = params["emb_w"].shape[1]
    hid = layers[-1]["w_h"].shape[1]
    out_dim = params["ro_w"].shape[1]

    inputs = [x, a, params["emb_w"].astype(bf), params["emb_b"]]
    for lp in layers:
        inputs += [lp["w_h"].astype(bf), lp["w_c"].astype(bf),
                   lp["b"], lp["gamma"], lp["beta"]]
    inputs.append(params["ro_w"].astype(bf))

    # ---- advisory cost estimate + VMEM budget (all shapes are static) ------
    flops = 2 * M * node_dim * in_dim
    d_prev = in_dim
    for lp in layers:
        din, dout = lp["w_h"].shape
        flops += 2 * B * N * N * din          # mean aggregation
        flops += 2 * 2 * M * din * dout       # W_h and W_c matmuls
        d_prev = dout
    flops += 2 * B * hid * out_dim
    transcendentals = n_layers * (M + 1)      # per-row rsqrt + per-feature rsqrt

    in_bytes = sum(_nbytes(v) for v in inputs)
    out_bytes = B * out_dim * 4
    max_dim = max([in_dim] + [lp["w_h"].shape[1] for lp in layers])
    temp_bytes = 6 * M * max_dim * 4          # a few live f32 [M, dim] values
    vmem_limit = int(min(100 * 1024 * 1024,
                         max(16 * 1024 * 1024,
                             4 * (in_bytes + out_bytes + temp_bytes))))

    vmem_spec = pl.BlockSpec(memory_space=pltpu.MemorySpace.VMEM)

    return pl.pallas_call(
        _make_fused_kernel(n_layers),
        in_specs=[vmem_spec] * len(inputs),
        out_specs=vmem_spec,
        out_shape=jax.ShapeDtypeStruct((B, out_dim), jnp.float32),
        compiler_params=pltpu.CompilerParams(vmem_limit_bytes=vmem_limit),
        cost_estimate=pl.CostEstimate(flops=int(flops),
                                      transcendentals=int(transcendentals),
                                      bytes_accessed=int(in_bytes + out_bytes)),
    )(*inputs)


# ---------------------------------------------------------------------------
if __name__ == "__main__":
    # 8 graphs x 32 nodes -> M = 256 MXU rows; feature dims 64 / 128 so the
    # MXU tiles are actually filled (per perf review) while staying small.
    B, N = 8, 32
    node_dim, in_dim = 16, 64
    hidden_dims = (128, 128)
    out_dim = 128

    key = jax.random.PRNGKey(0)
    k_feat, k_adj, k_par = jax.random.split(key, 3)

    nodes_feat = jax.random.normal(k_feat, (B, N, node_dim), jnp.float32)
    # random directed graphs; guarantee >= 1 in-neighbour per node
    adj = (jax.random.uniform(k_adj, (B, N, N)) < 0.2).astype(jnp.float32)
    adj = jnp.maximum(adj, jnp.roll(jnp.eye(N, dtype=jnp.float32), 1, axis=-1)[None])
    nodes_num_norm_sqrt = jnp.full((B * N, 1), 1.0 / N ** 0.5, jnp.float32)  # unused
    edges_feat = None                                                        # unused

    params = init_params(k_par, node_dim, in_dim, hidden_dims, out_dim)

    logits = graphsage_net_forward(params, adj, nodes_feat, edges_feat,
                                   nodes_num_norm_sqrt, nodes_num_norm_sqrt)
    jax.block_until_ready(logits)
    assert logits.shape == (B, out_dim) and logits.dtype == jnp.float32
    assert bool(jnp.all(jnp.isfinite(logits)))
    print("KERNEL_OK")
</pallas_src>

<mosaic_0001>
module attributes {stable_mosaic.version = 11 : i64} {
  func.func @kernel(%arg0: memref<256x16xbf16, #tpu.memory_space<vmem>>, %arg1: memref<8x32x32xbf16, #tpu.memory_space<vmem>>, %arg2: memref<16x64xbf16, #tpu.memory_space<vmem>>, %arg3: memref<1x64xf32, #tpu.memory_space<vmem>>, %arg4: memref<64x128xbf16, #tpu.memory_space<vmem>>, %arg5: memref<64x128xbf16, #tpu.memory_space<vmem>>, %arg6: memref<1x128xf32, #tpu.memory_space<vmem>>, %arg7: memref<1x128xf32, #tpu.memory_space<vmem>>, %arg8: memref<1x128xf32, #tpu.memory_space<vmem>>, %arg9: memref<128x128xbf16, #tpu.memory_space<vmem>>, %arg10: memref<128x128xbf16, #tpu.memory_space<vmem>>, %arg11: memref<1x128xf32, #tpu.memory_space<vmem>>, %arg12: memref<1x128xf32, #tpu.memory_space<vmem>>, %arg13: memref<1x128xf32, #tpu.memory_space<vmem>>, %arg14: memref<128x128xbf16, #tpu.memory_space<vmem>>, %arg15: memref<8x128xf32, #tpu.memory_space<vmem>>) attributes {dimension_semantics = [], scalar_prefetch = 0 : i64, scratch_operands = 0 : i64, tpu.core_type = #tpu.core_type<tc>} {
    %c0 = arith.constant 0 : index
    %c0_0 = arith.constant 0 : index
    %c0_1 = arith.constant 0 : index
    %0 = vector.load %arg1[%c0, %c0_0, %c0_1] : memref<8x32x32xbf16, #tpu.memory_space<vmem>>, vector<8x32x32xbf16>
    %c0_2 = arith.constant 0 : index
    %c0_3 = arith.constant 0 : index
    %1 = vector.load %arg0[%c0_2, %c0_3] : memref<256x16xbf16, #tpu.memory_space<vmem>>, vector<256x16xbf16>
    %c0_4 = arith.constant 0 : index
    %c0_5 = arith.constant 0 : index
    %2 = vector.load %arg2[%c0_4, %c0_5] : memref<16x64xbf16, #tpu.memory_space<vmem>>, vector<16x64xbf16>
    %cst = arith.constant dense<0.000000e+00> : vector<256x64xf32>
    %3 = tpu.matmul %1, %2, %cst {dimension_numbers = #tpu.dot_dimension_numbers<[1], [0], [0], [1], [0, 0, 1, 1], [], []>} : vector<256x16xbf16>, vector<16x64xbf16>, vector<256x64xf32> -> vector<256x64xf32>
    %c0_6 = arith.constant 0 : index
    %c0_7 = arith.constant 0 : index
    %4 = vector.load %arg3[%c0_6, %c0_7] : memref<1x64xf32, #tpu.memory_space<vmem>>, vector<1x64xf32>
    %5 = vector.broadcast %4 : vector<1x64xf32> to vector<256x64xf32>
    %6 = arith.addf %3, %5 : vector<256x64xf32>
    %7 = arith.truncf %6 : vector<256x64xf32> to vector<256x64xbf16>
    %8 = vector.shape_cast %7 : vector<256x64xbf16> to vector<8x32x64xbf16>
    "tpu.trace_start"() <{level = 10 : i32, message = "bij,bjd->bid"}> : () -> ()
    %cst_8 = arith.constant dense<0.000000e+00> : vector<8x32x64xf32>
    %9 = tpu.matmul %0, %8, %cst_8 {dimension_numbers = #tpu.dot_dimension_numbers<[2], [1], [1], [2], [0, 0, 0, 1, 1, 2], [0], [0]>} : vector<8x32x32xbf16>, vector<8x32x64xbf16>, vector<8x32x64xf32> -> vector<8x32x64xf32>
    "tpu.trace_stop"() : () -> ()
    %10 = vector.shape_cast %9 : vector<8x32x64xf32> to vector<256x64xf32>
    %c0_9 = arith.constant 0 : index
    %c0_10 = arith.constant 0 : index
    %11 = vector.load %arg4[%c0_9, %c0_10] : memref<64x128xbf16, #tpu.memory_space<vmem>>, vector<64x128xbf16>
    %cst_11 = arith.constant dense<0.000000e+00> : vector<256x128xf32>
    %12 = tpu.matmul %7, %11, %cst_11 {dimension_numbers = #tpu.dot_dimension_numbers<[1], [0], [0], [1], [0, 0, 1, 1], [], []>} : vector<256x64xbf16>, vector<64x128xbf16>, vector<256x128xf32> -> vector<256x128xf32>
    %13 = arith.truncf %10 : vector<256x64xf32> to vector<256x64xbf16>
    %c0_12 = arith.constant 0 : index
    %c0_13 = arith.constant 0 : index
    %14 = vector.load %arg5[%c0_12, %c0_13] : memref<64x128xbf16, #tpu.memory_space<vmem>>, vector<64x128xbf16>
    %cst_14 = arith.constant dense<0.000000e+00> : vector<256x128xf32>
    %15 = tpu.matmul %13, %14, %cst_14 {dimension_numbers = #tpu.dot_dimension_numbers<[1], [0], [0], [1], [0, 0, 1, 1], [], []>} : vector<256x64xbf16>, vector<64x128xbf16>, vector<256x128xf32> -> vector<256x128xf32>
    %16 = arith.addf %12, %15 : vector<256x128xf32>
    %c0_15 = arith.constant 0 : index
    %c0_16 = arith.constant 0 : index
    %17 = vector.load %arg6[%c0_15, %c0_16] : memref<1x128xf32, #tpu.memory_space<vmem>>, vector<1x128xf32>
    %18 = vector.broadcast %17 : vector<1x128xf32> to vector<256x128xf32>
    %19 = arith.addf %16, %18 : vector<256x128xf32>
    %20 = arith.mulf %19, %19 : vector<256x128xf32>
    %cst_17 = arith.constant dense<0.000000e+00> : vector<256xf32>
    %21 = vector.multi_reduction <add>, %20, %cst_17 [1] : vector<256x128xf32> to vector<256xf32>
    %22 = vector.shape_cast %21 : vector<256xf32> to vector<256x1xf32>
    %cst_18 = arith.constant 1.000000e-24 : f32
    %23 = vector.broadcast %cst_18 : f32 to vector<256x1xf32>
    %24 = arith.maximumf %22, %23 : vector<256x1xf32>
    %25 = math.rsqrt %24 : vector<256x1xf32>
    %26 = vector.broadcast %25 : vector<256x1xf32> to vector<256x128xf32>
    %27 = arith.mulf %19, %26 : vector<256x128xf32>
    %cst_19 = arith.constant 0.000000e+00 : f32
    %28 = vector.broadcast %cst_19 : f32 to vector<256x128xf32>
    %29 = arith.maximumf %27, %28 : vector<256x128xf32>
    %cst_20 = arith.constant dense<0.000000e+00> : vector<128xf32>
    %30 = vector.multi_reduction <add>, %29, %cst_20 [0] : vector<256x128xf32> to vector<128xf32>
    %31 = vector.shape_cast %30 : vector<128xf32> to vector<1x128xf32>
    %cst_21 = arith.constant 2.560000e+02 : f32
    %32 = vector.broadcast %cst_21 : f32 to vector<1x128xf32>
    %33 = arith.divf %31, %32 : vector<1x128xf32>
    %34 = arith.mulf %29, %29 : vector<256x128xf32>
    %cst_22 = arith.constant dense<0.000000e+00> : vector<128xf32>
    %35 = vector.multi_reduction <add>, %34, %cst_22 [0] : vector<256x128xf32> to vector<128xf32>
    %36 = vector.shape_cast %35 : vector<128xf32> to vector<1x128xf32>
    %cst_23 = arith.constant 2.560000e+02 : f32
    %37 = vector.broadcast %cst_23 : f32 to vector<1x128xf32>
    %38 = arith.divf %36, %37 : vector<1x128xf32>
    %39 = arith.mulf %33, %33 : vector<1x128xf32>
    %40 = arith.subf %38, %39 : vector<1x128xf32>
    %cst_24 = arith.constant 0.000000e+00 : f32
    %41 = vector.broadcast %cst_24 : f32 to vector<1x128xf32>
    %42 = arith.maximumf %40, %41 : vector<1x128xf32>
    %43 = vector.broadcast %33 : vector<1x128xf32> to vector<256x128xf32>
    %44 = arith.subf %29, %43 : vector<256x128xf32>
    %cst_25 = arith.constant 9.99999974E-6 : f32
    %45 = vector.broadcast %cst_25 : f32 to vector<1x128xf32>
    %46 = arith.addf %42, %45 : vector<1x128xf32>
    %47 = math.rsqrt %46 : vector<1x128xf32>
    %48 = vector.broadcast %47 : vector<1x128xf32> to vector<256x128xf32>
    %49 = arith.mulf %44, %48 : vector<256x128xf32>
    %c0_26 = arith.constant 0 : index
    %c0_27 = arith.constant 0 : index
    %50 = vector.load %arg7[%c0_26, %c0_27] : memref<1x128xf32, #tpu.memory_space<vmem>>, vector<1x128xf32>
    %51 = vector.broadcast %50 : vector<1x128xf32> to vector<256x128xf32>
    %52 = arith.mulf %49, %51 : vector<256x128xf32>
    %c0_28 = arith.constant 0 : index
    %c0_29 = arith.constant 0 : index
    %53 = vector.load %arg8[%c0_28, %c0_29] : memref<1x128xf32, #tpu.memory_space<vmem>>, vector<1x128xf32>
    %54 = vector.broadcast %53 : vector<1x128xf32> to vector<256x128xf32>
    %55 = arith.addf %52, %54 : vector<256x128xf32>
    %56 = arith.truncf %55 : vector<256x128xf32> to vector<256x128xbf16>
    %57 = vector.shape_cast %56 : vector<256x128xbf16> to vector<8x32x128xbf16>
    "tpu.trace_start"() <{level = 10 : i32, message = "bij,bjd->bid"}> : () -> ()
    %cst_30 = arith.constant dense<0.000000e+00> : vector<8x32x128xf32>
    %58 = tpu.matmul %0, %57, %cst_30 {dimension_numbers = #tpu.dot_dimension_numbers<[2], [1], [1], [2], [0, 0, 0, 1, 1, 2], [0], [0]>} : vector<8x32x32xbf16>, vector<8x32x128xbf16>, vector<8x32x128xf32> -> vector<8x32x128xf32>
    "tpu.trace_stop"() : () -> ()
    %59 = vector.shape_cast %58 : vector<8x32x128xf32> to vector<256x128xf32>
    %c0_31 = arith.constant 0 : index
    %c0_32 = arith.constant 0 : index
    %60 = vector.load %arg9[%c0_31, %c0_32] : memref<128x128xbf16, #tpu.memory_space<vmem>>, vector<128x128xbf16>
    %cst_33 = arith.constant dense<0.000000e+00> : vector<256x128xf32>
    %61 = tpu.matmul %56, %60, %cst_33 {dimension_numbers = #tpu.dot_dimension_numbers<[1], [0], [0], [1], [0, 0, 1, 1], [], []>} : vector<256x128xbf16>, vector<128x128xbf16>, vector<256x128xf32> -> vector<256x128xf32>
    %62 = arith.truncf %59 : vector<256x128xf32> to vector<256x128xbf16>
    %c0_34 = arith.constant 0 : index
    %c0_35 = arith.constant 0 : index
    %63 = vector.load %arg10[%c0_34, %c0_35] : memref<128x128xbf16, #tpu.memory_space<vmem>>, vector<128x128xbf16>
    %cst_36 = arith.constant dense<0.000000e+00> : vector<256x128xf32>
    %64 = tpu.matmul %62, %63, %cst_36 {dimension_numbers = #tpu.dot_dimension_numbers<[1], [0], [0], [1], [0, 0, 1, 1], [], []>} : vector<256x128xbf16>, vector<128x128xbf16>, vector<256x128xf32> -> vector<256x128xf32>
    %65 = arith.addf %61, %64 : vector<256x128xf32>
    %c0_37 = arith.constant 0 : index
    %c0_38 = arith.constant 0 : index
    %66 = vector.load %arg11[%c0_37, %c0_38] : memref<1x128xf32, #tpu.memory_space<vmem>>, vector<1x128xf32>
    %67 = vector.broadcast %66 : vector<1x128xf32> to vector<256x128xf32>
    %68 = arith.addf %65, %67 : vector<256x128xf32>
    %69 = arith.mulf %68, %68 : vector<256x128xf32>
    %cst_39 = arith.constant dense<0.000000e+00> : vector<256xf32>
    %70 = vector.multi_reduction <add>, %69, %cst_39 [1] : vector<256x128xf32> to vector<256xf32>
    %71 = vector.shape_cast %70 : vector<256xf32> to vector<256x1xf32>
    %cst_40 = arith.constant 1.000000e-24 : f32
    %72 = vector.broadcast %cst_40 : f32 to vector<256x1xf32>
    %73 = arith.maximumf %71, %72 : vector<256x1xf32>
    %74 = math.rsqrt %73 : vector<256x1xf32>
    %75 = vector.broadcast %74 : vector<256x1xf32> to vector<256x128xf32>
    %76 = arith.mulf %68, %75 : vector<256x128xf32>
    %cst_41 = arith.constant 0.000000e+00 : f32
    %77 = vector.broadcast %cst_41 : f32 to vector<256x128xf32>
    %78 = arith.maximumf %76, %77 : vector<256x128xf32>
    %cst_42 = arith.constant dense<0.000000e+00> : vector<128xf32>
    %79 = vector.multi_reduction <add>, %78, %cst_42 [0] : vector<256x128xf32> to vector<128xf32>
    %80 = vector.shape_cast %79 : vector<128xf32> to vector<1x128xf32>
    %cst_43 = arith.constant 2.560000e+02 : f32
    %81 = vector.broadcast %cst_43 : f32 to vector<1x128xf32>
    %82 = arith.divf %80, %81 : vector<1x128xf32>
    %83 = arith.mulf %78, %78 : vector<256x128xf32>
    %cst_44 = arith.constant dense<0.000000e+00> : vector<128xf32>
    %84 = vector.multi_reduction <add>, %83, %cst_44 [0] : vector<256x128xf32> to vector<128xf32>
    %85 = vector.shape_cast %84 : vector<128xf32> to vector<1x128xf32>
    %cst_45 = arith.constant 2.560000e+02 : f32
    %86 = vector.broadcast %cst_45 : f32 to vector<1x128xf32>
    %87 = arith.divf %85, %86 : vector<1x128xf32>
    %88 = arith.mulf %82, %82 : vector<1x128xf32>
    %89 = arith.subf %87, %88 : vector<1x128xf32>
    %cst_46 = arith.constant 0.000000e+00 : f32
    %90 = vector.broadcast %cst_46 : f32 to vector<1x128xf32>
    %91 = arith.maximumf %89, %90 : vector<1x128xf32>
    %92 = vector.broadcast %82 : vector<1x128xf32> to vector<256x128xf32>
    %93 = arith.subf %78, %92 : vector<256x128xf32>
    %cst_47 = arith.constant 9.99999974E-6 : f32
    %94 = vector.broadcast %cst_47 : f32 to vector<1x128xf32>
    %95 = arith.addf %91, %94 : vector<1x128xf32>
    %96 = math.rsqrt %95 : vector<1x128xf32>
    %97 = vector.broadcast %96 : vector<1x128xf32> to vector<256x128xf32>
    %98 = arith.mulf %93, %97 : vector<256x128xf32>
    %c0_48 = arith.constant 0 : index
    %c0_49 = arith.constant 0 : index
    %99 = vector.load %arg12[%c0_48, %c0_49] : memref<1x128xf32, #tpu.memory_space<vmem>>, vector<1x128xf32>
    %100 = vector.broadcast %99 : vector<1x128xf32> to vector<256x128xf32>
    %101 = arith.mulf %98, %100 : vector<256x128xf32>
    %c0_50 = arith.constant 0 : index
    %c0_51 = arith.constant 0 : index
    %102 = vector.load %arg13[%c0_50, %c0_51] : memref<1x128xf32, #tpu.memory_space<vmem>>, vector<1x128xf32>
    %103 = vector.broadcast %102 : vector<1x128xf32> to vector<256x128xf32>
    %104 = arith.addf %101, %103 : vector<256x128xf32>
    %105 = vector.shape_cast %104 : vector<256x128xf32> to vector<8x32x128xf32>
    %cst_52 = arith.constant dense<0.000000e+00> : vector<8x128xf32>
    %106 = vector.multi_reduction <add>, %105, %cst_52 [1] : vector<8x32x128xf32> to vector<8x128xf32>
    %cst_53 = arith.constant 3.200000e+01 : f32
    %107 = vector.broadcast %cst_53 : f32 to vector<8x128xf32>
    %108 = arith.divf %106, %107 : vector<8x128xf32>
    %109 = arith.truncf %108 : vector<8x128xf32> to vector<8x128xbf16>
    %c0_54 = arith.constant 0 : index
    %c0_55 = arith.constant 0 : index
    %110 = vector.load %arg14[%c0_54, %c0_55] : memref<128x128xbf16, #tpu.memory_space<vmem>>, vector<128x128xbf16>
    %cst_56 = arith.constant dense<0.000000e+00> : vector<8x128xf32>
    %111 = tpu.matmul %109, %110, %cst_56 {dimension_numbers = #tpu.dot_dimension_numbers<[1], [0], [0], [1], [0, 0, 1, 1], [], []>} : vector<8x128xbf16>, vector<128x128xbf16>, vector<8x128xf32> -> vector<8x128xf32>
    %c0_57 = arith.constant 0 : index
    %c0_58 = arith.constant 0 : index
    %112 = vector.load %arg15[%c0_57, %c0_58] : memref<8x128xf32, #tpu.memory_space<vmem>>, vector<8x128xf32>
    tpu.vector_store %arg15[%c0_57, %c0_58], %111 {strides = array<i32>} : memref<8x128xf32, #tpu.memory_space<vmem>>, vector<8x128xf32>,
    return
  }
}

</mosaic_0001>

<llo_original>
// kernel: graphsage_net_forward.1
$region0: #{graphsage_net_forward.1}
  #allocation0 [shape = 'u32[]', space=smem, size = 0x4, offset = 0x4, fixed_abs, tag = 'smem constant byte address 0x4 - core index']
  #allocation1 [shape = 'u32[144,128]{1,0:T(1,128)}', space=vmem, size = 0x12000, scoped, tag = 'internal scratch']
  %s0 = inlined_call_operand.vmem [shape: bf16[256,16], index: 0, kind: input, shape index: {}]
  %s1 = inlined_call_operand.vmem [shape: bf16[8,32,32], index: 1, kind: input, shape index: {}]
  %s2 = inlined_call_operand.vmem [shape: bf16[16,64], index: 2, kind: input, shape index: {}]
  %s3 = inlined_call_operand.vmem [shape: f32[1,64], index: 3, kind: input, shape index: {}]
  %s4 = inlined_call_operand.vmem [shape: bf16[64,128], index: 4, kind: input, shape index: {}]
  %s5 = inlined_call_operand.vmem [shape: bf16[64,128], index: 5, kind: input, shape index: {}]
  %s6 = inlined_call_operand.vmem [shape: f32[1,128], index: 6, kind: input, shape index: {}]
  %s7 = inlined_call_operand.vmem [shape: f32[1,128], index: 7, kind: input, shape index: {}]
  %s8 = inlined_call_operand.vmem [shape: f32[1,128], index: 8, kind: input, shape index: {}]
  %s9 = inlined_call_operand.vmem [shape: bf16[128,128], index: 9, kind: input, shape index: {}]
  %s10 = inlined_call_operand.vmem [shape: bf16[128,128], index: 10, kind: input, shape index: {}]
  %s11 = inlined_call_operand.vmem [shape: f32[1,128], index: 11, kind: input, shape index: {}]
  %s12 = inlined_call_operand.vmem [shape: f32[1,128], index: 12, kind: input, shape index: {}]
  %s13 = inlined_call_operand.vmem [shape: f32[1,128], index: 13, kind: input, shape index: {}]
  %s14 = inlined_call_operand.vmem [shape: bf16[128,128], index: 14, kind: input, shape index: {}]
  %s15 = inlined_call_operand.hbm [shape: f32[8,128], index: 15, kind: output, shape index: {}]
  %s16 = sld [smem:[#allocation0]]
  $region70: #{graphsage_net_forward.1} parent=0
    _
  %s18 = ssub.s32 1, %s16
  %s19 = scalar_select 0, %s18, %s16
  $region1: #{graphsage_net_forward.1} parent=0
    #allocation2 [shape = 'u8[4096]{0}', space=vmem, size = 0x1000, scoped, tag = 'output window, operand 0, single buffered']
    #allocation3 [shape = 's32[1]{0}', space=sflag, size = 0x4, scoped, tag = 'scoped memory for graphsage_net_forward.1']
    %20 = vsyncpa [#allocation3], 0
    // Predicated region
    $region2: #{graphsage_net_forward.1} parent=1 // pred_check
      _
    $region3: #{graphsage_net_forward.1} parent=1 // pred_check_branch
      %22 = sbr.rel (0) target = $region5
    $region4: #{graphsage_net_forward.1} parent=1 // pred_region
      _
    $region5: #{graphsage_net_forward.1} parent=1 // pred_fallthru
      _
    // Predicated region
    $region6: #{graphsage_net_forward.1} parent=1 // pred_check
      _
    $region7: #{graphsage_net_forward.1} parent=1 // pred_check_branch
      %24 = sbr.rel (0) target = $region9
    $region8: #{graphsage_net_forward.1} parent=1 // pred_region
      _
    $region9: #{graphsage_net_forward.1} parent=1 // pred_fallthru
      _
    // Predicated region
    $region10: #{graphsage_net_forward.1} parent=1 // pred_check
      _
    $region11: #{graphsage_net_forward.1} parent=1 // pred_check_branch
      %26 = sbr.rel (0) target = $region13
    $region12: #{graphsage_net_forward.1} parent=1 // pred_region
      _
    $region13: #{graphsage_net_forward.1} parent=1 // pred_fallthru
      _
    // Predicated region
    $region14: #{graphsage_net_forward.1} parent=1 // pred_check
      _
    $region15: #{graphsage_net_forward.1} parent=1 // pred_check_branch
      %28 = sbr.rel (0) target = $region17
    $region16: #{graphsage_net_forward.1} parent=1 // pred_region
      _
    $region17: #{graphsage_net_forward.1} parent=1 // pred_fallthru
      _
    // Predicated region
    $region18: #{graphsage_net_forward.1} parent=1 // pred_check
      _
    $region19: #{graphsage_net_forward.1} parent=1 // pred_check_branch
      %30 = sbr.rel (0) target = $region21
    $region20: #{graphsage_net_forward.1} parent=1 // pred_region
      _
    $region21: #{graphsage_net_forward.1} parent=1 // pred_fallthru
      _
    // Predicated region
    $region22: #{graphsage_net_forward.1} parent=1 // pred_check
      _
    $region23: #{graphsage_net_forward.1} parent=1 // pred_check_branch
      %32 = sbr.rel (0) target = $region25
    $region24: #{graphsage_net_forward.1} parent=1 // pred_region
      _
    $region25: #{graphsage_net_forward.1} parent=1 // pred_fallthru
      _
    // Predicated region
    $region26: #{graphsage_net_forward.1} parent=1 // pred_check
      _
    $region27: #{graphsage_net_forward.1} parent=1 // pred_check_branch
      %34 = sbr.rel (0) target = $region29
    $region28: #{graphsage_net_forward.1} parent=1 // pred_region
      _
    $region29: #{graphsage_net_forward.1} parent=1 // pred_fallthru
      _
    // Predicated region
    $region30: #{graphsage_net_forward.1} parent=1 // pred_check
      _
    $region31: #{graphsage_net_forward.1} parent=1 // pred_check_branch
      %36 = sbr.rel (0) target = $region33
    $region32: #{graphsage_net_forward.1} parent=1 // pred_region
      _
    $region33: #{graphsage_net_forward.1} parent=1 // pred_fallthru
      _
    // Predicated region
    $region34: #{graphsage_net_forward.1} parent=1 // pred_check
      _
    $region35: #{graphsage_net_forward.1} parent=1 // pred_check_branch
      %38 = sbr.rel (0) target = $region37
    $region36: #{graphsage_net_forward.1} parent=1 // pred_region
      _
    $region37: #{graphsage_net_forward.1} parent=1 // pred_fallthru
      _
    // Predicated region
    $region38: #{graphsage_net_forward.1} parent=1 // pred_check
      _
    $region39: #{graphsage_net_forward.1} parent=1 // pred_check_branch
      %40 = sbr.rel (0) target = $region41
    $region40: #{graphsage_net_forward.1} parent=1 // pred_region
      _
    $region41: #{graphsage_net_forward.1} parent=1 // pred_fallthru
      _
    // Predicated region
    $region42: #{graphsage_net_forward.1} parent=1 // pred_check
      _
    $region43: #{graphsage_net_forward.1} parent=1 // pred_check_branch
      %42 = sbr.rel (0) target = $region45
    $region44: #{graphsage_net_forward.1} parent=1 // pred_region
      _
    $region45: #{graphsage_net_forward.1} parent=1 // pred_fallthru
      _
    // Predicated region
    $region46: #{graphsage_net_forward.1} parent=1 // pred_check
      _
    $region47: #{graphsage_net_forward.1} parent=1 // pred_check_branch
      %44 = sbr.rel (0) target = $region49
    $region48: #{graphsage_net_forward.1} parent=1 // pred_region
      _
    $region49: #{graphsage_net_forward.1} parent=1 // pred_fallthru
      _
    // Predicated region
    $region50: #{graphsage_net_forward.1} parent=1 // pred_check
      _
    $region51: #{graphsage_net_forward.1} parent=1 // pred_check_branch
      %46 = sbr.rel (0) target = $region53
    $region52: #{graphsage_net_forward.1} parent=1 // pred_region
      _
    $region53: #{graphsage_net_forward.1} parent=1 // pred_fallthru
      _
    // Predicated region
    $region54: #{graphsage_net_forward.1} parent=1 // pred_check
      _
    $region55: #{graphsage_net_forward.1} parent=1 // pred_check_branch
      %48 = sbr.rel (0) target = $region57
    $region56: #{graphsage_net_forward.1} parent=1 // pred_region
      _
    $region57: #{graphsage_net_forward.1} parent=1 // pred_fallthru
      _
    // Predicated region
    $region58: #{graphsage_net_forward.1} parent=1 // pred_check
      _
    $region59: #{graphsage_net_forward.1} parent=1 // pred_check_branch
      %50 = sbr.rel (0) target = $region61
    $region60: #{graphsage_net_forward.1} parent=1 // pred_region
      _
    $region61: #{graphsage_net_forward.1} parent=1 // pred_fallthru
      _
    %v52 = vld [vmem:[%s1] sm:$0xf]
    %v53 = vld [vmem:[%s1 + $0x4] sm:$0xf]
    %v54 = vld [vmem:[%s1 + $0x8] sm:$0xf]
    %v55 = vld [vmem:[%s1 + $0xc] sm:$0xf]
    %v56 = vld [vmem:[%s1 + $0x10] sm:$0xf]
    %v57 = vld [vmem:[%s1 + $0x14] sm:$0xf]
    %v58 = vld [vmem:[%s1 + $0x18] sm:$0xf]
    %v59 = vld [vmem:[%s1 + $0x1c] sm:$0xf]
    %v60 = vld [vmem:[%s1 + $0x20] sm:$0xf]
    %v61 = vld [vmem:[%s1 + $0x24] sm:$0xf]
    %v62 = vld [vmem:[%s1 + $0x28] sm:$0xf]
    %v63 = vld [vmem:[%s1 + $0x2c] sm:$0xf]
    %v64 = vld [vmem:[%s1 + $0x30] sm:$0xf]
    %v65 = vld [vmem:[%s1 + $0x34] sm:$0xf]
    %v66 = vld [vmem:[%s1 + $0x38] sm:$0xf]
    %v67 = vld [vmem:[%s1 + $0x3c] sm:$0xf]
    %v68 = vld [vmem:[%s1 + $0x40] sm:$0xf]
    %v69 = vld [vmem:[%s1 + $0x44] sm:$0xf]
    %v70 = vld [vmem:[%s1 + $0x48] sm:$0xf]
    %v71 = vld [vmem:[%s1 + $0x4c] sm:$0xf]
    %v72 = vld [vmem:[%s1 + $0x50] sm:$0xf]
    %v73 = vld [vmem:[%s1 + $0x54] sm:$0xf]
    %v74 = vld [vmem:[%s1 + $0x58] sm:$0xf]
    %v75 = vld [vmem:[%s1 + $0x5c] sm:$0xf]
    %v76 = vld [vmem:[%s1 + $0x60] sm:$0xf]
    %v77 = vld [vmem:[%s1 + $0x64] sm:$0xf]
    %v78 = vld [vmem:[%s1 + $0x68] sm:$0xf]
    %v79 = vld [vmem:[%s1 + $0x6c] sm:$0xf]
    %v80 = vld [vmem:[%s1 + $0x70] sm:$0xf]
    %v81 = vld [vmem:[%s1 + $0x74] sm:$0xf]
    %v82 = vld [vmem:[%s1 + $0x78] sm:$0xf]
    %v83 = vld [vmem:[%s1 + $0x7c] sm:$0xf]
    %v84 = vld [vmem:[%s0] sm:$0xf]
    %v85 = vld [vmem:[%s0 + $0x4] sm:$0xf]
    %v86 = vld [vmem:[%s0 + $0x8] sm:$0xf]
    %v87 = vld [vmem:[%s0 + $0xc] sm:$0xf]
    %v88 = vld [vmem:[%s0 + $0x10] sm:$0xf]
    %v89 = vld [vmem:[%s0 + $0x14] sm:$0xf]
    %v90 = vld [vmem:[%s0 + $0x18] sm:$0xf]
    %v91 = vld [vmem:[%s0 + $0x1c] sm:$0xf]
    %v92 = vld [vmem:[%s0 + $0x20] sm:$0xf]
    %v93 = vld [vmem:[%s0 + $0x24] sm:$0xf]
    %v94 = vld [vmem:[%s0 + $0x28] sm:$0xf]
    %v95 = vld [vmem:[%s0 + $0x2c] sm:$0xf]
    %v96 = vld [vmem:[%s0 + $0x30] sm:$0xf]
    %v97 = vld [vmem:[%s0 + $0x34] sm:$0xf]
    %v98 = vld [vmem:[%s0 + $0x38] sm:$0xf]
    %v99 = vld [vmem:[%s0 + $0x3c] sm:$0xf]
    %v100 = vld [vmem:[%s0 + $0x40] sm:$0xf]
    %v101 = vld [vmem:[%s0 + $0x44] sm:$0xf]
    %v102 = vld [vmem:[%s0 + $0x48] sm:$0xf]
    %v103 = vld [vmem:[%s0 + $0x4c] sm:$0xf]
    %v104 = vld [vmem:[%s0 + $0x50] sm:$0xf]
    %v105 = vld [vmem:[%s0 + $0x54] sm:$0xf]
    %v106 = vld [vmem:[%s0 + $0x58] sm:$0xf]
    %v107 = vld [vmem:[%s0 + $0x5c] sm:$0xf]
    %v108 = vld [vmem:[%s0 + $0x60] sm:$0xf]
    %v109 = vld [vmem:[%s0 + $0x64] sm:$0xf]
    %v110 = vld [vmem:[%s0 + $0x68] sm:$0xf]
    %v111 = vld [vmem:[%s0 + $0x6c] sm:$0xf]
    %v112 = vld [vmem:[%s0 + $0x70] sm:$0xf]
    %v113 = vld [vmem:[%s0 + $0x74] sm:$0xf]
    %v114 = vld [vmem:[%s0 + $0x78] sm:$0xf]
    %v115 = vld [vmem:[%s0 + $0x7c] sm:$0xf]
    %v116 = vld [vmem:[%s2] sm:$0xf]
    %v117 = vld [vmem:[%s2 + $0x4] sm:$0xf]
    %v118 = vld [vmem:[%s3] sm:$0x1]
    %v120 = vlaneseq
    %v121 = vshrl.u32 %v120, 7
    %v122 = vsub.s32 0, %v121
    %v123 = vrot.slane %v118, %v122
    %v157 = vunpack.c.l.b16 %v84
    %v158 = vunpack.c.l.b16 %v85
    %v159 = vunpack.c.l.b16 %v86
    %v160 = vunpack.c.l.b16 %v87
    %v161 = vunpack.c.l.b16 %v88
    %v162 = vunpack.c.l.b16 %v89
    %v163 = vunpack.c.l.b16 %v90
    %v164 = vunpack.c.l.b16 %v91
    %v165 = vunpack.c.l.b16 %v92
    %v166 = vunpack.c.l.b16 %v93
    %v167 = vunpack.c.l.b16 %v94
    %v168 = vunpack.c.l.b16 %v95
    %v169 = vunpack.c.l.b16 %v96
    %v170 = vunpack.c.l.b16 %v97
    %v171 = vunpack.c.l.b16 %v98
    %v172 = vunpack.c.l.b16 %v99
    %v173 = vunpack.c.l.b16 %v100
    %v174 = vunpack.c.l.b16 %v101
    %v175 = vunpack.c.l.b16 %v102
    %v176 = vunpack.c.l.b16 %v103
    %v177 = vunpack.c.l.b16 %v104
    %v178 = vunpack.c.l.b16 %v105
    %v179 = vunpack.c.l.b16 %v106
    %v180 = vunpack.c.l.b16 %v107
    %v181 = vunpack.c.l.b16 %v108
    %v182 = vunpack.c.l.b16 %v109
    %v183 = vunpack.c.l.b16 %v110
    %v184 = vunpack.c.l.b16 %v111
    %v185 = vunpack.c.l.b16 %v112
    %v186 = vunpack.c.l.b16 %v113
    %v187 = vunpack.c.l.b16 %v114
    %v188 = vunpack.c.l.b16 %v115
    %v189 = vpack.c.b16 %v158, %v157
    %v190 = vpack.c.b16 %v160, %v159
    %v191 = vpack.c.b16 %v162, %v161
    %v192 = vpack.c.b16 %v164, %v163
    %v193 = vpack.c.b16 %v166, %v165
    %v194 = vpack.c.b16 %v168, %v167
    %v195 = vpack.c.b16 %v170, %v169
    %v196 = vpack.c.b16 %v172, %v171
    %v197 = vpack.c.b16 %v174, %v173
    %v198 = vpack.c.b16 %v176, %v175
    %v199 = vpack.c.b16 %v178, %v177
    %v200 = vpack.c.b16 %v180, %v179
    %v201 = vpack.c.b16 %v182, %v181
    %v202 = vpack.c.b16 %v184, %v183
    %v203 = vpack.c.b16 %v186, %v185
    %v204 = vpack.c.b16 %v188, %v187
    %v207 = vunpack.c.l.b16 %v116
    %v208 = vunpack.c.l.b16 %v117
    %v209 = vpack.c.b16 %v208, %v207
    %vm211 = vcmask 130048
    %v213 = vsel %vm211, %v189, 0
    %v216 = vsel %vm211, %v190, 0
    %v219 = vsel %vm211, %v191, 0
    %v222 = vsel %vm211, %v192, 0
    %v225 = vsel %vm211, %v193, 0
    %v228 = vsel %vm211, %v194, 0
    %v231 = vsel %vm211, %v195, 0
    %v234 = vsel %vm211, %v196, 0
    %v237 = vsel %vm211, %v197, 0
    %v240 = vsel %vm211, %v198, 0
    %v243 = vsel %vm211, %v199, 0
    %v246 = vsel %vm211, %v200, 0
    %v249 = vsel %vm211, %v201, 0
    %v252 = vsel %vm211, %v202, 0
    %v255 = vsel %vm211, %v203, 0
    %v258 = vsel %vm211, %v204, 0
    %260 = vmatprep.subr.bf16.mxu0 0
    %261 = vmatpush1.bf16.msra.mxu0 0
    %262 = vmatprep.subr.bf16.mxu0 0
    %263 = vmatpush1.bf16.msra.mxu0 0
    %264 = vmatprep.subr.bf16.mxu0 0
    %265 = vmatpush1.bf16.msra.mxu0 0
    %266 = vmatprep.subr.bf16.mxu0 0
    %267 = vmatpush1.bf16.msra.mxu0 0
    %268 = vmatprep.subr.bf16.mxu0 0
    %269 = vmatpush1.bf16.msra.mxu0 0
    %270 = vmatprep.subr.bf16.mxu0 0
    %271 = vmatpush1.bf16.msra.mxu0 0
    %272 = vmatprep.subr.bf16.mxu0 0
    %273 = vmatpush1.bf16.msra.mxu0 0
    %274 = vmatprep.subr.bf16.mxu0 0
    %275 = vmatpush1.bf16.msra.mxu0 %v209
    %276 = vmatprep.subr.bf16.mxu0 0
    %277 = vmatpush2.bf16.msra.mxu0 0
    %278 = vmatprep.subr.bf16.mxu0 0
    %279 = vmatpush2.bf16.msra.mxu0 0
    %280 = vmatprep.subr.bf16.mxu0 0
    %281 = vmatpush2.bf16.msra.mxu0 0
    %282 = vmatprep.subr.bf16.mxu0 0
    %283 = vmatpush2.bf16.msra.mxu0 0
    %284 = vmatprep.subr.bf16.mxu0 0
    %285 = vmatpush2.bf16.msra.mxu0 0
    %286 = vmatprep.subr.bf16.mxu0 0
    %287 = vmatpush2.bf16.msra.mxu0 0
    %288 = vmatprep.subr.bf16.mxu0 0
    %289 = vmatpush2.bf16.msra.mxu0 0
    %290 = vmatprep.subr.bf16.mxu0 0
    %291 = vmatpush2.bf16.msra.mxu0 0
    %292 = vmatprep.mubr.bf16.mxu0 0
    %293 = vmatmul.mubr.bf16.gmra.mxu0 %v213
    %v294 = vpop.f32.mrf.mxu0
    %v295 = vadd.f32 %v123, %v294
    %v296 = vpop.f32.mrf.mxu0
    %v297 = vpop.f32.mrf.mxu0
    %v298 = vadd.f32 %v123, %v297
    %v299 = vpop.f32.mrf.mxu0
    %300 = vmatprep.mubr.bf16.mxu0 0
    %301 = vmatmul.mubr.bf16.gmra.mxu0 %v216
    %v302 = vpop.f32.mrf.mxu0
    %v303 = vadd.f32 %v123, %v302
    %v304 = vpop.f32.mrf.mxu0
    %v305 = vpop.f32.mrf.mxu0
    %v306 = vadd.f32 %v123, %v305
    %v307 = vpop.f32.mrf.mxu0
    %308 = vmatprep.mubr.bf16.mxu0 0
    %309 = vmatmul.mubr.bf16.gmra.mxu0 %v219
    %v310 = vpop.f32.mrf.mxu0
    %v311 = vadd.f32 %v123, %v310
    %v312 = vpop.f32.mrf.mxu0
    %v313 = vpop.f32.mrf.mxu0
    %v314 = vadd.f32 %v123, %v313
    %v315 = vpop.f32.mrf.mxu0
    %316 = vmatprep.mubr.bf16.mxu0 0
    %317 = vmatmul.mubr.bf16.gmra.mxu0 %v222
    %v318 = vpop.f32.mrf.mxu0
    %v319 = vadd.f32 %v123, %v318
    %v320 = vpop.f32.mrf.mxu0
    %v321 = vpop.f32.mrf.mxu0
    %v322 = vadd.f32 %v123, %v321
    %v323 = vpop.f32.mrf.mxu0
    %324 = vmatprep.mubr.bf16.mxu0 0
    %325 = vmatmul.mubr.bf16.gmra.mxu0 %v225
    %v326 = vpop.f32.mrf.mxu0
    %v327 = vadd.f32 %v123, %v326
    %v328 = vpop.f32.mrf.mxu0
    %v329 = vpop.f32.mrf.mxu0
    %v330 = vadd.f32 %v123, %v329
    %v331 = vpop.f32.mrf.mxu0
    %332 = vmatprep.mubr.bf16.mxu0 0
    %333 = vmatmul.mubr.bf16.gmra.mxu0 %v228
    %v334 = vpop.f32.mrf.mxu0
    %v335 = vadd.f32 %v123, %v334
    %v336 = vpop.f32.mrf.mxu0
    %v337 = vpop.f32.mrf.mxu0
    %v338 = vadd.f32 %v123, %v337
    %v339 = vpop.f32.mrf.mxu0
    %340 = vmatprep.mubr.bf16.mxu0 0
    %341 = vmatmul.mubr.bf16.gmra.mxu0 %v231
    %v342 = vpop.f32.mrf.mxu0
    %v343 = vadd.f32 %v123, %v342
    %v344 = vpop.f32.mrf.mxu0
    %v345 = vpop.f32.mrf.mxu0
    %v346 = vadd.f32 %v123, %v345
    %v347 = vpop.f32.mrf.mxu0
    %348 = vmatprep.mubr.bf16.mxu0 0
    %349 = vmatmul.mubr.bf16.gmra.mxu0 %v234
    %v350 = vpop.f32.mrf.mxu0
    %v351 = vadd.f32 %v123, %v350
    %v352 = vpop.f32.mrf.mxu0
    %v353 = vpop.f32.mrf.mxu0
    %v354 = vadd.f32 %v123, %v353
    %v355 = vpop.f32.mrf.mxu0
    %356 = vmatprep.mubr.bf16.mxu0 0
    %357 = vmatmul.mubr.bf16.gmra.mxu0 %v237
    %v358 = vpop.f32.mrf.mxu0
    %v359 = vadd.f32 %v123, %v358
    %v360 = vpop.f32.mrf.mxu0
    %v361 = vpop.f32.mrf.mxu0
    %v362 = vadd.f32 %v123, %v361
    %v363 = vpop.f32.mrf.mxu0
    %364 = vmatprep.mubr.bf16.mxu0 0
    %365 = vmatmul.mubr.bf16.gmra.mxu0 %v240
    %v366 = vpop.f32.mrf.mxu0
    %v367 = vadd.f32 %v123, %v366
    %v368 = vpop.f32.mrf.mxu0
    %v369 = vpop.f32.mrf.mxu0
    %v370 = vadd.f32 %v123, %v369
    %v371 = vpop.f32.mrf.mxu0
    %372 = vmatprep.mubr.bf16.mxu0 0
    %373 = vmatmul.mubr.bf16.gmra.mxu0 %v243
    %v374 = vpop.f32.mrf.mxu0
    %v375 = vadd.f32 %v123, %v374
    %v376 = vpop.f32.mrf.mxu0
    %v377 = vpop.f32.mrf.mxu0
    %v378 = vadd.f32 %v123, %v377
    %v379 = vpop.f32.mrf.mxu0
    %380 = vmatprep.mubr.bf16.mxu0 0
    %381 = vmatmul.mubr.bf16.gmra.mxu0 %v246
    %v382 = vpop.f32.mrf.mxu0
    %v383 = vadd.f32 %v123, %v382
    %v384 = vpop.f32.mrf.mxu0
    %v385 = vpop.f32.mrf.mxu0
    %v386 = vadd.f32 %v123, %v385
    %v387 = vpop.f32.mrf.mxu0
    %388 = vmatprep.mubr.bf16.mxu0 0
    %389 = vmatmul.mubr.bf16.gmra.mxu0 %v249
    %v390 = vpop.f32.mrf.mxu0
    %v391 = vadd.f32 %v123, %v390
    %v392 = vpop.f32.mrf.mxu0
    %v393 = vpop.f32.mrf.mxu0
    %v394 = vadd.f32 %v123, %v393
    %v395 = vpop.f32.mrf.mxu0
    %396 = vmatprep.mubr.bf16.mxu0 0
    %397 = vmatmul.mubr.bf16.gmra.mxu0 %v252
    %v398 = vpop.f32.mrf.mxu0
    %v399 = vadd.f32 %v123, %v398
    %v400 = vpop.f32.mrf.mxu0
    %v401 = vpop.f32.mrf.mxu0
    %v402 = vadd.f32 %v123, %v401
    %v403 = vpop.f32.mrf.mxu0
    %404 = vmatprep.mubr.bf16.mxu0 0
    %405 = vmatmul.mubr.bf16.gmra.mxu0 %v255
    %v406 = vpop.f32.mrf.mxu0
    %v407 = vadd.f32 %v123, %v406
    %v408 = vpop.f32.mrf.mxu0
    %v409 = vpop.f32.mrf.mxu0
    %v410 = vadd.f32 %v123, %v409
    %v411 = vpop.f32.mrf.mxu0
    %412 = vmatprep.mubr.bf16.mxu0 0
    %413 = vmatmul.mubr.bf16.gmra.mxu0 %v258
    %v414 = vpop.f32.mrf.mxu0
    %v415 = vadd.f32 %v123, %v414
    %v416 = vpop.f32.mrf.mxu0
    %v417 = vpop.f32.mrf.mxu0
    %v418 = vadd.f32 %v123, %v417
    %v419 = vpop.f32.mrf.mxu0
    %420 = vdwg.mxu0
    %v421 = vpack.c.bf16 %v298, %v295
    %v422 = vpack.c.bf16 %v306, %v303
    %v423 = vpack.c.bf16 %v314, %v311
    %v424 = vpack.c.bf16 %v322, %v319
    %v425 = vpack.c.bf16 %v330, %v327
    %v426 = vpack.c.bf16 %v338, %v335
    %v427 = vpack.c.bf16 %v346, %v343
    %v428 = vpack.c.bf16 %v354, %v351
    %v429 = vpack.c.bf16 %v362, %v359
    %v430 = vpack.c.bf16 %v370, %v367
    %v431 = vpack.c.bf16 %v378, %v375
    %v432 = vpack.c.bf16 %v386, %v383
    %v433 = vpack.c.bf16 %v394, %v391
    %v434 = vpack.c.bf16 %v402, %v399
    %v435 = vpack.c.bf16 %v410, %v407
    %v436 = vpack.c.bf16 %v418, %v415
    %v441 = vunpack.c.l.b16 %v52
    %v442 = vunpack.c.l.b16 %v53
    %v443 = vunpack.c.l.b16 %v54
    %v444 = vunpack.c.l.b16 %v55
    %v445 = vpack.c.b16 %v442, %v441
    %v446 = vpack.c.b16 %v444, %v443
    %vm447 = vcmask 261120
    %v449 = vsel %vm447, %v445, 0
    %v452 = vsel %vm447, %v446, 0
    %454 = vmatprep.subr.bf16.mxu0 0
    %455 = vmatpush1.bf16.msra.mxu0 0
    %456 = vmatprep.subr.bf16.mxu0 0
    %457 = vmatpush1.bf16.msra.mxu0 0
    %458 = vmatprep.subr.bf16.mxu0 0
    %459 = vmatpush1.bf16.msra.mxu0 0
    %460 = vmatprep.subr.bf16.mxu0 0
    %461 = vmatpush1.bf16.msra.mxu0 0
    %462 = vmatprep.subr.bf16.mxu0 0
    %463 = vmatpush1.bf16.msra.mxu0 0
    %464 = vmatprep.subr.bf16.mxu0 0
    %465 = vmatpush1.bf16.msra.mxu0 0
    %466 = vmatprep.subr.bf16.mxu0 0
    %467 = vmatpush1.bf16.msra.mxu0 %v422
    %468 = vmatprep.subr.bf16.mxu0 0
    %469 = vmatpush1.bf16.msra.mxu0 %v421
    %470 = vmatprep.subr.bf16.mxu0 0
    %471 = vmatpush2.bf16.msra.mxu0 0
    %472 = vmatprep.subr.bf16.mxu0 0
    %473 = vmatpush2.bf16.msra.mxu0 0
    %474 = vmatprep.subr.bf16.mxu0 0
    %475 = vmatpush2.bf16.msra.mxu0 0
    %476 = vmatprep.subr.bf16.mxu0 0
    %477 = vmatpush2.bf16.msra.mxu0 0
    %478 = vmatprep.subr.bf16.mxu0 0
    %479 = vmatpush2.bf16.msra.mxu0 0
    %480 = vmatprep.subr.bf16.mxu0 0
    %481 = vmatpush2.bf16.msra.mxu0 0
    %482 = vmatprep.subr.bf16.mxu0 0
    %483 = vmatpush2.bf16.msra.mxu0 0
    %484 = vmatprep.subr.bf16.mxu0 0
    %485 = vmatpush2.bf16.msra.mxu0 0
    %486 = vmatprep.mubr.bf16.mxu0 0
    %487 = vmatmul.mubr.bf16.gmra.mxu0 %v449
    %v488 = vpop.f32.mrf.mxu0
    %v489 = vadd.f32 0.0, %v488
    %v490 = vpop.f32.mrf.mxu0
    %v491 = vpop.f32.mrf.mxu0
    %v492 = vadd.f32 0.0, %v491
    %v493 = vpop.f32.mrf.mxu0
    %494 = vmatprep.mubr.bf16.mxu0 0
    %495 = vmatmul.mubr.bf16.gmra.mxu0 %v452
    %v496 = vpop.f32.mrf.mxu0
    %v497 = vadd.f32 0.0, %v496
    %v498 = vpop.f32.mrf.mxu0
    %v499 = vpop.f32.mrf.mxu0
    %v500 = vadd.f32 0.0, %v499
    %v501 = vpop.f32.mrf.mxu0
    %502 = vdwg.mxu0
    %v507 = vunpack.c.l.b16 %v56
    %v508 = vunpack.c.l.b16 %v57
    %v509 = vunpack.c.l.b16 %v58
    %v510 = vunpack.c.l.b16 %v59
    %v511 = vpack.c.b16 %v508, %v507
    %v512 = vpack.c.b16 %v510, %v509
    %v514 = vsel %vm447, %v511, 0
    %v517 = vsel %vm447, %v512, 0
    %519 = vmatprep.subr.bf16.mxu0 0
    %520 = vmatpush1.bf16.msra.mxu0 0
    %521 = vmatprep.subr.bf16.mxu0 0
    %522 = vmatpush1.bf16.msra.mxu0 0
    %523 = vmatprep.subr.bf16.mxu0 0
    %524 = vmatpush1.bf16.msra.mxu0 0
    %525 = vmatprep.subr.bf16.mxu0 0
    %526 = vmatpush1.bf16.msra.mxu0 0
    %527 = vmatprep.subr.bf16.mxu0 0
    %528 = vmatpush1.bf16.msra.mxu0 0
    %529 = vmatprep.subr.bf16.mxu0 0
    %530 = vmatpush1.bf16.msra.mxu0 0
    %531 = vmatprep.subr.bf16.mxu0 0
    %532 = vmatpush1.bf16.msra.mxu0 %v424
    %533 = vmatprep.subr.bf16.mxu0 0
    %534 = vmatpush1.bf16.msra.mxu0 %v423
    %535 = vmatprep.subr.bf16.mxu0 0
    %536 = vmatpush2.bf16.msra.mxu0 0
    %537 = vmatprep.subr.bf16.mxu0 0
    %538 = vmatpush2.bf16.msra.mxu0 0
    %539 = vmatprep.subr.bf16.mxu0 0
    %540 = vmatpush2.bf16.msra.mxu0 0
    %541 = vmatprep.subr.bf16.mxu0 0
    %542 = vmatpush2.bf16.msra.mxu0 0
    %543 = vmatprep.subr.bf16.mxu0 0
    %544 = vmatpush2.bf16.msra.mxu0 0
    %545 = vmatprep.subr.bf16.mxu0 0
    %546 = vmatpush2.bf16.msra.mxu0 0
    %547 = vmatprep.subr.bf16.mxu0 0
    %548 = vmatpush2.bf16.msra.mxu0 0
    %549 = vmatprep.subr.bf16.mxu0 0
    %550 = vmatpush2.bf16.msra.mxu0 0
    %551 = vmatprep.mubr.bf16.mxu0 0
    %552 = vmatmul.mubr.bf16.gmra.mxu0 %v514
    %v553 = vpop.f32.mrf.mxu0
    %v554 = vadd.f32 0.0, %v553
    %v555 = vpop.f32.mrf.mxu0
    %v556 = vpop.f32.mrf.mxu0
    %v557 = vadd.f32 0.0, %v556
    %v558 = vpop.f32.mrf.mxu0
    %559 = vmatprep.mubr.bf16.mxu0 0
    %560 = vmatmul.mubr.bf16.gmra.mxu0 %v517
    %v561 = vpop.f32.mrf.mxu0
    %v562 = vadd.f32 0.0, %v561
    %v563 = vpop.f32.mrf.mxu0
    %v564 = vpop.f32.mrf.mxu0
    %v565 = vadd.f32 0.0, %v564
    %v566 = vpop.f32.mrf.mxu0
    %567 = vdwg.mxu0
    %v572 = vunpack.c.l.b16 %v60
    %v573 = vunpack.c.l.b16 %v61
    %v574 = vunpack.c.l.b16 %v62
    %v575 = vunpack.c.l.b16 %v63
    %v576 = vpack.c.b16 %v573, %v572
    %v577 = vpack.c.b16 %v575, %v574
    %v579 = vsel %vm447, %v576, 0
    %v582 = vsel %vm447, %v577, 0
    %584 = vmatprep.subr.bf16.mxu0 0
    %585 = vmatpush1.bf16.msra.mxu0 0
    %586 = vmatprep.subr.bf16.mxu0 0
    %587 = vmatpush1.bf16.msra.mxu0 0
    %588 = vmatprep.subr.bf16.mxu0 0
    %589 = vmatpush1.bf16.msra.mxu0 0
    %590 = vmatprep.subr.bf16.mxu0 0
    %591 = vmatpush1.bf16.msra.mxu0 0
    %592 = vmatprep.subr.bf16.mxu0 0
    %593 = vmatpush1.bf16.msra.mxu0 0
    %594 = vmatprep.subr.bf16.mxu0 0
    %595 = vmatpush1.bf16.msra.mxu0 0
    %596 = vmatprep.subr.bf16.mxu0 0
    %597 = vmatpush1.bf16.msra.mxu0 %v426
    %598 = vmatprep.subr.bf16.mxu0 0
    %599 = vmatpush1.bf16.msra.mxu0 %v425
    %600 = vmatprep.subr.bf16.mxu0 0
    %601 = vmatpush2.bf16.msra.mxu0 0
    %602 = vmatprep.subr.bf16.mxu0 0
    %603 = vmatpush2.bf16.msra.mxu0 0
    %604 = vmatprep.subr.bf16.mxu0 0
    %605 = vmatpush2.bf16.msra.mxu0 0
    %606 = vmatprep.subr.bf16.mxu0 0
    %607 = vmatpush2.bf16.msra.mxu0 0
    %608 = vmatprep.subr.bf16.mxu0 0
    %609 = vmatpush2.bf16.msra.mxu0 0
    %610 = vmatprep.subr.bf16.mxu0 0
    %611 = vmatpush2.bf16.msra.mxu0 0
    %612 = vmatprep.subr.bf16.mxu0 0
    %613 = vmatpush2.bf16.msra.mxu0 0
    %614 = vmatprep.subr.bf16.mxu0 0
    %615 = vmatpush2.bf16.msra.mxu0 0
    %616 = vmatprep.mubr.bf16.mxu0 0
    %617 = vmatmul.mubr.bf16.gmra.mxu0 %v579
    %v618 = vpop.f32.mrf.mxu0
    %v619 = vadd.f32 0.0, %v618
    %v620 = vpop.f32.mrf.mxu0
    %v621 = vpop.f32.mrf.mxu0
    %v622 = vadd.f32 0.0, %v621
    %v623 = vpop.f32.mrf.mxu0
    %624 = vmatprep.mubr.bf16.mxu0 0
    %625 = vmatmul.mubr.bf16.gmra.mxu0 %v582
    %v626 = vpop.f32.mrf.mxu0
    %v627 = vadd.f32 0.0, %v626
    %v628 = vpop.f32.mrf.mxu0
    %v629 = vpop.f32.mrf.mxu0
    %v630 = vadd.f32 0.0, %v629
    %v631 = vpop.f32.mrf.mxu0
    %632 = vdwg.mxu0
    %v637 = vunpack.c.l.b16 %v64
    %v638 = vunpack.c.l.b16 %v65
    %v639 = vunpack.c.l.b16 %v66
    %v640 = vunpack.c.l.b16 %v67
    %v641 = vpack.c.b16 %v638, %v637
    %v642 = vpack.c.b16 %v640, %v639
    %v644 = vsel %vm447, %v641, 0
    %v647 = vsel %vm447, %v642, 0
    %649 = vmatprep.subr.bf16.mxu0 0
    %650 = vmatpush1.bf16.msra.mxu0 0
    %651 = vmatprep.subr.bf16.mxu0 0
    %652 = vmatpush1.bf16.msra.mxu0 0
    %653 = vmatprep.subr.bf16.mxu0 0
    %654 = vmatpush1.bf16.msra.mxu0 0
    %655 = vmatprep.subr.bf16.mxu0 0
    %656 = vmatpush1.bf16.msra.mxu0 0
    %657 = vmatprep.subr.bf16.mxu0 0
    %658 = vmatpush1.bf16.msra.mxu0 0
    %659 = vmatprep.subr.bf16.mxu0 0
    %660 = vmatpush1.bf16.msra.mxu0 0
    %661 = vmatprep.subr.bf16.mxu0 0
    %662 = vmatpush1.bf16.msra.mxu0 %v428
    %663 = vmatprep.subr.bf16.mxu0 0
    %664 = vmatpush1.bf16.msra.mxu0 %v427
    %665 = vmatprep.subr.bf16.mxu0 0
    %666 = vmatpush2.bf16.msra.mxu0 0
    %667 = vmatprep.subr.bf16.mxu0 0
    %668 = vmatpush2.bf16.msra.mxu0 0
    %669 = vmatprep.subr.bf16.mxu0 0
    %670 = vmatpush2.bf16.msra.mxu0 0
    %671 = vmatprep.subr.bf16.mxu0 0
    %672 = vmatpush2.bf16.msra.mxu0 0
    %673 = vmatprep.subr.bf16.mxu0 0
    %674 = vmatpush2.bf16.msra.mxu0 0
    %675 = vmatprep.subr.bf16.mxu0 0
    %676 = vmatpush2.bf16.msra.mxu0 0
    %677 = vmatprep.subr.bf16.mxu0 0
    %678 = vmatpush2.bf16.msra.mxu0 0
    %679 = vmatprep.subr.bf16.mxu0 0
    %680 = vmatpush2.bf16.msra.mxu0 0
    %681 = vmatprep.mubr.bf16.mxu0 0
    %682 = vmatmul.mubr.bf16.gmra.mxu0 %v644
    %v683 = vpop.f32.mrf.mxu0
    %v684 = vadd.f32 0.0, %v683
    %v685 = vpop.f32.mrf.mxu0
    %v686 = vpop.f32.mrf.mxu0
    %v687 = vadd.f32 0.0, %v686
    %v688 = vpop.f32.mrf.mxu0
    %689 = vmatprep.mubr.bf16.mxu0 0
    %690 = vmatmul.mubr.bf16.gmra.mxu0 %v647
    %v691 = vpop.f32.mrf.mxu0
    %v692 = vadd.f32 0.0, %v691
    %v693 = vpop.f32.mrf.mxu0
    %v694 = vpop.f32.mrf.mxu0
    %v695 = vadd.f32 0.0, %v694
    %v696 = vpop.f32.mrf.mxu0
    %697 = vdwg.mxu0
    %v702 = vunpack.c.l.b16 %v68
    %v703 = vunpack.c.l.b16 %v69
    %v704 = vunpack.c.l.b16 %v70
    %v705 = vunpack.c.l.b16 %v71
    %v706 = vpack.c.b16 %v703, %v702
    %v707 = vpack.c.b16 %v705, %v704
    %v709 = vsel %vm447, %v706, 0
    %v712 = vsel %vm447, %v707, 0
    %714 = vmatprep.subr.bf16.mxu0 0
    %715 = vmatpush1.bf16.msra.mxu0 0
    %716 = vmatprep.subr.bf16.mxu0 0
    %717 = vmatpush1.bf16.msra.mxu0 0
    %718 = vmatprep.subr.bf16.mxu0 0
    %719 = vmatpush1.bf16.msra.mxu0 0
    %720 = vmatprep.subr.bf16.mxu0 0
    %721 = vmatpush1.bf16.msra.mxu0 0
    %722 = vmatprep.subr.bf16.mxu0 0
    %723 = vmatpush1.bf16.msra.mxu0 0
    %724 = vmatprep.subr.bf16.mxu0 0
    %725 = vmatpush1.bf16.msra.mxu0 0
    %726 = vmatprep.subr.bf16.mxu0 0
    %727 = vmatpush1.bf16.msra.mxu0 %v430
    %728 = vmatprep.subr.bf16.mxu0 0
    %729 = vmatpush1.bf16.msra.mxu0 %v429
    %730 = vmatprep.subr.bf16.mxu0 0
    %731 = vmatpush2.bf16.msra.mxu0 0
    %732 = vmatprep.subr.bf16.mxu0 0
    %733 = vmatpush2.bf16.msra.mxu0 0
    %734 = vmatprep.subr.bf16.mxu0 0
    %735 = vmatpush2.bf16.msra.mxu0 0
    %736 = vmatprep.subr.bf16.mxu0 0
    %737 = vmatpush2.bf16.msra.mxu0 0
    %738 = vmatprep.subr.bf16.mxu0 0
    %739 = vmatpush2.bf16.msra.mxu0 0
    %740 = vmatprep.subr.bf16.mxu0 0
    %741 = vmatpush2.bf16.msra.mxu0 0
    %742 = vmatprep.subr.bf16.mxu0 0
    %743 = vmatpush2.bf16.msra.mxu0 0
    %744 = vmatprep.subr.bf16.mxu0 0
    %745 = vmatpush2.bf16.msra.mxu0 0
    %746 = vmatprep.mubr.bf16.mxu0 0
    %747 = vmatmul.mubr.bf16.gmra.mxu0 %v709
    %v748 = vpop.f32.mrf.mxu0
    %v749 = vadd.f32 0.0, %v748
    %v750 = vpop.f32.mrf.mxu0
    %v751 = vpop.f32.mrf.mxu0
    %v752 = vadd.f32 0.0, %v751
    %v753 = vpop.f32.mrf.mxu0
    %754 = vmatprep.mubr.bf16.mxu0 0
    %755 = vmatmul.mubr.bf16.gmra.mxu0 %v712
    %v756 = vpop.f32.mrf.mxu0
    %v757 = vadd.f32 0.0, %v756
    %v758 = vpop.f32.mrf.mxu0
    %v759 = vpop.f32.mrf.mxu0
    %v760 = vadd.f32 0.0, %v759
    %v761 = vpop.f32.mrf.mxu0
    %762 = vdwg.mxu0
    %v767 = vunpack.c.l.b16 %v72
    %v768 = vunpack.c.l.b16 %v73
    %v769 = vunpack.c.l.b16 %v74
    %v770 = vunpack.c.l.b16 %v75
    %v771 = vpack.c.b16 %v768, %v767
    %v772 = vpack.c.b16 %v770, %v769
    %v774 = vsel %vm447, %v771, 0
    %v777 = vsel %vm447, %v772, 0
    %779 = vmatprep.subr.bf16.mxu0 0
    %780 = vmatpush1.bf16.msra.mxu0 0
    %781 = vmatprep.subr.bf16.mxu0 0
    %782 = vmatpush1.bf16.msra.mxu0 0
    %783 = vmatprep.subr.bf16.mxu0 0
    %784 = vmatpush1.bf16.msra.mxu0 0
    %785 = vmatprep.subr.bf16.mxu0 0
    %786 = vmatpush1.bf16.msra.mxu0 0
    %787 = vmatprep.subr.bf16.mxu0 0
    %788 = vmatpush1.bf16.msra.mxu0 0
    %789 = vmatprep.subr.bf16.mxu0 0
    %790 = vmatpush1.bf16.msra.mxu0 0
    %791 = vmatprep.subr.bf16.mxu0 0
    %792 = vmatpush1.bf16.msra.mxu0 %v432
    %793 = vmatprep.subr.bf16.mxu0 0
    %794 = vmatpush1.bf16.msra.mxu0 %v431
    %795 = vmatprep.subr.bf16.mxu0 0
    %796 = vmatpush2.bf16.msra.mxu0 0
    %797 = vmatprep.subr.bf16.mxu0 0
    %798 = vmatpush2.bf16.msra.mxu0 0
    %799 = vmatprep.subr.bf16.mxu0 0
    %800 = vmatpush2.bf16.msra.mxu0 0
    %801 = vmatprep.subr.bf16.mxu0 0
    %802 = vmatpush2.bf16.msra.mxu0 0
    %803 = vmatprep.subr.bf16.mxu0 0
    %804 = vmatpush2.bf16.msra.mxu0 0
    %805 = vmatprep.subr.bf16.mxu0 0
    %806 = vmatpush2.bf16.msra.mxu0 0
    %807 = vmatprep.subr.bf16.mxu0 0
    %808 = vmatpush2.bf16.msra.mxu0 0
    %809 = vmatprep.subr.bf16.mxu0 0
    %810 = vmatpush2.bf16.msra.mxu0 0
    %811 = vmatprep.mubr.bf16.mxu0 0
    %812 = vmatmul.mubr.bf16.gmra.mxu0 %v774
    %v813 = vpop.f32.mrf.mxu0
    %v814 = vadd.f32 0.0, %v813
    %v815 = vpop.f32.mrf.mxu0
    %v816 = vpop.f32.mrf.mxu0
    %v817 = vadd.f32 0.0, %v816
    %v818 = vpop.f32.mrf.mxu0
    %819 = vmatprep.mubr.bf16.mxu0 0
    %820 = vmatmul.mubr.bf16.gmra.mxu0 %v777
    %v821 = vpop.f32.mrf.mxu0
    %v822 = vadd.f32 0.0, %v821
    %v823 = vpop.f32.mrf.mxu0
    %v824 = vpop.f32.mrf.mxu0
    %v825 = vadd.f32 0.0, %v824
    %v826 = vpop.f32.mrf.mxu0
    %827 = vdwg.mxu0
    %v832 = vunpack.c.l.b16 %v76
    %v833 = vunpack.c.l.b16 %v77
    %v834 = vunpack.c.l.b16 %v78
    %v835 = vunpack.c.l.b16 %v79
    %v836 = vpack.c.b16 %v833, %v832
    %v837 = vpack.c.b16 %v835, %v834
    %v839 = vsel %vm447, %v836, 0
    %v842 = vsel %vm447, %v837, 0
    %844 = vmatprep.subr.bf16.mxu0 0
    %845 = vmatpush1.bf16.msra.mxu0 0
    %846 = vmatprep.subr.bf16.mxu0 0
    %847 = vmatpush1.bf16.msra.mxu0 0
    %848 = vmatprep.subr.bf16.mxu0 0
    %849 = vmatpush1.bf16.msra.mxu0 0
    %850 = vmatprep.subr.bf16.mxu0 0
    %851 = vmatpush1.bf16.msra.mxu0 0
    %852 = vmatprep.subr.bf16.mxu0 0
    %853 = vmatpush1.bf16.msra.mxu0 0
    %854 = vmatprep.subr.bf16.mxu0 0
    %855 = vmatpush1.bf16.msra.mxu0 0
    %856 = vmatprep.subr.bf16.mxu0 0
    %857 = vmatpush1.bf16.msra.mxu0 %v434
    %858 = vmatprep.subr.bf16.mxu0 0
    %859 = vmatpush1.bf16.msra.mxu0 %v433
    %860 = vmatprep.subr.bf16.mxu0 0
    %861 = vmatpush2.bf16.msra.mxu0 0
    %862 = vmatprep.subr.bf16.mxu0 0
    %863 = vmatpush2.bf16.msra.mxu0 0
    %864 = vmatprep.subr.bf16.mxu0 0
    %865 = vmatpush2.bf16.msra.mxu0 0
    %866 = vmatprep.subr.bf16.mxu0 0
    %867 = vmatpush2.bf16.msra.mxu0 0
    %868 = vmatprep.subr.bf16.mxu0 0
    %869 = vmatpush2.bf16.msra.mxu0 0
    %870 = vmatprep.subr.bf16.mxu0 0
    %871 = vmatpush2.bf16.msra.mxu0 0
    %872 = vmatprep.subr.bf16.mxu0 0
    %873 = vmatpush2.bf16.msra.mxu0 0
    %874 = vmatprep.subr.bf16.mxu0 0
    %875 = vmatpush2.bf16.msra.mxu0 0
    %876 = vmatprep.mubr.bf16.mxu0 0
    %877 = vmatmul.mubr.bf16.gmra.mxu0 %v839
    %v878 = vpop.f32.mrf.mxu0
    %v879 = vadd.f32 0.0, %v878
    %v880 = vpop.f32.mrf.mxu0
    %v881 = vpop.f32.mrf.mxu0
    %v882 = vadd.f32 0.0, %v881
    %v883 = vpop.f32.mrf.mxu0
    %884 = vmatprep.mubr.bf16.mxu0 0
    %885 = vmatmul.mubr.bf16.gmra.mxu0 %v842
    %v886 = vpop.f32.mrf.mxu0
    %v887 = vadd.f32 0.0, %v886
    %v888 = vpop.f32.mrf.mxu0
    %v889 = vpop.f32.mrf.mxu0
    %v890 = vadd.f32 0.0, %v889
    %v891 = vpop.f32.mrf.mxu0
    %892 = vdwg.mxu0
    %v897 = vunpack.c.l.b16 %v80
    %v898 = vunpack.c.l.b16 %v81
    %v899 = vunpack.c.l.b16 %v82
    %v900 = vunpack.c.l.b16 %v83
    %v901 = vpack.c.b16 %v898, %v897
    %v902 = vpack.c.b16 %v900, %v899
    %v904 = vsel %vm447, %v901, 0
    %v907 = vsel %vm447, %v902, 0
    %909 = vmatprep.subr.bf16.mxu0 0
    %910 = vmatpush1.bf16.msra.mxu0 0
    %911 = vmatprep.subr.bf16.mxu0 0
    %912 = vmatpush1.bf16.msra.mxu0 0
    %913 = vmatprep.subr.bf16.mxu0 0
    %914 = vmatpush1.bf16.msra.mxu0 0
    %915 = vmatprep.subr.bf16.mxu0 0
    %916 = vmatpush1.bf16.msra.mxu0 0
    %917 = vmatprep.subr.bf16.mxu0 0
    %918 = vmatpush1.bf16.msra.mxu0 0
    %919 = vmatprep.subr.bf16.mxu0 0
    %920 = vmatpush1.bf16.msra.mxu0 0
    %921 = vmatprep.subr.bf16.mxu0 0
    %922 = vmatpush1.bf16.msra.mxu0 %v436
    %923 = vmatprep.subr.bf16.mxu0 0
    %924 = vmatpush1.bf16.msra.mxu0 %v435
    %925 = vmatprep.subr.bf16.mxu0 0
    %926 = vmatpush2.bf16.msra.mxu0 0
    %927 = vmatprep.subr.bf16.mxu0 0
    %928 = vmatpush2.bf16.msra.mxu0 0
    %929 = vmatprep.subr.bf16.mxu0 0
    %930 = vmatpush2.bf16.msra.mxu0 0
    %931 = vmatprep.subr.bf16.mxu0 0
    %932 = vmatpush2.bf16.msra.mxu0 0
    %933 = vmatprep.subr.bf16.mxu0 0
    %934 = vmatpush2.bf16.msra.mxu0 0
    %935 = vmatprep.subr.bf16.mxu0 0
    %936 = vmatpush2.bf16.msra.mxu0 0
    %937 = vmatprep.subr.bf16.mxu0 0
    %938 = vmatpush2.bf16.msra.mxu0 0
    %939 = vmatprep.subr.bf16.mxu0 0
    %940 = vmatpush2.bf16.msra.mxu0 0
    %941 = vmatprep.mubr.bf16.mxu0 0
    %942 = vmatmul.mubr.bf16.gmra.mxu0 %v904
    %v943 = vpop.f32.mrf.mxu0
    %v944 = vadd.f32 0.0, %v943
    %v945 = vpop.f32.mrf.mxu0
    %v946 = vpop.f32.mrf.mxu0
    %v947 = vadd.f32 0.0, %v946
    %v948 = vpop.f32.mrf.mxu0
    %949 = vmatprep.mubr.bf16.mxu0 0
    %950 = vmatmul.mubr.bf16.gmra.mxu0 %v907
    %v951 = vpop.f32.mrf.mxu0
    %v952 = vadd.f32 0.0, %v951
    %v953 = vpop.f32.mrf.mxu0
    %v954 = vpop.f32.mrf.mxu0
    %v955 = vadd.f32 0.0, %v954
    %v956 = vpop.f32.mrf.mxu0
    %957 = vdwg.mxu0
    %v958 = vld [vmem:[%s4] sm:$0xf]
    %v959 = vld [vmem:[%s4 + $0x4] sm:$0xf]
    %v960 = vld [vmem:[%s4 + $0x8] sm:$0xf]
    %v961 = vld [vmem:[%s4 + $0xc] sm:$0xf]
    %v962 = vld [vmem:[%s4 + $0x10] sm:$0xf]
    %v963 = vld [vmem:[%s4 + $0x14] sm:$0xf]
    %v964 = vld [vmem:[%s4 + $0x18] sm:$0xf]
    %v965 = vld [vmem:[%s4 + $0x1c] sm:$0xf]
    %v966 = vpack.c.bf16 %v492, %v489
    %v967 = vpack.c.bf16 %v500, %v497
    %v968 = vpack.c.bf16 %v557, %v554
    %v969 = vpack.c.bf16 %v565, %v562
    %v970 = vpack.c.bf16 %v622, %v619
    %v971 = vpack.c.bf16 %v630, %v627
    %v972 = vpack.c.bf16 %v687, %v684
    %v973 = vpack.c.bf16 %v695, %v692
    %v974 = vpack.c.bf16 %v752, %v749
    %v975 = vpack.c.bf16 %v760, %v757
    %v976 = vpack.c.bf16 %v817, %v814
    %v977 = vpack.c.bf16 %v825, %v822
    %v978 = vpack.c.bf16 %v882, %v879
    %v979 = vpack.c.bf16 %v890, %v887
    %v980 = vpack.c.bf16 %v947, %v944
    %v981 = vpack.c.bf16 %v955, %v952
    %v982 = vld [vmem:[%s5] sm:$0xf]
    %v983 = vld [vmem:[%s5 + $0x4] sm:$0xf]
    %v984 = vld [vmem:[%s5 + $0x8] sm:$0xf]
    %v985 = vld [vmem:[%s5 + $0xc] sm:$0xf]
    %v986 = vld [vmem:[%s5 + $0x10] sm:$0xf]
    %v987 = vld [vmem:[%s5 + $0x14] sm:$0xf]
    %v988 = vld [vmem:[%s5 + $0x18] sm:$0xf]
    %v989 = vld [vmem:[%s5 + $0x1c] sm:$0xf]
    %v998 = vunpack.c.l.b16 %v982
    %v999 = vunpack.c.l.b16 %v983
    %v1000 = vunpack.c.l.b16 %v984
    %v1001 = vunpack.c.l.b16 %v985
    %v1002 = vunpack.c.l.b16 %v986
    %v1003 = vunpack.c.l.b16 %v987
    %v1004 = vunpack.c.l.b16 %v988
    %v1005 = vunpack.c.l.b16 %v989
    %v1006 = vpack.c.b16 %v999, %v998
    %v1007 = vpack.c.b16 %v1001, %v1000
    %v1008 = vpack.c.b16 %v1003, %v1002
    %v1009 = vpack.c.b16 %v1005, %v1004
    %vm1014 = vcmask 523264
    %v1016 = vsel %vm1014, %v966, 0
    %v1019 = vsel %vm1014, %v967, 0
    %v1022 = vsel %vm1014, %v968, 0
    %v1025 = vsel %vm1014, %v969, 0
    %v1028 = vsel %vm1014, %v970, 0
    %v1031 = vsel %vm1014, %v971, 0
    %v1034 = vsel %vm1014, %v972, 0
    %v1037 = vsel %vm1014, %v973, 0
    %v1040 = vsel %vm1014, %v974, 0
    %v1043 = vsel %vm1014, %v975, 0
    %v1046 = vsel %vm1014, %v976, 0
    %v1049 = vsel %vm1014, %v977, 0
    %v1052 = vsel %vm1014, %v978, 0
    %v1055 = vsel %vm1014, %v979, 0
    %v1058 = vsel %vm1014, %v980, 0
    %v1061 = vsel %vm1014, %v981, 0
    %1063 = vmatprep.subr.bf16.mxu0 0
    %1064 = vmatpush1.bf16.msra.mxu0 0
    %1065 = vmatprep.subr.bf16.mxu0 0
    %1066 = vmatpush1.bf16.msra.mxu0 0
    %1067 = vmatprep.subr.bf16.mxu0 0
    %1068 = vmatpush1.bf16.msra.mxu0 0
    %1069 = vmatprep.subr.bf16.mxu0 0
    %1070 = vmatpush1.bf16.msra.mxu0 0
    %1071 = vmatprep.subr.bf16.mxu0 0
    %1072 = vmatpush1.bf16.msra.mxu0 %v1009
    %1073 = vmatprep.subr.bf16.mxu0 0
    %1074 = vmatpush1.bf16.msra.mxu0 %v1008
    %1075 = vmatprep.subr.bf16.mxu0 0
    %1076 = vmatpush1.bf16.msra.mxu0 %v1007
    %1077 = vmatprep.subr.bf16.mxu0 0
    %1078 = vmatpush1.bf16.msra.mxu0 %v1006
    %1079 = vmatprep.subr.bf16.mxu0 0
    %1080 = vmatpush2.bf16.msra.mxu0 0
    %1081 = vmatprep.subr.bf16.mxu0 0
    %1082 = vmatpush2.bf16.msra.mxu0 0
    %1083 = vmatprep.subr.bf16.mxu0 0
    %1084 = vmatpush2.bf16.msra.mxu0 0
    %1085 = vmatprep.subr.bf16.mxu0 0
    %1086 = vmatpush2.bf16.msra.mxu0 0
    %1087 = vmatprep.subr.bf16.mxu0 0
    %1088 = vmatpush2.bf16.msra.mxu0 0
    %1089 = vmatprep.subr.bf16.mxu0 0
    %1090 = vmatpush2.bf16.msra.mxu0 0
    %1091 = vmatprep.subr.bf16.mxu0 0
    %1092 = vmatpush2.bf16.msra.mxu0 0
    %1093 = vmatprep.subr.bf16.mxu0 0
    %1094 = vmatpush2.bf16.msra.mxu0 0
    %1095 = vmatprep.mubr.bf16.mxu0 0
    %1096 = vmatmul.mubr.bf16.gmra.mxu0 %v1016
    %v1097 = vpop.f32.mrf.mxu0
    %v1098 = vadd.f32 0.0, %v1097
    %v1099 = vpop.f32.mrf.mxu0
    %v1100 = vpop.f32.mrf.mxu0
    %v1101 = vadd.f32 0.0, %v1100
    %v1102 = vpop.f32.mrf.mxu0
    %1103 = vmatprep.mubr.bf16.mxu0 0
    %1104 = vmatmul.mubr.bf16.gmra.mxu0 %v1019
    %v1105 = vpop.f32.mrf.mxu0
    %v1106 = vadd.f32 0.0, %v1105
    %v1107 = vpop.f32.mrf.mxu0
    %v1108 = vpop.f32.mrf.mxu0
    %v1109 = vadd.f32 0.0, %v1108
    %v1110 = vpop.f32.mrf.mxu0
    %1111 = vmatprep.mubr.bf16.mxu0 0
    %1112 = vmatmul.mubr.bf16.gmra.mxu0 %v1022
    %v1113 = vpop.f32.mrf.mxu0
    %v1114 = vadd.f32 0.0, %v1113
    %v1115 = vpop.f32.mrf.mxu0
    %v1116 = vpop.f32.mrf.mxu0
    %v1117 = vadd.f32 0.0, %v1116
    %v1118 = vpop.f32.mrf.mxu0
    %1119 = vmatprep.mubr.bf16.mxu0 0
    %1120 = vmatmul.mubr.bf16.gmra.mxu0 %v1025
    %v1121 = vpop.f32.mrf.mxu0
    %v1122 = vadd.f32 0.0, %v1121
    %v1123 = vpop.f32.mrf.mxu0
    %v1124 = vpop.f32.mrf.mxu0
    %v1125 = vadd.f32 0.0, %v1124
    %v1126 = vpop.f32.mrf.mxu0
    %1127 = vmatprep.mubr.bf16.mxu0 0
    %1128 = vmatmul.mubr.bf16.gmra.mxu0 %v1028
    %v1129 = vpop.f32.mrf.mxu0
    %v1130 = vadd.f32 0.0, %v1129
    %v1131 = vpop.f32.mrf.mxu0
    %v1132 = vpop.f32.mrf.mxu0
    %v1133 = vadd.f32 0.0, %v1132
    %v1134 = vpop.f32.mrf.mxu0
    %1135 = vmatprep.mubr.bf16.mxu0 0
    %1136 = vmatmul.mubr.bf16.gmra.mxu0 %v1031
    %v1137 = vpop.f32.mrf.mxu0
    %v1138 = vadd.f32 0.0, %v1137
    %v1139 = vpop.f32.mrf.mxu0
    %v1140 = vpop.f32.mrf.mxu0
    %v1141 = vadd.f32 0.0, %v1140
    %v1142 = vpop.f32.mrf.mxu0
    %1143 = vmatprep.mubr.bf16.mxu0 0
    %1144 = vmatmul.mubr.bf16.gmra.mxu0 %v1034
    %v1145 = vpop.f32.mrf.mxu0
    %v1146 = vadd.f32 0.0, %v1145
    %v1147 = vpop.f32.mrf.mxu0
    %v1148 = vpop.f32.mrf.mxu0
    %v1149 = vadd.f32 0.0, %v1148
    %v1150 = vpop.f32.mrf.mxu0
    %1151 = vmatprep.mubr.bf16.mxu0 0
    %1152 = vmatmul.mubr.bf16.gmra.mxu0 %v1037
    %v1153 = vpop.f32.mrf.mxu0
    %v1154 = vadd.f32 0.0, %v1153
    %v1155 = vpop.f32.mrf.mxu0
    %v1156 = vpop.f32.mrf.mxu0
    %v1157 = vadd.f32 0.0, %v1156
    %v1158 = vpop.f32.mrf.mxu0
    %1159 = vmatprep.mubr.bf16.mxu0 0
    %1160 = vmatmul.mubr.bf16.gmra.mxu0 %v1040
    %v1161 = vpop.f32.mrf.mxu0
    %v1162 = vadd.f32 0.0, %v1161
    %v1163 = vpop.f32.mrf.mxu0
    %v1164 = vpop.f32.mrf.mxu0
    %v1165 = vadd.f32 0.0, %v1164
    %v1166 = vpop.f32.mrf.mxu0
    %1167 = vmatprep.mubr.bf16.mxu0 0
    %1168 = vmatmul.mubr.bf16.gmra.mxu0 %v1043
    %v1169 = vpop.f32.mrf.mxu0
    %v1170 = vadd.f32 0.0, %v1169
    %v1171 = vpop.f32.mrf.mxu0
    %v1172 = vpop.f32.mrf.mxu0
    %v1173 = vadd.f32 0.0, %v1172
    %v1174 = vpop.f32.mrf.mxu0
    %1175 = vmatprep.mubr.bf16.mxu0 0
    %1176 = vmatmul.mubr.bf16.gmra.mxu0 %v1046
    %v1177 = vpop.f32.mrf.mxu0
    %v1178 = vadd.f32 0.0, %v1177
    %v1179 = vpop.f32.mrf.mxu0
    %v1180 = vpop.f32.mrf.mxu0
    %v1181 = vadd.f32 0.0, %v1180
    %v1182 = vpop.f32.mrf.mxu0
    %1183 = vmatprep.mubr.bf16.mxu0 0
    %1184 = vmatmul.mubr.bf16.gmra.mxu0 %v1049
    %v1185 = vpop.f32.mrf.mxu0
    %v1186 = vadd.f32 0.0, %v1185
    %v1187 = vpop.f32.mrf.mxu0
    %v1188 = vpop.f32.mrf.mxu0
    %v1189 = vadd.f32 0.0, %v1188
    %v1190 = vpop.f32.mrf.mxu0
    %1191 = vmatprep.mubr.bf16.mxu0 0
    %1192 = vmatmul.mubr.bf16.gmra.mxu0 %v1052
    %v1193 = vpop.f32.mrf.mxu0
    %v1194 = vadd.f32 0.0, %v1193
    %v1195 = vpop.f32.mrf.mxu0
    %v1196 = vpop.f32.mrf.mxu0
    %v1197 = vadd.f32 0.0, %v1196
    %v1198 = vpop.f32.mrf.mxu0
    %1199 = vmatprep.mubr.bf16.mxu0 0
    %1200 = vmatmul.mubr.bf16.gmra.mxu0 %v1055
    %v1201 = vpop.f32.mrf.mxu0
    %v1202 = vadd.f32 0.0, %v1201
    %v1203 = vpop.f32.mrf.mxu0
    %v1204 = vpop.f32.mrf.mxu0
    %v1205 = vadd.f32 0.0, %v1204
    %v1206 = vpop.f32.mrf.mxu0
    %1207 = vmatprep.mubr.bf16.mxu0 0
    %1208 = vmatmul.mubr.bf16.gmra.mxu0 %v1058
    %v1209 = vpop.f32.mrf.mxu0
    %v1210 = vadd.f32 0.0, %v1209
    %v1211 = vpop.f32.mrf.mxu0
    %v1212 = vpop.f32.mrf.mxu0
    %v1213 = vadd.f32 0.0, %v1212
    %v1214 = vpop.f32.mrf.mxu0
    %1215 = vmatprep.mubr.bf16.mxu0 0
    %1216 = vmatmul.mubr.bf16.gmra.mxu0 %v1061
    %v1217 = vpop.f32.mrf.mxu0
    %v1218 = vadd.f32 0.0, %v1217
    %v1219 = vpop.f32.mrf.mxu0
    %v1220 = vpop.f32.mrf.mxu0
    %v1221 = vadd.f32 0.0, %v1220
    %v1222 = vpop.f32.mrf.mxu0
    %1223 = vdwg.mxu0
    %v1232 = vunpack.c.l.b16 %v958
    %v1233 = vunpack.c.l.b16 %v959
    %v1234 = vunpack.c.l.b16 %v960
    %v1235 = vunpack.c.l.b16 %v961
    %v1236 = vunpack.c.l.b16 %v962
    %v1237 = vunpack.c.l.b16 %v963
    %v1238 = vunpack.c.l.b16 %v964
    %v1239 = vunpack.c.l.b16 %v965
    %v1240 = vpack.c.b16 %v1233, %v1232
    %v1241 = vpack.c.b16 %v1235, %v1234
    %v1242 = vpack.c.b16 %v1237, %v1236
    %v1243 = vpack.c.b16 %v1239, %v1238
    %v1249 = vsel %vm1014, %v421, 0
    %v1252 = vsel %vm1014, %v422, 0
    %v1255 = vsel %vm1014, %v423, 0
    %v1258 = vsel %vm1014, %v424, 0
    %v1261 = vsel %vm1014, %v425, 0
    %v1264 = vsel %vm1014, %v426, 0
    %v1267 = vsel %vm1014, %v427, 0
    %v1270 = vsel %vm1014, %v428, 0
    %v1273 = vsel %vm1014, %v429, 0
    %v1276 = vsel %vm1014, %v430, 0
    %v1279 = vsel %vm1014, %v431, 0
    %v1282 = vsel %vm1014, %v432, 0
    %v1285 = vsel %vm1014, %v433, 0
    %v1288 = vsel %vm1014, %v434, 0
    %v1291 = vsel %vm1014, %v435, 0
    %v1294 = vsel %vm1014, %v436, 0
    %1296 = vmatprep.subr.bf16.mxu0 0
    %1297 = vmatpush1.bf16.msra.mxu0 0
    %1298 = vmatprep.subr.bf16.mxu0 0
    %1299 = vmatpush1.bf16.msra.mxu0 0
    %1300 = vmatprep.subr.bf16.mxu0 0
    %1301 = vmatpush1.bf16.msra.mxu0 0
    %1302 = vmatprep.subr.bf16.mxu0 0
    %1303 = vmatpush1.bf16.msra.mxu0 0
    %1304 = vmatprep.subr.bf16.mxu0 0
    %1305 = vmatpush1.bf16.msra.mxu0 %v1243
    %1306 = vmatprep.subr.bf16.mxu0 0
    %1307 = vmatpush1.bf16.msra.mxu0 %v1242
    %1308 = vmatprep.subr.bf16.mxu0 0
    %1309 = vmatpush1.bf16.msra.mxu0 %v1241
    %1310 = vmatprep.subr.bf16.mxu0 0
    %1311 = vmatpush1.bf16.msra.mxu0 %v1240
    %1312 = vmatprep.subr.bf16.mxu0 0
    %1313 = vmatpush2.bf16.msra.mxu0 0
    %1314 = vmatprep.subr.bf16.mxu0 0
    %1315 = vmatpush2.bf16.msra.mxu0 0
    %1316 = vmatprep.subr.bf16.mxu0 0
    %1317 = vmatpush2.bf16.msra.mxu0 0
    %1318 = vmatprep.subr.bf16.mxu0 0
    %1319 = vmatpush2.bf16.msra.mxu0 0
    %1320 = vmatprep.subr.bf16.mxu0 0
    %1321 = vmatpush2.bf16.msra.mxu0 0
    %1322 = vmatprep.subr.bf16.mxu0 0
    %1323 = vmatpush2.bf16.msra.mxu0 0
    %1324 = vmatprep.subr.bf16.mxu0 0
    %1325 = vmatpush2.bf16.msra.mxu0 0
    %1326 = vmatprep.subr.bf16.mxu0 0
    %1327 = vmatpush2.bf16.msra.mxu0 0
    %1328 = vmatprep.mubr.bf16.mxu0 0
    %1329 = vmatmul.mubr.bf16.gmra.mxu0 %v1249
    %v1330 = vpop.f32.mrf.mxu0
    %v1331 = vadd.f32 %v1098, %v1330
    %v1332 = vpop.f32.mrf.mxu0
    %v1333 = vpop.f32.mrf.mxu0
    %v1334 = vadd.f32 %v1101, %v1333
    %v1335 = vpop.f32.mrf.mxu0
    %1336 = vmatprep.mubr.bf16.mxu0 0
    %1337 = vmatmul.mubr.bf16.gmra.mxu0 %v1252
    %v1338 = vpop.f32.mrf.mxu0
    %v1339 = vadd.f32 %v1106, %v1338
    %v1340 = vpop.f32.mrf.mxu0
    %v1341 = vpop.f32.mrf.mxu0
    %v1342 = vadd.f32 %v1109, %v1341
    %v1343 = vpop.f32.mrf.mxu0
    %1344 = vmatprep.mubr.bf16.mxu0 0
    %1345 = vmatmul.mubr.bf16.gmra.mxu0 %v1255
    %v1346 = vpop.f32.mrf.mxu0
    %v1347 = vadd.f32 %v1114, %v1346
    %v1348 = vpop.f32.mrf.mxu0
    %v1349 = vpop.f32.mrf.mxu0
    %v1350 = vadd.f32 %v1117, %v1349
    %v1351 = vpop.f32.mrf.mxu0
    %1352 = vmatprep.mubr.bf16.mxu0 0
    %1353 = vmatmul.mubr.bf16.gmra.mxu0 %v1258
    %v1354 = vpop.f32.mrf.mxu0
    %v1355 = vadd.f32 %v1122, %v1354
    %v1356 = vpop.f32.mrf.mxu0
    %v1357 = vpop.f32.mrf.mxu0
    %v1358 = vadd.f32 %v1125, %v1357
    %v1359 = vpop.f32.mrf.mxu0
    %1360 = vmatprep.mubr.bf16.mxu0 0
    %1361 = vmatmul.mubr.bf16.gmra.mxu0 %v1261
    %v1362 = vpop.f32.mrf.mxu0
    %v1363 = vadd.f32 %v1130, %v1362
    %v1364 = vpop.f32.mrf.mxu0
    %v1365 = vpop.f32.mrf.mxu0
    %v1366 = vadd.f32 %v1133, %v1365
    %v1367 = vpop.f32.mrf.mxu0
    %1368 = vmatprep.mubr.bf16.mxu0 0
    %1369 = vmatmul.mubr.bf16.gmra.mxu0 %v1264
    %v1370 = vpop.f32.mrf.mxu0
    %v1371 = vadd.f32 %v1138, %v1370
    %v1372 = vpop.f32.mrf.mxu0
    %v1373 = vpop.f32.mrf.mxu0
    %v1374 = vadd.f32 %v1141, %v1373
    %v1375 = vpop.f32.mrf.mxu0
    %1376 = vmatprep.mubr.bf16.mxu0 0
    %1377 = vmatmul.mubr.bf16.gmra.mxu0 %v1267
    %v1378 = vpop.f32.mrf.mxu0
    %v1379 = vadd.f32 %v1146, %v1378
    %v1380 = vpop.f32.mrf.mxu0
    %v1381 = vpop.f32.mrf.mxu0
    %v1382 = vadd.f32 %v1149, %v1381
    %v1383 = vpop.f32.mrf.mxu0
    %1384 = vmatprep.mubr.bf16.mxu0 0
    %1385 = vmatmul.mubr.bf16.gmra.mxu0 %v1270
    %v1386 = vpop.f32.mrf.mxu0
    %v1387 = vadd.f32 %v1154, %v1386
    %v1388 = vpop.f32.mrf.mxu0
    %v1389 = vpop.f32.mrf.mxu0
    %v1390 = vadd.f32 %v1157, %v1389
    %v1391 = vpop.f32.mrf.mxu0
    %1392 = vmatprep.mubr.bf16.mxu0 0
    %1393 = vmatmul.mubr.bf16.gmra.mxu0 %v1273
    %v1394 = vpop.f32.mrf.mxu0
    %v1395 = vadd.f32 %v1162, %v1394
    %v1396 = vpop.f32.mrf.mxu0
    %v1397 = vpop.f32.mrf.mxu0
    %v1398 = vadd.f32 %v1165, %v1397
    %v1399 = vpop.f32.mrf.mxu0
    %1400 = vmatprep.mubr.bf16.mxu0 0
    %1401 = vmatmul.mubr.bf16.gmra.mxu0 %v1276
    %v1402 = vpop.f32.mrf.mxu0
    %v1403 = vadd.f32 %v1170, %v1402
    %v1404 = vpop.f32.mrf.mxu0
    %v1405 = vpop.f32.mrf.mxu0
    %v1406 = vadd.f32 %v1173, %v1405
    %v1407 = vpop.f32.mrf.mxu0
    %1408 = vmatprep.mubr.bf16.mxu0 0
    %1409 = vmatmul.mubr.bf16.gmra.mxu0 %v1279
    %v1410 = vpop.f32.mrf.mxu0
    %v1411 = vadd.f32 %v1178, %v1410
    %v1412 = vpop.f32.mrf.mxu0
    %v1413 = vpop.f32.mrf.mxu0
    %v1414 = vadd.f32 %v1181, %v1413
    %v1415 = vpop.f32.mrf.mxu0
    %1416 = vmatprep.mubr.bf16.mxu0 0
    %1417 = vmatmul.mubr.bf16.gmra.mxu0 %v1282
    %v1418 = vpop.f32.mrf.mxu0
    %v1419 = vadd.f32 %v1186, %v1418
    %v1420 = vpop.f32.mrf.mxu0
    %v1421 = vpop.f32.mrf.mxu0
    %v1422 = vadd.f32 %v1189, %v1421
    %v1423 = vpop.f32.mrf.mxu0
    %1424 = vmatprep.mubr.bf16.mxu0 0
    %1425 = vmatmul.mubr.bf16.gmra.mxu0 %v1285
    %v1426 = vpop.f32.mrf.mxu0
    %v1427 = vadd.f32 %v1194, %v1426
    %v1428 = vpop.f32.mrf.mxu0
    %v1429 = vpop.f32.mrf.mxu0
    %v1430 = vadd.f32 %v1197, %v1429
    %v1431 = vpop.f32.mrf.mxu0
    %1432 = vmatprep.mubr.bf16.mxu0 0
    %1433 = vmatmul.mubr.bf16.gmra.mxu0 %v1288
    %v1434 = vpop.f32.mrf.mxu0
    %v1435 = vadd.f32 %v1202, %v1434
    %v1436 = vpop.f32.mrf.mxu0
    %v1437 = vpop.f32.mrf.mxu0
    %v1438 = vadd.f32 %v1205, %v1437
    %v1439 = vpop.f32.mrf.mxu0
    %1440 = vmatprep.mubr.bf16.mxu0 0
    %1441 = vmatmul.mubr.bf16.gmra.mxu0 %v1291
    %v1442 = vpop.f32.mrf.mxu0
    %v1443 = vadd.f32 %v1210, %v1442
    %v1444 = vpop.f32.mrf.mxu0
    %v1445 = vpop.f32.mrf.mxu0
    %v1446 = vadd.f32 %v1213, %v1445
    %v1447 = vpop.f32.mrf.mxu0
    %1448 = vmatprep.mubr.bf16.mxu0 0
    %1449 = vmatmul.mubr.bf16.gmra.mxu0 %v1294
    %v1450 = vpop.f32.mrf.mxu0
    %v1451 = vadd.f32 %v1218, %v1450
    %v1452 = vpop.f32.mrf.mxu0
    %v1453 = vpop.f32.mrf.mxu0
    %v1454 = vadd.f32 %v1221, %v1453
    %v1455 = vpop.f32.mrf.mxu0
    %1456 = vdwg.mxu0
    %v1457 = vld [vmem:[%s6] sm:$0x1]
    %v1459 = vlaneseq
    %v1460 = vshrl.u32 %v1459, 7
    %v1461 = vsub.s32 0, %v1460
    %v1462 = vrot.slane %v1457, %v1461
    %v1464 = vadd.f32 %v1331, %v1462
    %v1465 = vadd.f32 %v1334, %v1462
    %v1466 = vadd.f32 %v1339, %v1462
    %v1467 = vadd.f32 %v1342, %v1462
    %v1468 = vadd.f32 %v1347, %v1462
    %v1469 = vadd.f32 %v1350, %v1462
    %v1470 = vadd.f32 %v1355, %v1462
    %v1471 = vadd.f32 %v1358, %v1462
    %v1472 = vadd.f32 %v1363, %v1462
    %v1473 = vadd.f32 %v1366, %v1462
    %v1474 = vadd.f32 %v1371, %v1462
    %v1475 = vadd.f32 %v1374, %v1462
    %v1476 = vadd.f32 %v1379, %v1462
    %v1477 = vadd.f32 %v1382, %v1462
    %v1478 = vadd.f32 %v1387, %v1462
    %v1479 = vadd.f32 %v1390, %v1462
    %v1480 = vadd.f32 %v1395, %v1462
    %v1481 = vadd.f32 %v1398, %v1462
    %v1482 = vadd.f32 %v1403, %v1462
    %v1483 = vadd.f32 %v1406, %v1462
    %v1484 = vadd.f32 %v1411, %v1462
    %v1485 = vadd.f32 %v1414, %v1462
    %v1486 = vadd.f32 %v1419, %v1462
    %v1487 = vadd.f32 %v1422, %v1462
    %v1488 = vadd.f32 %v1427, %v1462
    %v1489 = vadd.f32 %v1430, %v1462
    %v1490 = vadd.f32 %v1435, %v1462
    %v1491 = vadd.f32 %v1438, %v1462
    %v1492 = vadd.f32 %v1443, %v1462
    %v1493 = vadd.f32 %v1446, %v1462
    %v1494 = vadd.f32 %v1451, %v1462
    %v1495 = vadd.f32 %v1454, %v1462
    %v1496 = vmul.f32 %v1464, %v1464
    %v1497 = vmul.f32 %v1465, %v1465
    %v1498 = vmul.f32 %v1466, %v1466
    %v1499 = vmul.f32 %v1467, %v1467
    %v1500 = vmul.f32 %v1468, %v1468
    %v1501 = vmul.f32 %v1469, %v1469
    %v1502 = vmul.f32 %v1470, %v1470
    %v1503 = vmul.f32 %v1471, %v1471
    %v1504 = vmul.f32 %v1472, %v1472
    %v1505 = vmul.f32 %v1473, %v1473
    %v1506 = vmul.f32 %v1474, %v1474
    %v1507 = vmul.f32 %v1475, %v1475
    %v1508 = vmul.f32 %v1476, %v1476
    %v1509 = vmul.f32 %v1477, %v1477
    %v1510 = vmul.f32 %v1478, %v1478
    %v1511 = vmul.f32 %v1479, %v1479
    %v1512 = vmul.f32 %v1480, %v1480
    %v1513 = vmul.f32 %v1481, %v1481
    %v1514 = vmul.f32 %v1482, %v1482
    %v1515 = vmul.f32 %v1483, %v1483
    %v1516 = vmul.f32 %v1484, %v1484
    %v1517 = vmul.f32 %v1485, %v1485
    %v1518 = vmul.f32 %v1486, %v1486
    %v1519 = vmul.f32 %v1487, %v1487
    %v1520 = vmul.f32 %v1488, %v1488
    %v1521 = vmul.f32 %v1489, %v1489
    %v1522 = vmul.f32 %v1490, %v1490
    %v1523 = vmul.f32 %v1491, %v1491
    %v1524 = vmul.f32 %v1492, %v1492
    %v1525 = vmul.f32 %v1493, %v1493
    %v1526 = vmul.f32 %v1494, %v1494
    %v1527 = vmul.f32 %v1495, %v1495
    %1528 = vadd.xlane.f32.xlu0 %v1496
    %v1529 = vpop.xlane.xlu0 %1528
    %1530 = vadd.xlane.f32.xlu0 %v1497
    %v1531 = vpop.xlane.xlu0 %1530
    %1532 = vadd.xlane.f32.xlu0 %v1498
    %v1533 = vpop.xlane.xlu0 %1532
    %1534 = vadd.xlane.f32.xlu0 %v1499
    %v1535 = vpop.xlane.xlu0 %1534
    %1536 = vadd.xlane.f32.xlu0 %v1500
    %v1537 = vpop.xlane.xlu0 %1536
    %1538 = vadd.xlane.f32.xlu0 %v1501
    %v1539 = vpop.xlane.xlu0 %1538
    %1540 = vadd.xlane.f32.xlu0 %v1502
    %v1541 = vpop.xlane.xlu0 %1540
    %1542 = vadd.xlane.f32.xlu0 %v1503
    %v1543 = vpop.xlane.xlu0 %1542
    %1544 = vadd.xlane.f32.xlu0 %v1504
    %v1545 = vpop.xlane.xlu0 %1544
    %1546 = vadd.xlane.f32.xlu0 %v1505
    %v1547 = vpop.xlane.xlu0 %1546
    %1548 = vadd.xlane.f32.xlu0 %v1506
    %v1549 = vpop.xlane.xlu0 %1548
    %1550 = vadd.xlane.f32.xlu0 %v1507
    %v1551 = vpop.xlane.xlu0 %1550
    %1552 = vadd.xlane.f32.xlu0 %v1508
    %v1553 = vpop.xlane.xlu0 %1552
    %1554 = vadd.xlane.f32.xlu0 %v1509
    %v1555 = vpop.xlane.xlu0 %1554
    %1556 = vadd.xlane.f32.xlu0 %v1510
    %v1557 = vpop.xlane.xlu0 %1556
    %1558 = vadd.xlane.f32.xlu0 %v1511
    %v1559 = vpop.xlane.xlu0 %1558
    %1560 = vadd.xlane.f32.xlu0 %v1512
    %v1561 = vpop.xlane.xlu0 %1560
    %1562 = vadd.xlane.f32.xlu0 %v1513
    %v1563 = vpop.xlane.xlu0 %1562
    %1564 = vadd.xlane.f32.xlu0 %v1514
    %v1565 = vpop.xlane.xlu0 %1564
    %1566 = vadd.xlane.f32.xlu0 %v1515
    %v1567 = vpop.xlane.xlu0 %1566
    %1568 = vadd.xlane.f32.xlu0 %v1516
    %v1569 = vpop.xlane.xlu0 %1568
    %1570 = vadd.xlane.f32.xlu0 %v1517
    %v1571 = vpop.xlane.xlu0 %1570
    %1572 = vadd.xlane.f32.xlu0 %v1518
    %v1573 = vpop.xlane.xlu0 %1572
    %1574 = vadd.xlane.f32.xlu0 %v1519
    %v1575 = vpop.xlane.xlu0 %1574
    %1576 = vadd.xlane.f32.xlu0 %v1520
    %v1577 = vpop.xlane.xlu0 %1576
    %1578 = vadd.xlane.f32.xlu0 %v1521
    %v1579 = vpop.xlane.xlu0 %1578
    %1580 = vadd.xlane.f32.xlu0 %v1522
    %v1581 = vpop.xlane.xlu0 %1580
    %1582 = vadd.xlane.f32.xlu0 %v1523
    %v1583 = vpop.xlane.xlu0 %1582
    %1584 = vadd.xlane.f32.xlu0 %v1524
    %v1585 = vpop.xlane.xlu0 %1584
    %1586 = vadd.xlane.f32.xlu0 %v1525
    %v1587 = vpop.xlane.xlu0 %1586
    %1588 = vadd.xlane.f32.xlu0 %v1526
    %v1589 = vpop.xlane.xlu0 %1588
    %1590 = vadd.xlane.f32.xlu0 %v1527
    %v1591 = vpop.xlane.xlu0 %1590
    %v1592 = vmax.f32 %v1529, 1e-24
    %v1593 = vmax.f32 %v1531, 1e-24
    %v1594 = vmax.f32 %v1533, 1e-24
    %v1595 = vmax.f32 %v1535, 1e-24
    %v1596 = vmax.f32 %v1537, 1e-24
    %v1597 = vmax.f32 %v1539, 1e-24
    %v1598 = vmax.f32 %v1541, 1e-24
    %v1599 = vmax.f32 %v1543, 1e-24
    %v1600 = vmax.f32 %v1545, 1e-24
    %v1601 = vmax.f32 %v1547, 1e-24
    %v1602 = vmax.f32 %v1549, 1e-24
    %v1603 = vmax.f32 %v1551, 1e-24
    %v1604 = vmax.f32 %v1553, 1e-24
    %v1605 = vmax.f32 %v1555, 1e-24
    %v1606 = vmax.f32 %v1557, 1e-24
    %v1607 = vmax.f32 %v1559, 1e-24
    %v1608 = vmax.f32 %v1561, 1e-24
    %v1609 = vmax.f32 %v1563, 1e-24
    %v1610 = vmax.f32 %v1565, 1e-24
    %v1611 = vmax.f32 %v1567, 1e-24
    %v1612 = vmax.f32 %v1569, 1e-24
    %v1613 = vmax.f32 %v1571, 1e-24
    %v1614 = vmax.f32 %v1573, 1e-24
    %v1615 = vmax.f32 %v1575, 1e-24
    %v1616 = vmax.f32 %v1577, 1e-24
    %v1617 = vmax.f32 %v1579, 1e-24
    %v1618 = vmax.f32 %v1581, 1e-24
    %v1619 = vmax.f32 %v1583, 1e-24
    %v1620 = vmax.f32 %v1585, 1e-24
    %v1621 = vmax.f32 %v1587, 1e-24
    %v1622 = vmax.f32 %v1589, 1e-24
    %v1623 = vmax.f32 %v1591, 1e-24
    %v1624 = vrsqrt.pop %v1592
    %v1625 = vrsqrt.pop %v1593
    %v1626 = vrsqrt.pop %v1594
    %v1627 = vrsqrt.pop %v1595
    %v1628 = vrsqrt.pop %v1596
    %v1629 = vrsqrt.pop %v1597
    %v1630 = vrsqrt.pop %v1598
    %v1631 = vrsqrt.pop %v1599
    %v1632 = vrsqrt.pop %v1600
    %v1633 = vrsqrt.pop %v1601
    %v1634 = vrsqrt.pop %v1602
    %v1635 = vrsqrt.pop %v1603
    %v1636 = vrsqrt.pop %v1604
    %v1637 = vrsqrt.pop %v1605
    %v1638 = vrsqrt.pop %v1606
    %v1639 = vrsqrt.pop %v1607
    %v1640 = vrsqrt.pop %v1608
    %v1641 = vrsqrt.pop %v1609
    %v1642 = vrsqrt.pop %v1610
    %v1643 = vrsqrt.pop %v1611
    %v1644 = vrsqrt.pop %v1612
    %v1645 = vrsqrt.pop %v1613
    %v1646 = vrsqrt.pop %v1614
    %v1647 = vrsqrt.pop %v1615
    %v1648 = vrsqrt.pop %v1616
    %v1649 = vrsqrt.pop %v1617
    %v1650 = vrsqrt.pop %v1618
    %v1651 = vrsqrt.pop %v1619
    %v1652 = vrsqrt.pop %v1620
    %v1653 = vrsqrt.pop %v1621
    %v1654 = vrsqrt.pop %v1622
    %v1655 = vrsqrt.pop %v1623
    %v1656 = vmul.f32 %v1464, %v1624
    %v1657 = vmul.f32 %v1465, %v1625
    %v1658 = vmul.f32 %v1466, %v1626
    %v1659 = vmul.f32 %v1467, %v1627
    %v1660 = vmul.f32 %v1468, %v1628
    %v1661 = vmul.f32 %v1469, %v1629
    %v1662 = vmul.f32 %v1470, %v1630
    %v1663 = vmul.f32 %v1471, %v1631
    %v1664 = vmul.f32 %v1472, %v1632
    %v1665 = vmul.f32 %v1473, %v1633
    %v1666 = vmul.f32 %v1474, %v1634
    %v1667 = vmul.f32 %v1475, %v1635
    %v1668 = vmul.f32 %v1476, %v1636
    %v1669 = vmul.f32 %v1477, %v1637
    %v1670 = vmul.f32 %v1478, %v1638
    %v1671 = vmul.f32 %v1479, %v1639
    %v1672 = vmul.f32 %v1480, %v1640
    %v1673 = vmul.f32 %v1481, %v1641
    %v1674 = vmul.f32 %v1482, %v1642
    %v1675 = vmul.f32 %v1483, %v1643
    %v1676 = vmul.f32 %v1484, %v1644
    %v1677 = vmul.f32 %v1485, %v1645
    %v1678 = vmul.f32 %v1486, %v1646
    %v1679 = vmul.f32 %v1487, %v1647
    %v1680 = vmul.f32 %v1488, %v1648
    %v1681 = vmul.f32 %v1489, %v1649
    %v1682 = vmul.f32 %v1490, %v1650
    %v1683 = vmul.f32 %v1491, %v1651
    %v1684 = vmul.f32 %v1492, %v1652
    %v1685 = vmul.f32 %v1493, %v1653
    %v1686 = vmul.f32 %v1494, %v1654
    %v1687 = vmul.f32 %v1495, %v1655
    %v1688 = vmax.f32 %v1656, 0.0
    %v1689 = vmax.f32 %v1657, 0.0
    %v1690 = vmax.f32 %v1658, 0.0
    %v1691 = vmax.f32 %v1659, 0.0
    %v1692 = vmax.f32 %v1660, 0.0
    %v1693 = vmax.f32 %v1661, 0.0
    %v1694 = vmax.f32 %v1662, 0.0
    %v1695 = vmax.f32 %v1663, 0.0
    %v1696 = vmax.f32 %v1664, 0.0
    %v1697 = vmax.f32 %v1665, 0.0
    %v1698 = vmax.f32 %v1666, 0.0
    %v1699 = vmax.f32 %v1667, 0.0
    %v1700 = vmax.f32 %v1668, 0.0
    %v1701 = vmax.f32 %v1669, 0.0
    %v1702 = vmax.f32 %v1670, 0.0
    %v1703 = vmax.f32 %v1671, 0.0
    %v1704 = vmax.f32 %v1672, 0.0
    %v1705 = vmax.f32 %v1673, 0.0
    %v1706 = vmax.f32 %v1674, 0.0
    %v1707 = vmax.f32 %v1675, 0.0
    %v1708 = vmax.f32 %v1676, 0.0
    %v1709 = vmax.f32 %v1677, 0.0
    %v1710 = vmax.f32 %v1678, 0.0
    %v1711 = vmax.f32 %v1679, 0.0
    %v1712 = vmax.f32 %v1680, 0.0
    %v1713 = vmax.f32 %v1681, 0.0
    %v1714 = vmax.f32 %v1682, 0.0
    %v1715 = vmax.f32 %v1683, 0.0
    %v1716 = vmax.f32 %v1684, 0.0
    %v1717 = vmax.f32 %v1685, 0.0
    %v1718 = vmax.f32 %v1686, 0.0
    %v1719 = vmax.f32 %v1687, 0.0
    %v1720 = vadd.f32 %v1688, %v1689
    %v1721 = vadd.f32 %v1720, %v1690
    %v1722 = vadd.f32 %v1721, %v1691
    %v1723 = vadd.f32 %v1722, %v1692
    %v1724 = vadd.f32 %v1723, %v1693
    %v1725 = vadd.f32 %v1724, %v1694
    %v1726 = vadd.f32 %v1725, %v1695
    %v1727 = vadd.f32 %v1726, %v1696
    %v1728 = vadd.f32 %v1727, %v1697
    %v1729 = vadd.f32 %v1728, %v1698
    %v1730 = vadd.f32 %v1729, %v1699
    %v1731 = vadd.f32 %v1730, %v1700
    %v1732 = vadd.f32 %v1731, %v1701
    %v1733 = vadd.f32 %v1732, %v1702
    %v1734 = vadd.f32 %v1733, %v1703
    %v1735 = vadd.f32 %v1734, %v1704
    %v1736 = vadd.f32 %v1735, %v1705
    %v1737 = vadd.f32 %v1736, %v1706
    %v1738 = vadd.f32 %v1737, %v1707
    %v1739 = vadd.f32 %v1738, %v1708
    %v1740 = vadd.f32 %v1739, %v1709
    %v1741 = vadd.f32 %v1740, %v1710
    %v1742 = vadd.f32 %v1741, %v1711
    %v1743 = vadd.f32 %v1742, %v1712
    %v1744 = vadd.f32 %v1743, %v1713
    %v1745 = vadd.f32 %v1744, %v1714
    %v1746 = vadd.f32 %v1745, %v1715
    %v1747 = vadd.f32 %v1746, %v1716
    %v1748 = vadd.f32 %v1747, %v1717
    %v1749 = vadd.f32 %v1748, %v1718
    %v1750 = vadd.f32 %v1749, %v1719
    %v1751 = vrot.slane %v1750, 4
    %v1752 = vadd.f32 %v1750, %v1751
    %v1753 = vrot.slane %v1752, 2
    %v1754 = vadd.f32 %v1752, %v1753
    %v1755 = vrot.slane %v1754, 1
    %v1756 = vadd.f32 %v1754, %v1755
    %v1757 = vrcp.pop 256.0
    %v1758 = vmul.f32 %v1756, %v1757
    %v1759 = vmul.f32 %v1688, %v1688
    %v1760 = vmul.f32 %v1689, %v1689
    %v1761 = vmul.f32 %v1690, %v1690
    %v1762 = vmul.f32 %v1691, %v1691
    %v1763 = vmul.f32 %v1692, %v1692
    %v1764 = vmul.f32 %v1693, %v1693
    %v1765 = vmul.f32 %v1694, %v1694
    %v1766 = vmul.f32 %v1695, %v1695
    %v1767 = vmul.f32 %v1696, %v1696
    %v1768 = vmul.f32 %v1697, %v1697
    %v1769 = vmul.f32 %v1698, %v1698
    %v1770 = vmul.f32 %v1699, %v1699
    %v1771 = vmul.f32 %v1700, %v1700
    %v1772 = vmul.f32 %v1701, %v1701
    %v1773 = vmul.f32 %v1702, %v1702
    %v1774 = vmul.f32 %v1703, %v1703
    %v1775 = vmul.f32 %v1704, %v1704
    %v1776 = vmul.f32 %v1705, %v1705
    %v1777 = vmul.f32 %v1706, %v1706
    %v1778 = vmul.f32 %v1707, %v1707
    %v1779 = vmul.f32 %v1708, %v1708
    %v1780 = vmul.f32 %v1709, %v1709
    %v1781 = vmul.f32 %v1710, %v1710
    %v1782 = vmul.f32 %v1711, %v1711
    %v1783 = vmul.f32 %v1712, %v1712
    %v1784 = vmul.f32 %v1713, %v1713
    %v1785 = vmul.f32 %v1714, %v1714
    %v1786 = vmul.f32 %v1715, %v1715
    %v1787 = vmul.f32 %v1716, %v1716
    %v1788 = vmul.f32 %v1717, %v1717
    %v1789 = vmul.f32 %v1718, %v1718
    %v1790 = vmul.f32 %v1719, %v1719
    %v1791 = vadd.f32 %v1759, %v1760
    %v1792 = vadd.f32 %v1791, %v1761
    %v1793 = vadd.f32 %v1792, %v1762
    %v1794 = vadd.f32 %v1793, %v1763
    %v1795 = vadd.f32 %v1794, %v1764
    %v1796 = vadd.f32 %v1795, %v1765
    %v1797 = vadd.f32 %v1796, %v1766
    %v1798 = vadd.f32 %v1797, %v1767
    %v1799 = vadd.f32 %v1798, %v1768
    %v1800 = vadd.f32 %v1799, %v1769
    %v1801 = vadd.f32 %v1800, %v1770
    %v1802 = vadd.f32 %v1801, %v1771
    %v1803 = vadd.f32 %v1802, %v1772
    %v1804 = vadd.f32 %v1803, %v1773
    %v1805 = vadd.f32 %v1804, %v1774
    %v1806 = vadd.f32 %v1805, %v1775
    %v1807 = vadd.f32 %v1806, %v1776
    %v1808 = vadd.f32 %v1807, %v1777
    %v1809 = vadd.f32 %v1808, %v1778
    %v1810 = vadd.f32 %v1809, %v1779
    %v1811 = vadd.f32 %v1810, %v1780
    %v1812 = vadd.f32 %v1811, %v1781
    %v1813 = vadd.f32 %v1812, %v1782
    %v1814 = vadd.f32 %v1813, %v1783
    %v1815 = vadd.f32 %v1814, %v1784
    %v1816 = vadd.f32 %v1815, %v1785
    %v1817 = vadd.f32 %v1816, %v1786
    %v1818 = vadd.f32 %v1817, %v1787
    %v1819 = vadd.f32 %v1818, %v1788
    %v1820 = vadd.f32 %v1819, %v1789
    %v1821 = vadd.f32 %v1820, %v1790
    %v1822 = vrot.slane %v1821, 4
    %v1823 = vadd.f32 %v1821, %v1822
    %v1824 = vrot.slane %v1823, 2
    %v1825 = vadd.f32 %v1823, %v1824
    %v1826 = vrot.slane %v1825, 1
    %v1827 = vadd.f32 %v1825, %v1826
    %v1828 = vmul.f32 %v1827, %v1757
    %v1829 = vmul.f32 %v1758, %v1758
    %v1830 = vsub.f32 %v1828, %v1829
    %v1831 = vmax.f32 %v1830, 0.0
    %v1832 = vsub.f32 %v1688, %v1758
    %v1833 = vsub.f32 %v1689, %v1758
    %v1834 = vsub.f32 %v1690, %v1758
    %v1835 = vsub.f32 %v1691, %v1758
    %v1836 = vsub.f32 %v1692, %v1758
    %v1837 = vsub.f32 %v1693, %v1758
    %v1838 = vsub.f32 %v1694, %v1758
    %v1839 = vsub.f32 %v1695, %v1758
    %v1840 = vsub.f32 %v1696, %v1758
    %v1841 = vsub.f32 %v1697, %v1758
    %v1842 = vsub.f32 %v1698, %v1758
    %v1843 = vsub.f32 %v1699, %v1758
    %v1844 = vsub.f32 %v1700, %v1758
    %v1845 = vsub.f32 %v1701, %v1758
    %v1846 = vsub.f32 %v1702, %v1758
    %v1847 = vsub.f32 %v1703, %v1758
    %v1848 = vsub.f32 %v1704, %v1758
    %v1849 = vsub.f32 %v1705, %v1758
    %v1850 = vsub.f32 %v1706, %v1758
    %v1851 = vsub.f32 %v1707, %v1758
    %v1852 = vsub.f32 %v1708, %v1758
    %v1853 = vsub.f32 %v1709, %v1758
    %v1854 = vsub.f32 %v1710, %v1758
    %v1855 = vsub.f32 %v1711, %v1758
    %v1856 = vsub.f32 %v1712, %v1758
    %v1857 = vsub.f32 %v1713, %v1758
    %v1858 = vsub.f32 %v1714, %v1758
    %v1859 = vsub.f32 %v1715, %v1758
    %v1860 = vsub.f32 %v1716, %v1758
    %v1861 = vsub.f32 %v1717, %v1758
    %v1862 = vsub.f32 %v1718, %v1758
    %v1863 = vsub.f32 %v1719, %v1758
    %v1864 = vadd.f32 %v1831, 1e-05
    %v1865 = vrsqrt.pop %v1864
    %v1866 = vmul.f32 %v1832, %v1865
    %v1867 = vmul.f32 %v1833, %v1865
    %v1868 = vmul.f32 %v1834, %v1865
    %v1869 = vmul.f32 %v1835, %v1865
    %v1870 = vmul.f32 %v1836, %v1865
    %v1871 = vmul.f32 %v1837, %v1865
    %v1872 = vmul.f32 %v1838, %v1865
    %v1873 = vmul.f32 %v1839, %v1865
    %v1874 = vmul.f32 %v1840, %v1865
    %v1875 = vmul.f32 %v1841, %v1865
    %v1876 = vmul.f32 %v1842, %v1865
    %v1877 = vmul.f32 %v1843, %v1865
    %v1878 = vmul.f32 %v1844, %v1865
    %v1879 = vmul.f32 %v1845, %v1865
    %v1880 = vmul.f32 %v1846, %v1865
    %v1881 = vmul.f32 %v1847, %v1865
    %v1882 = vmul.f32 %v1848, %v1865
    %v1883 = vmul.f32 %v1849, %v1865
    %v1884 = vmul.f32 %v1850, %v1865
    %v1885 = vmul.f32 %v1851, %v1865
    %v1886 = vmul.f32 %v1852, %v1865
    %v1887 = vmul.f32 %v1853, %v1865
    %v1888 = vmul.f32 %v1854, %v1865
    %v1889 = vmul.f32 %v1855, %v1865
    %v1890 = vmul.f32 %v1856, %v1865
    %v1891 = vmul.f32 %v1857, %v1865
    %v1892 = vmul.f32 %v1858, %v1865
    %v1893 = vmul.f32 %v1859, %v1865
    %v1894 = vmul.f32 %v1860, %v1865
    %v1895 = vmul.f32 %v1861, %v1865
    %v1896 = vmul.f32 %v1862, %v1865
    %v1897 = vmul.f32 %v1863, %v1865
    %v1898 = vld [vmem:[%s7] sm:$0x1]
    %v1900 = vlaneseq
    %v1901 = vshrl.u32 %v1900, 7
    %v1902 = vsub.s32 0, %v1901
    %v1903 = vrot.slane %v1898, %v1902
    %v1905 = vmul.f32 %v1866, %v1903
    %v1906 = vmul.f32 %v1867, %v1903
    %v1907 = vmul.f32 %v1868, %v1903
    %v1908 = vmul.f32 %v1869, %v1903
    %v1909 = vmul.f32 %v1870, %v1903
    %v1910 = vmul.f32 %v1871, %v1903
    %v1911 = vmul.f32 %v1872, %v1903
    %v1912 = vmul.f32 %v1873, %v1903
    %v1913 = vmul.f32 %v1874, %v1903
    %v1914 = vmul.f32 %v1875, %v1903
    %v1915 = vmul.f32 %v1876, %v1903
    %v1916 = vmul.f32 %v1877, %v1903
    %v1917 = vmul.f32 %v1878, %v1903
    %v1918 = vmul.f32 %v1879, %v1903
    %v1919 = vmul.f32 %v1880, %v1903
    %v1920 = vmul.f32 %v1881, %v1903
    %v1921 = vmul.f32 %v1882, %v1903
    %v1922 = vmul.f32 %v1883, %v1903
    %v1923 = vmul.f32 %v1884, %v1903
    %v1924 = vmul.f32 %v1885, %v1903
    %v1925 = vmul.f32 %v1886, %v1903
    %v1926 = vmul.f32 %v1887, %v1903
    %v1927 = vmul.f32 %v1888, %v1903
    %v1928 = vmul.f32 %v1889, %v1903
    %v1929 = vmul.f32 %v1890, %v1903
    %v1930 = vmul.f32 %v1891, %v1903
    %v1931 = vmul.f32 %v1892, %v1903
    %v1932 = vmul.f32 %v1893, %v1903
    %v1933 = vmul.f32 %v1894, %v1903
    %v1934 = vmul.f32 %v1895, %v1903
    %v1935 = vmul.f32 %v1896, %v1903
    %v1936 = vmul.f32 %v1897, %v1903
    %v1937 = vld [vmem:[%s8] sm:$0x1]
    %v1939 = vlaneseq
    %v1940 = vshrl.u32 %v1939, 7
    %v1941 = vsub.s32 0, %v1940
    %v1942 = vrot.slane %v1937, %v1941
    %v1944 = vadd.f32 %v1905, %v1942
    %v1945 = vadd.f32 %v1906, %v1942
    %v1946 = vadd.f32 %v1907, %v1942
    %v1947 = vadd.f32 %v1908, %v1942
    %v1948 = vadd.f32 %v1909, %v1942
    %v1949 = vadd.f32 %v1910, %v1942
    %v1950 = vadd.f32 %v1911, %v1942
    %v1951 = vadd.f32 %v1912, %v1942
    %v1952 = vadd.f32 %v1913, %v1942
    %v1953 = vadd.f32 %v1914, %v1942
    %v1954 = vadd.f32 %v1915, %v1942
    %v1955 = vadd.f32 %v1916, %v1942
    %v1956 = vadd.f32 %v1917, %v1942
    %v1957 = vadd.f32 %v1918, %v1942
    %v1958 = vadd.f32 %v1919, %v1942
    %v1959 = vadd.f32 %v1920, %v1942
    %v1960 = vadd.f32 %v1921, %v1942
    %v1961 = vadd.f32 %v1922, %v1942
    %v1962 = vadd.f32 %v1923, %v1942
    %v1963 = vadd.f32 %v1924, %v1942
    %v1964 = vadd.f32 %v1925, %v1942
    %v1965 = vadd.f32 %v1926, %v1942
    %v1966 = vadd.f32 %v1927, %v1942
    %v1967 = vadd.f32 %v1928, %v1942
    %v1968 = vadd.f32 %v1929, %v1942
    %v1969 = vadd.f32 %v1930, %v1942
    %v1970 = vadd.f32 %v1931, %v1942
    %v1971 = vadd.f32 %v1932, %v1942
    %v1972 = vadd.f32 %v1933, %v1942
    %v1973 = vadd.f32 %v1934, %v1942
    %v1974 = vadd.f32 %v1935, %v1942
    %v1975 = vadd.f32 %v1936, %v1942
    %v1976 = vpack.c.bf16 %v1945, %v1944
    %v1977 = vpack.c.bf16 %v1947, %v1946
    %v1978 = vpack.c.bf16 %v1949, %v1948
    %v1979 = vpack.c.bf16 %v1951, %v1950
    %v1980 = vpack.c.bf16 %v1953, %v1952
    %v1981 = vpack.c.bf16 %v1955, %v1954
    %v1982 = vpack.c.bf16 %v1957, %v1956
    %v1983 = vpack.c.bf16 %v1959, %v1958
    %v1984 = vpack.c.bf16 %v1961, %v1960
    %v1985 = vpack.c.bf16 %v1963, %v1962
    %v1986 = vpack.c.bf16 %v1965, %v1964
    %v1987 = vpack.c.bf16 %v1967, %v1966
    %v1988 = vpack.c.bf16 %v1969, %v1968
    %v1989 = vpack.c.bf16 %v1971, %v1970
    %v1990 = vpack.c.bf16 %v1973, %v1972
    %v1991 = vpack.c.bf16 %v1975, %v1974
    %1992 = vmatprep.subr.bf16.mxu0 0
    %1993 = vmatpush1.bf16.msra.mxu0 0
    %1994 = vmatprep.subr.bf16.mxu0 0
    %1995 = vmatpush1.bf16.msra.mxu0 0
    %1996 = vmatprep.subr.bf16.mxu0 0
    %1997 = vmatpush1.bf16.msra.mxu0 0
    %1998 = vmatprep.subr.bf16.mxu0 0
    %1999 = vmatpush1.bf16.msra.mxu0 0
    %2000 = vmatprep.subr.bf16.mxu0 0
    %2001 = vmatpush1.bf16.msra.mxu0 0
    %2002 = vmatprep.subr.bf16.mxu0 0
    %2003 = vmatpush1.bf16.msra.mxu0 0
    %2004 = vmatprep.subr.bf16.mxu0 0
    %2005 = vmatpush1.bf16.msra.mxu0 %v1977
    %2006 = vmatprep.subr.bf16.mxu0 0
    %2007 = vmatpush1.bf16.msra.mxu0 %v1976
    %2008 = vmatprep.subr.bf16.mxu0 0
    %2009 = vmatpush2.bf16.msra.mxu0 0
    %2010 = vmatprep.subr.bf16.mxu0 0
    %2011 = vmatpush2.bf16.msra.mxu0 0
    %2012 = vmatprep.subr.bf16.mxu0 0
    %2013 = vmatpush2.bf16.msra.mxu0 0
    %2014 = vmatprep.subr.bf16.mxu0 0
    %2015 = vmatpush2.bf16.msra.mxu0 0
    %2016 = vmatprep.subr.bf16.mxu0 0
    %2017 = vmatpush2.bf16.msra.mxu0 0
    %2018 = vmatprep.subr.bf16.mxu0 0
    %2019 = vmatpush2.bf16.msra.mxu0 0
    %2020 = vmatprep.subr.bf16.mxu0 0
    %2021 = vmatpush2.bf16.msra.mxu0 0
    %2022 = vmatprep.subr.bf16.mxu0 0
    %2023 = vmatpush2.bf16.msra.mxu0 0
    %2024 = vmatprep.mubr.bf16.mxu0 0
    %2025 = vmatmul.mubr.bf16.gmra.mxu0 %v449
    %v2026 = vpop.f32.mrf.mxu0
    %v2027 = vadd.f32 0.0, %v2026
    %v2028 = vpop.f32.mrf.mxu0
    %v2029 = vpop.f32.mrf.mxu0
    %v2030 = vadd.f32 0.0, %v2029
    %v2031 = vpop.f32.mrf.mxu0
    %2032 = vmatprep.mubr.bf16.mxu0 0
    %2033 = vmatmul.mubr.bf16.gmra.mxu0 %v452
    %v2034 = vpop.f32.mrf.mxu0
    %v2035 = vadd.f32 0.0, %v2034
    %v2036 = vpop.f32.mrf.mxu0
    %v2037 = vpop.f32.mrf.mxu0
    %v2038 = vadd.f32 0.0, %v2037
    %v2039 = vpop.f32.mrf.mxu0
    %2040 = vdwg.mxu0
    %2041 = vmatprep.subr.bf16.mxu0 0
    %2042 = vmatpush1.bf16.msra.mxu0 0
    %2043 = vmatprep.subr.bf16.mxu0 0
    %2044 = vmatpush1.bf16.msra.mxu0 0
    %2045 = vmatprep.subr.bf16.mxu0 0
    %2046 = vmatpush1.bf16.msra.mxu0 0
    %2047 = vmatprep.subr.bf16.mxu0 0
    %2048 = vmatpush1.bf16.msra.mxu0 0
    %2049 = vmatprep.subr.bf16.mxu0 0
    %2050 = vmatpush1.bf16.msra.mxu0 0
    %2051 = vmatprep.subr.bf16.mxu0 0
    %2052 = vmatpush1.bf16.msra.mxu0 0
    %2053 = vmatprep.subr.bf16.mxu0 0
    %2054 = vmatpush1.bf16.msra.mxu0 %v1979
    %2055 = vmatprep.subr.bf16.mxu0 0
    %2056 = vmatpush1.bf16.msra.mxu0 %v1978
    %2057 = vmatprep.subr.bf16.mxu0 0
    %2058 = vmatpush2.bf16.msra.mxu0 0
    %2059 = vmatprep.subr.bf16.mxu0 0
    %2060 = vmatpush2.bf16.msra.mxu0 0
    %2061 = vmatprep.subr.bf16.mxu0 0
    %2062 = vmatpush2.bf16.msra.mxu0 0
    %2063 = vmatprep.subr.bf16.mxu0 0
    %2064 = vmatpush2.bf16.msra.mxu0 0
    %2065 = vmatprep.subr.bf16.mxu0 0
    %2066 = vmatpush2.bf16.msra.mxu0 0
    %2067 = vmatprep.subr.bf16.mxu0 0
    %2068 = vmatpush2.bf16.msra.mxu0 0
    %2069 = vmatprep.subr.bf16.mxu0 0
    %2070 = vmatpush2.bf16.msra.mxu0 0
    %2071 = vmatprep.subr.bf16.mxu0 0
    %2072 = vmatpush2.bf16.msra.mxu0 0
    %2073 = vmatprep.mubr.bf16.mxu0 0
    %2074 = vmatmul.mubr.bf16.gmra.mxu0 %v514
    %v2075 = vpop.f32.mrf.mxu0
    %v2076 = vadd.f32 0.0, %v2075
    %v2077 = vpop.f32.mrf.mxu0
    %v2078 = vpop.f32.mrf.mxu0
    %v2079 = vadd.f32 0.0, %v2078
    %v2080 = vpop.f32.mrf.mxu0
    %2081 = vmatprep.mubr.bf16.mxu0 0
    %2082 = vmatmul.mubr.bf16.gmra.mxu0 %v517
    %v2083 = vpop.f32.mrf.mxu0
    %v2084 = vadd.f32 0.0, %v2083
    %v2085 = vpop.f32.mrf.mxu0
    %v2086 = vpop.f32.mrf.mxu0
    %v2087 = vadd.f32 0.0, %v2086
    %v2088 = vpop.f32.mrf.mxu0
    %2089 = vdwg.mxu0
    %2090 = vmatprep.subr.bf16.mxu0 0
    %2091 = vmatpush1.bf16.msra.mxu0 0
    %2092 = vmatprep.subr.bf16.mxu0 0
    %2093 = vmatpush1.bf16.msra.mxu0 0
    %2094 = vmatprep.subr.bf16.mxu0 0
    %2095 = vmatpush1.bf16.msra.mxu0 0
    %2096 = vmatprep.subr.bf16.mxu0 0
    %2097 = vmatpush1.bf16.msra.mxu0 0
    %2098 = vmatprep.subr.bf16.mxu0 0
    %2099 = vmatpush1.bf16.msra.mxu0 0
    %2100 = vmatprep.subr.bf16.mxu0 0
    %2101 = vmatpush1.bf16.msra.mxu0 0
    %2102 = vmatprep.subr.bf16.mxu0 0
    %2103 = vmatpush1.bf16.msra.mxu0 %v1981
    %2104 = vmatprep.subr.bf16.mxu0 0
    %2105 = vmatpush1.bf16.msra.mxu0 %v1980
    %2106 = vmatprep.subr.bf16.mxu0 0
    %2107 = vmatpush2.bf16.msra.mxu0 0
    %2108 = vmatprep.subr.bf16.mxu0 0
    %2109 = vmatpush2.bf16.msra.mxu0 0
    %2110 = vmatprep.subr.bf16.mxu0 0
    %2111 = vmatpush2.bf16.msra.mxu0 0
    %2112 = vmatprep.subr.bf16.mxu0 0
    %2113 = vmatpush2.bf16.msra.mxu0 0
    %2114 = vmatprep.subr.bf16.mxu0 0
    %2115 = vmatpush2.bf16.msra.mxu0 0
    %2116 = vmatprep.subr.bf16.mxu0 0
    %2117 = vmatpush2.bf16.msra.mxu0 0
    %2118 = vmatprep.subr.bf16.mxu0 0
    %2119 = vmatpush2.bf16.msra.mxu0 0
    %2120 = vmatprep.subr.bf16.mxu0 0
    %2121 = vmatpush2.bf16.msra.mxu0 0
    %2122 = vmatprep.mubr.bf16.mxu0 0
    %2123 = vmatmul.mubr.bf16.gmra.mxu0 %v579
    %v2124 = vpop.f32.mrf.mxu0
    %v2125 = vadd.f32 0.0, %v2124
    %v2126 = vpop.f32.mrf.mxu0
    %v2127 = vpop.f32.mrf.mxu0
    %v2128 = vadd.f32 0.0, %v2127
    %v2129 = vpop.f32.mrf.mxu0
    %2130 = vmatprep.mubr.bf16.mxu0 0
    %2131 = vmatmul.mubr.bf16.gmra.mxu0 %v582
    %v2132 = vpop.f32.mrf.mxu0
    %v2133 = vadd.f32 0.0, %v2132
    %v2134 = vpop.f32.mrf.mxu0
    %v2135 = vpop.f32.mrf.mxu0
    %v2136 = vadd.f32 0.0, %v2135
    %v2137 = vpop.f32.mrf.mxu0
    %2138 = vdwg.mxu0
    %2139 = vmatprep.subr.bf16.mxu0 0
    %2140 = vmatpush1.bf16.msra.mxu0 0
    %2141 = vmatprep.subr.bf16.mxu0 0
    %2142 = vmatpush1.bf16.msra.mxu0 0
    %2143 = vmatprep.subr.bf16.mxu0 0
    %2144 = vmatpush1.bf16.msra.mxu0 0
    %2145 = vmatprep.subr.bf16.mxu0 0
    %2146 = vmatpush1.bf16.msra.mxu0 0
    %2147 = vmatprep.subr.bf16.mxu0 0
    %2148 = vmatpush1.bf16.msra.mxu0 0
    %2149 = vmatprep.subr.bf16.mxu0 0
    %2150 = vmatpush1.bf16.msra.mxu0 0
    %2151 = vmatprep.subr.bf16.mxu0 0
    %2152 = vmatpush1.bf16.msra.mxu0 %v1983
    %2153 = vmatprep.subr.bf16.mxu0 0
    %2154 = vmatpush1.bf16.msra.mxu0 %v1982
    %2155 = vmatprep.subr.bf16.mxu0 0
    %2156 = vmatpush2.bf16.msra.mxu0 0
    %2157 = vmatprep.subr.bf16.mxu0 0
    %2158 = vmatpush2.bf16.msra.mxu0 0
    %2159 = vmatprep.subr.bf16.mxu0 0
    %2160 = vmatpush2.bf16.msra.mxu0 0
    %2161 = vmatprep.subr.bf16.mxu0 0
    %2162 = vmatpush2.bf16.msra.mxu0 0
    %2163 = vmatprep.subr.bf16.mxu0 0
    %2164 = vmatpush2.bf16.msra.mxu0 0
    %2165 = vmatprep.subr.bf16.mxu0 0
    %2166 = vmatpush2.bf16.msra.mxu0 0
    %2167 = vmatprep.subr.bf16.mxu0 0
    %2168 = vmatpush2.bf16.msra.mxu0 0
    %2169 = vmatprep.subr.bf16.mxu0 0
    %2170 = vmatpush2.bf16.msra.mxu0 0
    %2171 = vmatprep.mubr.bf16.mxu0 0
    %2172 = vmatmul.mubr.bf16.gmra.mxu0 %v644
    %v2173 = vpop.f32.mrf.mxu0
    %v2174 = vadd.f32 0.0, %v2173
    %v2175 = vpop.f32.mrf.mxu0
    %v2176 = vpop.f32.mrf.mxu0
    %v2177 = vadd.f32 0.0, %v2176
    %v2178 = vpop.f32.mrf.mxu0
    %2179 = vmatprep.mubr.bf16.mxu0 0
    %2180 = vmatmul.mubr.bf16.gmra.mxu0 %v647
    %v2181 = vpop.f32.mrf.mxu0
    %v2182 = vadd.f32 0.0, %v2181
    %v2183 = vpop.f32.mrf.mxu0
    %v2184 = vpop.f32.mrf.mxu0
    %v2185 = vadd.f32 0.0, %v2184
    %v2186 = vpop.f32.mrf.mxu0
    %2187 = vdwg.mxu0
    %2188 = vmatprep.subr.bf16.mxu0 0
    %2189 = vmatpush1.bf16.msra.mxu0 0
    %2190 = vmatprep.subr.bf16.mxu0 0
    %2191 = vmatpush1.bf16.msra.mxu0 0
    %2192 = vmatprep.subr.bf16.mxu0 0
    %2193 = vmatpush1.bf16.msra.mxu0 0
    %2194 = vmatprep.subr.bf16.mxu0 0
    %2195 = vmatpush1.bf16.msra.mxu0 0
    %2196 = vmatprep.subr.bf16.mxu0 0
    %2197 = vmatpush1.bf16.msra.mxu0 0
    %2198 = vmatprep.subr.bf16.mxu0 0
    %2199 = vmatpush1.bf16.msra.mxu0 0
    %2200 = vmatprep.subr.bf16.mxu0 0
    %2201 = vmatpush1.bf16.msra.mxu0 %v1985
    %2202 = vmatprep.subr.bf16.mxu0 0
    %2203 = vmatpush1.bf16.msra.mxu0 %v1984
    %2204 = vmatprep.subr.bf16.mxu0 0
    %2205 = vmatpush2.bf16.msra.mxu0 0
    %2206 = vmatprep.subr.bf16.mxu0 0
    %2207 = vmatpush2.bf16.msra.mxu0 0
    %2208 = vmatprep.subr.bf16.mxu0 0
    %2209 = vmatpush2.bf16.msra.mxu0 0
    %2210 = vmatprep.subr.bf16.mxu0 0
    %2211 = vmatpush2.bf16.msra.mxu0 0
    %2212 = vmatprep.subr.bf16.mxu0 0
    %2213 = vmatpush2.bf16.msra.mxu0 0
    %2214 = vmatprep.subr.bf16.mxu0 0
    %2215 = vmatpush2.bf16.msra.mxu0 0
    %2216 = vmatprep.subr.bf16.mxu0 0
    %2217 = vmatpush2.bf16.msra.mxu0 0
    %2218 = vmatprep.subr.bf16.mxu0 0
    %2219 = vmatpush2.bf16.msra.mxu0 0
    %2220 = vmatprep.mubr.bf16.mxu0 0
    %2221 = vmatmul.mubr.bf16.gmra.mxu0 %v709
    %v2222 = vpop.f32.mrf.mxu0
    %v2223 = vadd.f32 0.0, %v2222
    %v2224 = vpop.f32.mrf.mxu0
    %v2225 = vpop.f32.mrf.mxu0
    %v2226 = vadd.f32 0.0, %v2225
    %v2227 = vpop.f32.mrf.mxu0
    %2228 = vmatprep.mubr.bf16.mxu0 0
    %2229 = vmatmul.mubr.bf16.gmra.mxu0 %v712
    %v2230 = vpop.f32.mrf.mxu0
    %v2231 = vadd.f32 0.0, %v2230
    %v2232 = vpop.f32.mrf.mxu0
    %v2233 = vpop.f32.mrf.mxu0
    %v2234 = vadd.f32 0.0, %v2233
    %v2235 = vpop.f32.mrf.mxu0
    %2236 = vdwg.mxu0
    %2237 = vmatprep.subr.bf16.mxu0 0
    %2238 = vmatpush1.bf16.msra.mxu0 0
    %2239 = vmatprep.subr.bf16.mxu0 0
    %2240 = vmatpush1.bf16.msra.mxu0 0
    %2241 = vmatprep.subr.bf16.mxu0 0
    %2242 = vmatpush1.bf16.msra.mxu0 0
    %2243 = vmatprep.subr.bf16.mxu0 0
    %2244 = vmatpush1.bf16.msra.mxu0 0
    %2245 = vmatprep.subr.bf16.mxu0 0
    %2246 = vmatpush1.bf16.msra.mxu0 0
    %2247 = vmatprep.subr.bf16.mxu0 0
    %2248 = vmatpush1.bf16.msra.mxu0 0
    %2249 = vmatprep.subr.bf16.mxu0 0
    %2250 = vmatpush1.bf16.msra.mxu0 %v1987
    %2251 = vmatprep.subr.bf16.mxu0 0
    %2252 = vmatpush1.bf16.msra.mxu0 %v1986
    %2253 = vmatprep.subr.bf16.mxu0 0
    %2254 = vmatpush2.bf16.msra.mxu0 0
    %2255 = vmatprep.subr.bf16.mxu0 0
    %2256 = vmatpush2.bf16.msra.mxu0 0
    %2257 = vmatprep.subr.bf16.mxu0 0
    %2258 = vmatpush2.bf16.msra.mxu0 0
    %2259 = vmatprep.subr.bf16.mxu0 0
    %2260 = vmatpush2.bf16.msra.mxu0 0
    %2261 = vmatprep.subr.bf16.mxu0 0
    %2262 = vmatpush2.bf16.msra.mxu0 0
    %2263 = vmatprep.subr.bf16.mxu0 0
    %2264 = vmatpush2.bf16.msra.mxu0 0
    %2265 = vmatprep.subr.bf16.mxu0 0
    %2266 = vmatpush2.bf16.msra.mxu0 0
    %2267 = vmatprep.subr.bf16.mxu0 0
    %2268 = vmatpush2.bf16.msra.mxu0 0
    %2269 = vmatprep.mubr.bf16.mxu0 0
    %2270 = vmatmul.mubr.bf16.gmra.mxu0 %v774
    %v2271 = vpop.f32.mrf.mxu0
    %v2272 = vadd.f32 0.0, %v2271
    %v2273 = vpop.f32.mrf.mxu0
    %v2274 = vpop.f32.mrf.mxu0
    %v2275 = vadd.f32 0.0, %v2274
    %v2276 = vpop.f32.mrf.mxu0
    %2277 = vmatprep.mubr.bf16.mxu0 0
    %2278 = vmatmul.mubr.bf16.gmra.mxu0 %v777
    %v2279 = vpop.f32.mrf.mxu0
    %v2280 = vadd.f32 0.0, %v2279
    %v2281 = vpop.f32.mrf.mxu0
    %v2282 = vpop.f32.mrf.mxu0
    %v2283 = vadd.f32 0.0, %v2282
    %v2284 = vpop.f32.mrf.mxu0
    %2285 = vdwg.mxu0
    %2286 = vmatprep.subr.bf16.mxu0 0
    %2287 = vmatpush1.bf16.msra.mxu0 0
    %2288 = vmatprep.subr.bf16.mxu0 0
    %2289 = vmatpush1.bf16.msra.mxu0 0
    %2290 = vmatprep.subr.bf16.mxu0 0
    %2291 = vmatpush1.bf16.msra.mxu0 0
    %2292 = vmatprep.subr.bf16.mxu0 0
    %2293 = vmatpush1.bf16.msra.mxu0 0
    %2294 = vmatprep.subr.bf16.mxu0 0
    %2295 = vmatpush1.bf16.msra.mxu0 0
    %2296 = vmatprep.subr.bf16.mxu0 0
    %2297 = vmatpush1.bf16.msra.mxu0 0
    %2298 = vmatprep.subr.bf16.mxu0 0
    %2299 = vmatpush1.bf16.msra.mxu0 %v1989
    %2300 = vmatprep.subr.bf16.mxu0 0
    %2301 = vmatpush1.bf16.msra.mxu0 %v1988
    %2302 = vmatprep.subr.bf16.mxu0 0
    %2303 = vmatpush2.bf16.msra.mxu0 0
    %2304 = vmatprep.subr.bf16.mxu0 0
    %2305 = vmatpush2.bf16.msra.mxu0 0
    %2306 = vmatprep.subr.bf16.mxu0 0
    %2307 = vmatpush2.bf16.msra.mxu0 0
    %2308 = vmatprep.subr.bf16.mxu0 0
    %2309 = vmatpush2.bf16.msra.mxu0 0
    %2310 = vmatprep.subr.bf16.mxu0 0
    %2311 = vmatpush2.bf16.msra.mxu0 0
    %2312 = vmatprep.subr.bf16.mxu0 0
    %2313 = vmatpush2.bf16.msra.mxu0 0
    %2314 = vmatprep.subr.bf16.mxu0 0
    %2315 = vmatpush2.bf16.msra.mxu0 0
    %2316 = vmatprep.subr.bf16.mxu0 0
    %2317 = vmatpush2.bf16.msra.mxu0 0
    %2318 = vmatprep.mubr.bf16.mxu0 0
    %2319 = vmatmul.mubr.bf16.gmra.mxu0 %v839
    %v2320 = vpop.f32.mrf.mxu0
    %v2321 = vadd.f32 0.0, %v2320
    %v2322 = vpop.f32.mrf.mxu0
    %v2323 = vpop.f32.mrf.mxu0
    %v2324 = vadd.f32 0.0, %v2323
    %v2325 = vpop.f32.mrf.mxu0
    %2326 = vmatprep.mubr.bf16.mxu0 0
    %2327 = vmatmul.mubr.bf16.gmra.mxu0 %v842
    %v2328 = vpop.f32.mrf.mxu0
    %v2329 = vadd.f32 0.0, %v2328
    %v2330 = vpop.f32.mrf.mxu0
    %v2331 = vpop.f32.mrf.mxu0
    %v2332 = vadd.f32 0.0, %v2331
    %v2333 = vpop.f32.mrf.mxu0
    %2334 = vdwg.mxu0
    %2335 = vmatprep.subr.bf16.mxu0 0
    %2336 = vmatpush1.bf16.msra.mxu0 0
    %2337 = vmatprep.subr.bf16.mxu0 0
    %2338 = vmatpush1.bf16.msra.mxu0 0
    %2339 = vmatprep.subr.bf16.mxu0 0
    %2340 = vmatpush1.bf16.msra.mxu0 0
    %2341 = vmatprep.subr.bf16.mxu0 0
    %2342 = vmatpush1.bf16.msra.mxu0 0
    %2343 = vmatprep.subr.bf16.mxu0 0
    %2344 = vmatpush1.bf16.msra.mxu0 0
    %2345 = vmatprep.subr.bf16.mxu0 0
    %2346 = vmatpush1.bf16.msra.mxu0 0
    %2347 = vmatprep.subr.bf16.mxu0 0
    %2348 = vmatpush1.bf16.msra.mxu0 %v1991
    %2349 = vmatprep.subr.bf16.mxu0 0
    %2350 = vmatpush1.bf16.msra.mxu0 %v1990
    %2351 = vmatprep.subr.bf16.mxu0 0
    %2352 = vmatpush2.bf16.msra.mxu0 0
    %2353 = vmatprep.subr.bf16.mxu0 0
    %2354 = vmatpush2.bf16.msra.mxu0 0
    %2355 = vmatprep.subr.bf16.mxu0 0
    %2356 = vmatpush2.bf16.msra.mxu0 0
    %2357 = vmatprep.subr.bf16.mxu0 0
    %2358 = vmatpush2.bf16.msra.mxu0 0
    %2359 = vmatprep.subr.bf16.mxu0 0
    %2360 = vmatpush2.bf16.msra.mxu0 0
    %2361 = vmatprep.subr.bf16.mxu0 0
    %2362 = vmatpush2.bf16.msra.mxu0 0
    %2363 = vmatprep.subr.bf16.mxu0 0
    %2364 = vmatpush2.bf16.msra.mxu0 0
    %2365 = vmatprep.subr.bf16.mxu0 0
    %2366 = vmatpush2.bf16.msra.mxu0 0
    %2367 = vmatprep.mubr.bf16.mxu0 0
    %2368 = vmatmul.mubr.bf16.gmra.mxu0 %v904
    %v2369 = vpop.f32.mrf.mxu0
    %v2370 = vadd.f32 0.0, %v2369
    %v2371 = vpop.f32.mrf.mxu0
    %v2372 = vpop.f32.mrf.mxu0
    %v2373 = vadd.f32 0.0, %v2372
    %v2374 = vpop.f32.mrf.mxu0
    %2375 = vmatprep.mubr.bf16.mxu0 0
    %2376 = vmatmul.mubr.bf16.gmra.mxu0 %v907
    %v2377 = vpop.f32.mrf.mxu0
    %v2378 = vadd.f32 0.0, %v2377
    %v2379 = vpop.f32.mrf.mxu0
    %v2380 = vpop.f32.mrf.mxu0
    %v2381 = vadd.f32 0.0, %v2380
    %v2382 = vpop.f32.mrf.mxu0
    %2383 = vdwg.mxu0
    %v2384 = vld [vmem:[%s9] sm:$0xf]
    %v2385 = vld [vmem:[%s9 + $0x4] sm:$0xf]
    %v2386 = vld [vmem:[%s9 + $0x8] sm:$0xf]
    %v2387 = vld [vmem:[%s9 + $0xc] sm:$0xf]
    %v2388 = vld [vmem:[%s9 + $0x10] sm:$0xf]
    %v2389 = vld [vmem:[%s9 + $0x14] sm:$0xf]
    %v2390 = vld [vmem:[%s9 + $0x18] sm:$0xf]
    %v2391 = vld [vmem:[%s9 + $0x1c] sm:$0xf]
    %v2392 = vld [vmem:[%s9 + $0x20] sm:$0xf]
    %v2393 = vld [vmem:[%s9 + $0x24] sm:$0xf]
    %v2394 = vld [vmem:[%s9 + $0x28] sm:$0xf]
    %v2395 = vld [vmem:[%s9 + $0x2c] sm:$0xf]
    %v2396 = vld [vmem:[%s9 + $0x30] sm:$0xf]
    %v2397 = vld [vmem:[%s9 + $0x34] sm:$0xf]
    %v2398 = vld [vmem:[%s9 + $0x38] sm:$0xf]
    %v2399 = vld [vmem:[%s9 + $0x3c] sm:$0xf]
    %v2400 = vpack.c.bf16 %v2030, %v2027
    %v2401 = vpack.c.bf16 %v2038, %v2035
    %v2402 = vpack.c.bf16 %v2079, %v2076
    %v2403 = vpack.c.bf16 %v2087, %v2084
    %v2404 = vpack.c.bf16 %v2128, %v2125
    %v2405 = vpack.c.bf16 %v2136, %v2133
    %v2406 = vpack.c.bf16 %v2177, %v2174
    %v2407 = vpack.c.bf16 %v2185, %v2182
    %v2408 = vpack.c.bf16 %v2226, %v2223
    %v2409 = vpack.c.bf16 %v2234, %v2231
    %v2410 = vpack.c.bf16 %v2275, %v2272
    %v2411 = vpack.c.bf16 %v2283, %v2280
    %v2412 = vpack.c.bf16 %v2324, %v2321
    %v2413 = vpack.c.bf16 %v2332, %v2329
    %v2414 = vpack.c.bf16 %v2373, %v2370
    %v2415 = vpack.c.bf16 %v2381, %v2378
    %v2416 = vld [vmem:[%s10] sm:$0xf]
    %v2417 = vld [vmem:[%s10 + $0x4] sm:$0xf]
    %v2418 = vld [vmem:[%s10 + $0x8] sm:$0xf]
    %v2419 = vld [vmem:[%s10 + $0xc] sm:$0xf]
    %v2420 = vld [vmem:[%s10 + $0x10] sm:$0xf]
    %v2421 = vld [vmem:[%s10 + $0x14] sm:$0xf]
    %v2422 = vld [vmem:[%s10 + $0x18] sm:$0xf]
    %v2423 = vld [vmem:[%s10 + $0x1c] sm:$0xf]
    %v2424 = vld [vmem:[%s10 + $0x20] sm:$0xf]
    %v2425 = vld [vmem:[%s10 + $0x24] sm:$0xf]
    %v2426 = vld [vmem:[%s10 + $0x28] sm:$0xf]
    %v2427 = vld [vmem:[%s10 + $0x2c] sm:$0xf]
    %v2428 = vld [vmem:[%s10 + $0x30] sm:$0xf]
    %v2429 = vld [vmem:[%s10 + $0x34] sm:$0xf]
    %v2430 = vld [vmem:[%s10 + $0x38] sm:$0xf]
    %v2431 = vld [vmem:[%s10 + $0x3c] sm:$0xf]
    %v2448 = vunpack.c.l.b16 %v2416
    %v2449 = vunpack.c.l.b16 %v2417
    %v2450 = vunpack.c.l.b16 %v2418
    %v2451 = vunpack.c.l.b16 %v2419
    %v2452 = vunpack.c.l.b16 %v2420
    %v2453 = vunpack.c.l.b16 %v2421
    %v2454 = vunpack.c.l.b16 %v2422
    %v2455 = vunpack.c.l.b16 %v2423
    %v2456 = vunpack.c.l.b16 %v2424
    %v2457 = vunpack.c.l.b16 %v2425
    %v2458 = vunpack.c.l.b16 %v2426
    %v2459 = vunpack.c.l.b16 %v2427
    %v2460 = vunpack.c.l.b16 %v2428
    %v2461 = vunpack.c.l.b16 %v2429
    %v2462 = vunpack.c.l.b16 %v2430
    %v2463 = vunpack.c.l.b16 %v2431
    %v2464 = vpack.c.b16 %v2449, %v2448
    %v2465 = vpack.c.b16 %v2451, %v2450
    %v2466 = vpack.c.b16 %v2453, %v2452
    %v2467 = vpack.c.b16 %v2455, %v2454
    %v2468 = vpack.c.b16 %v2457, %v2456
    %v2469 = vpack.c.b16 %v2459, %v2458
    %v2470 = vpack.c.b16 %v2461, %v2460
    %v2471 = vpack.c.b16 %v2463, %v2462
    %2480 = vmatprep.subr.bf16.mxu0 0
    %2481 = vmatpush1.bf16.msra.mxu0 %v2471
    %2482 = vmatprep.subr.bf16.mxu0 0
    %2483 = vmatpush1.bf16.msra.mxu0 %v2470
    %2484 = vmatprep.subr.bf16.mxu0 0
    %2485 = vmatpush1.bf16.msra.mxu0 %v2469
    %2486 = vmatprep.subr.bf16.mxu0 0
    %2487 = vmatpush1.bf16.msra.mxu0 %v2468
    %2488 = vmatprep.subr.bf16.mxu0 0
    %2489 = vmatpush1.bf16.msra.mxu0 %v2467
    %2490 = vmatprep.subr.bf16.mxu0 0
    %2491 = vmatpush1.bf16.msra.mxu0 %v2466
    %2492 = vmatprep.subr.bf16.mxu0 0
    %2493 = vmatpush1.bf16.msra.mxu0 %v2465
    %2494 = vmatprep.subr.bf16.mxu0 0
    %2495 = vmatpush1.bf16.msra.mxu0 %v2464
    %2496 = vmatprep.subr.bf16.mxu0 0
    %2497 = vmatpush2.bf16.msra.mxu0 0
    %2498 = vmatprep.subr.bf16.mxu0 0
    %2499 = vmatpush2.bf16.msra.mxu0 0
    %2500 = vmatprep.subr.bf16.mxu0 0
    %2501 = vmatpush2.bf16.msra.mxu0 0
    %2502 = vmatprep.subr.bf16.mxu0 0
    %2503 = vmatpush2.bf16.msra.mxu0 0
    %2504 = vmatprep.subr.bf16.mxu0 0
    %2505 = vmatpush2.bf16.msra.mxu0 0
    %2506 = vmatprep.subr.bf16.mxu0 0
    %2507 = vmatpush2.bf16.msra.mxu0 0
    %2508 = vmatprep.subr.bf16.mxu0 0
    %2509 = vmatpush2.bf16.msra.mxu0 0
    %2510 = vmatprep.subr.bf16.mxu0 0
    %2511 = vmatpush2.bf16.msra.mxu0 0
    %2512 = vmatprep.mubr.bf16.mxu0 0
    %2513 = vmatmul.mubr.bf16.gmra.mxu0 %v2400
    %v2514 = vpop.f32.mrf.mxu0
    %v2515 = vadd.f32 0.0, %v2514
    %v2516 = vpop.f32.mrf.mxu0
    %v2517 = vpop.f32.mrf.mxu0
    %v2518 = vadd.f32 0.0, %v2517
    %v2519 = vpop.f32.mrf.mxu0
    %2520 = vmatprep.mubr.bf16.mxu0 0
    %2521 = vmatmul.mubr.bf16.gmra.mxu0 %v2401
    %v2522 = vpop.f32.mrf.mxu0
    %v2523 = vadd.f32 0.0, %v2522
    %v2524 = vpop.f32.mrf.mxu0
    %v2525 = vpop.f32.mrf.mxu0
    %v2526 = vadd.f32 0.0, %v2525
    %v2527 = vpop.f32.mrf.mxu0
    %2528 = vmatprep.mubr.bf16.mxu0 0
    %2529 = vmatmul.mubr.bf16.gmra.mxu0 %v2402
    %v2530 = vpop.f32.mrf.mxu0
    %v2531 = vadd.f32 0.0, %v2530
    %v2532 = vpop.f32.mrf.mxu0
    %v2533 = vpop.f32.mrf.mxu0
    %v2534 = vadd.f32 0.0, %v2533
    %v2535 = vpop.f32.mrf.mxu0
    %2536 = vmatprep.mubr.bf16.mxu0 0
    %2537 = vmatmul.mubr.bf16.gmra.mxu0 %v2403
    %v2538 = vpop.f32.mrf.mxu0
    %v2539 = vadd.f32 0.0, %v2538
    %v2540 = vpop.f32.mrf.mxu0
    %v2541 = vpop.f32.mrf.mxu0
    %v2542 = vadd.f32 0.0, %v2541
    %v2543 = vpop.f32.mrf.mxu0
    %2544 = vmatprep.mubr.bf16.mxu0 0
    %2545 = vmatmul.mubr.bf16.gmra.mxu0 %v2404
    %v2546 = vpop.f32.mrf.mxu0
    %v2547 = vadd.f32 0.0, %v2546
    %v2548 = vpop.f32.mrf.mxu0
    %v2549 = vpop.f32.mrf.mxu0
    %v2550 = vadd.f32 0.0, %v2549
    %v2551 = vpop.f32.mrf.mxu0
    %2552 = vmatprep.mubr.bf16.mxu0 0
    %2553 = vmatmul.mubr.bf16.gmra.mxu0 %v2405
    %v2554 = vpop.f32.mrf.mxu0
    %v2555 = vadd.f32 0.0, %v2554
    %v2556 = vpop.f32.mrf.mxu0
    %v2557 = vpop.f32.mrf.mxu0
    %v2558 = vadd.f32 0.0, %v2557
    %v2559 = vpop.f32.mrf.mxu0
    %2560 = vmatprep.mubr.bf16.mxu0 0
    %2561 = vmatmul.mubr.bf16.gmra.mxu0 %v2406
    %v2562 = vpop.f32.mrf.mxu0
    %v2563 = vadd.f32 0.0, %v2562
    %v2564 = vpop.f32.mrf.mxu0
    %v2565 = vpop.f32.mrf.mxu0
    %v2566 = vadd.f32 0.0, %v2565
    %v2567 = vpop.f32.mrf.mxu0
    %2568 = vmatprep.mubr.bf16.mxu0 0
    %2569 = vmatmul.mubr.bf16.gmra.mxu0 %v2407
    %v2570 = vpop.f32.mrf.mxu0
    %v2571 = vadd.f32 0.0, %v2570
    %v2572 = vpop.f32.mrf.mxu0
    %v2573 = vpop.f32.mrf.mxu0
    %v2574 = vadd.f32 0.0, %v2573
    %v2575 = vpop.f32.mrf.mxu0
    %2576 = vmatprep.mubr.bf16.mxu0 0
    %2577 = vmatmul.mubr.bf16.gmra.mxu0 %v2408
    %v2578 = vpop.f32.mrf.mxu0
    %v2579 = vadd.f32 0.0, %v2578
    %v2580 = vpop.f32.mrf.mxu0
    %v2581 = vpop.f32.mrf.mxu0
    %v2582 = vadd.f32 0.0, %v2581
    %v2583 = vpop.f32.mrf.mxu0
    %2584 = vmatprep.mubr.bf16.mxu0 0
    %2585 = vmatmul.mubr.bf16.gmra.mxu0 %v2409
    %v2586 = vpop.f32.mrf.mxu0
    %v2587 = vadd.f32 0.0, %v2586
    %v2588 = vpop.f32.mrf.mxu0
    %v2589 = vpop.f32.mrf.mxu0
    %v2590 = vadd.f32 0.0, %v2589
    %v2591 = vpop.f32.mrf.mxu0
    %2592 = vmatprep.mubr.bf16.mxu0 0
    %2593 = vmatmul.mubr.bf16.gmra.mxu0 %v2410
    %v2594 = vpop.f32.mrf.mxu0
    %v2595 = vadd.f32 0.0, %v2594
    %v2596 = vpop.f32.mrf.mxu0
    %v2597 = vpop.f32.mrf.mxu0
    %v2598 = vadd.f32 0.0, %v2597
    %v2599 = vpop.f32.mrf.mxu0
    %2600 = vmatprep.mubr.bf16.mxu0 0
    %2601 = vmatmul.mubr.bf16.gmra.mxu0 %v2411
    %v2602 = vpop.f32.mrf.mxu0
    %v2603 = vadd.f32 0.0, %v2602
    %v2604 = vpop.f32.mrf.mxu0
    %v2605 = vpop.f32.mrf.mxu0
    %v2606 = vadd.f32 0.0, %v2605
    %v2607 = vpop.f32.mrf.mxu0
    %2608 = vmatprep.mubr.bf16.mxu0 0
    %2609 = vmatmul.mubr.bf16.gmra.mxu0 %v2412
    %v2610 = vpop.f32.mrf.mxu0
    %v2611 = vadd.f32 0.0, %v2610
    %v2612 = vpop.f32.mrf.mxu0
    %v2613 = vpop.f32.mrf.mxu0
    %v2614 = vadd.f32 0.0, %v2613
    %v2615 = vpop.f32.mrf.mxu0
    %2616 = vmatprep.mubr.bf16.mxu0 0
    %2617 = vmatmul.mubr.bf16.gmra.mxu0 %v2413
    %v2618 = vpop.f32.mrf.mxu0
    %v2619 = vadd.f32 0.0, %v2618
    %v2620 = vpop.f32.mrf.mxu0
    %v2621 = vpop.f32.mrf.mxu0
    %v2622 = vadd.f32 0.0, %v2621
    %v2623 = vpop.f32.mrf.mxu0
    %2624 = vmatprep.mubr.bf16.mxu0 0
    %2625 = vmatmul.mubr.bf16.gmra.mxu0 %v2414
    %v2626 = vpop.f32.mrf.mxu0
    %v2627 = vadd.f32 0.0, %v2626
    %v2628 = vpop.f32.mrf.mxu0
    %v2629 = vpop.f32.mrf.mxu0
    %v2630 = vadd.f32 0.0, %v2629
    %v2631 = vpop.f32.mrf.mxu0
    %2632 = vmatprep.mubr.bf16.mxu0 0
    %2633 = vmatmul.mubr.bf16.gmra.mxu0 %v2415
    %v2634 = vpop.f32.mrf.mxu0
    %v2635 = vadd.f32 0.0, %v2634
    %v2636 = vpop.f32.mrf.mxu0
    %v2637 = vpop.f32.mrf.mxu0
    %v2638 = vadd.f32 0.0, %v2637
    %v2639 = vpop.f32.mrf.mxu0
    %2640 = vdwg.mxu0
    %v2657 = vunpack.c.l.b16 %v2384
    %v2658 = vunpack.c.l.b16 %v2385
    %v2659 = vunpack.c.l.b16 %v2386
    %v2660 = vunpack.c.l.b16 %v2387
    %v2661 = vunpack.c.l.b16 %v2388
    %v2662 = vunpack.c.l.b16 %v2389
    %v2663 = vunpack.c.l.b16 %v2390
    %v2664 = vunpack.c.l.b16 %v2391
    %v2665 = vunpack.c.l.b16 %v2392
    %v2666 = vunpack.c.l.b16 %v2393
    %v2667 = vunpack.c.l.b16 %v2394
    %v2668 = vunpack.c.l.b16 %v2395
    %v2669 = vunpack.c.l.b16 %v2396
    %v2670 = vunpack.c.l.b16 %v2397
    %v2671 = vunpack.c.l.b16 %v2398
    %v2672 = vunpack.c.l.b16 %v2399
    %v2673 = vpack.c.b16 %v2658, %v2657
    %v2674 = vpack.c.b16 %v2660, %v2659
    %v2675 = vpack.c.b16 %v2662, %v2661
    %v2676 = vpack.c.b16 %v2664, %v2663
    %v2677 = vpack.c.b16 %v2666, %v2665
    %v2678 = vpack.c.b16 %v2668, %v2667
    %v2679 = vpack.c.b16 %v2670, %v2669
    %v2680 = vpack.c.b16 %v2672, %v2671
    %2689 = vmatprep.subr.bf16.mxu0 0
    %2690 = vmatpush1.bf16.msra.mxu0 %v2680
    %2691 = vmatprep.subr.bf16.mxu0 0
    %2692 = vmatpush1.bf16.msra.mxu0 %v2679
    %2693 = vmatprep.subr.bf16.mxu0 0
    %2694 = vmatpush1.bf16.msra.mxu0 %v2678
    %2695 = vmatprep.subr.bf16.mxu0 0
    %2696 = vmatpush1.bf16.msra.mxu0 %v2677
    %2697 = vmatprep.subr.bf16.mxu0 0
    %2698 = vmatpush1.bf16.msra.mxu0 %v2676
    %2699 = vmatprep.subr.bf16.mxu0 0
    %2700 = vmatpush1.bf16.msra.mxu0 %v2675
    %2701 = vmatprep.subr.bf16.mxu0 0
    %2702 = vmatpush1.bf16.msra.mxu0 %v2674
    %2703 = vmatprep.subr.bf16.mxu0 0
    %2704 = vmatpush1.bf16.msra.mxu0 %v2673
    %2705 = vmatprep.subr.bf16.mxu0 0
    %2706 = vmatpush2.bf16.msra.mxu0 0
    %2707 = vmatprep.subr.bf16.mxu0 0
    %2708 = vmatpush2.bf16.msra.mxu0 0
    %2709 = vmatprep.subr.bf16.mxu0 0
    %2710 = vmatpush2.bf16.msra.mxu0 0
    %2711 = vmatprep.subr.bf16.mxu0 0
    %2712 = vmatpush2.bf16.msra.mxu0 0
    %2713 = vmatprep.subr.bf16.mxu0 0
    %2714 = vmatpush2.bf16.msra.mxu0 0
    %2715 = vmatprep.subr.bf16.mxu0 0
    %2716 = vmatpush2.bf16.msra.mxu0 0
    %2717 = vmatprep.subr.bf16.mxu0 0
    %2718 = vmatpush2.bf16.msra.mxu0 0
    %2719 = vmatprep.subr.bf16.mxu0 0
    %2720 = vmatpush2.bf16.msra.mxu0 0
    %2721 = vmatprep.mubr.bf16.mxu0 0
    %2722 = vmatmul.mubr.bf16.gmra.mxu0 %v1976
    %v2723 = vpop.f32.mrf.mxu0
    %v2724 = vadd.f32 %v2515, %v2723
    %v2725 = vpop.f32.mrf.mxu0
    %v2726 = vpop.f32.mrf.mxu0
    %v2727 = vadd.f32 %v2518, %v2726
    %v2728 = vpop.f32.mrf.mxu0
    %2729 = vmatprep.mubr.bf16.mxu0 0
    %2730 = vmatmul.mubr.bf16.gmra.mxu0 %v1977
    %v2731 = vpop.f32.mrf.mxu0
    %v2732 = vadd.f32 %v2523, %v2731
    %v2733 = vpop.f32.mrf.mxu0
    %v2734 = vpop.f32.mrf.mxu0
    %v2735 = vadd.f32 %v2526, %v2734
    %v2736 = vpop.f32.mrf.mxu0
    %2737 = vmatprep.mubr.bf16.mxu0 0
    %2738 = vmatmul.mubr.bf16.gmra.mxu0 %v1978
    %v2739 = vpop.f32.mrf.mxu0
    %v2740 = vadd.f32 %v2531, %v2739
    %v2741 = vpop.f32.mrf.mxu0
    %v2742 = vpop.f32.mrf.mxu0
    %v2743 = vadd.f32 %v2534, %v2742
    %v2744 = vpop.f32.mrf.mxu0
    %2745 = vmatprep.mubr.bf16.mxu0 0
    %2746 = vmatmul.mubr.bf16.gmra.mxu0 %v1979
    %v2747 = vpop.f32.mrf.mxu0
    %v2748 = vadd.f32 %v2539, %v2747
    %v2749 = vpop.f32.mrf.mxu0
    %v2750 = vpop.f32.mrf.mxu0
    %v2751 = vadd.f32 %v2542, %v2750
    %v2752 = vpop.f32.mrf.mxu0
    %2753 = vmatprep.mubr.bf16.mxu0 0
    %2754 = vmatmul.mubr.bf16.gmra.mxu0 %v1980
    %v2755 = vpop.f32.mrf.mxu0
    %v2756 = vadd.f32 %v2547, %v2755
    %v2757 = vpop.f32.mrf.mxu0
    %v2758 = vpop.f32.mrf.mxu0
    %v2759 = vadd.f32 %v2550, %v2758
    %v2760 = vpop.f32.mrf.mxu0
    %2761 = vmatprep.mubr.bf16.mxu0 0
    %2762 = vmatmul.mubr.bf16.gmra.mxu0 %v1981
    %v2763 = vpop.f32.mrf.mxu0
    %v2764 = vadd.f32 %v2555, %v2763
    %v2765 = vpop.f32.mrf.mxu0
    %v2766 = vpop.f32.mrf.mxu0
    %v2767 = vadd.f32 %v2558, %v2766
    %v2768 = vpop.f32.mrf.mxu0
    %2769 = vmatprep.mubr.bf16.mxu0 0
    %2770 = vmatmul.mubr.bf16.gmra.mxu0 %v1982
    %v2771 = vpop.f32.mrf.mxu0
    %v2772 = vadd.f32 %v2563, %v2771
    %v2773 = vpop.f32.mrf.mxu0
    %v2774 = vpop.f32.mrf.mxu0
    %v2775 = vadd.f32 %v2566, %v2774
    %v2776 = vpop.f32.mrf.mxu0
    %2777 = vmatprep.mubr.bf16.mxu0 0
    %2778 = vmatmul.mubr.bf16.gmra.mxu0 %v1983
    %v2779 = vpop.f32.mrf.mxu0
    %v2780 = vadd.f32 %v2571, %v2779
    %v2781 = vpop.f32.mrf.mxu0
    %v2782 = vpop.f32.mrf.mxu0
    %v2783 = vadd.f32 %v2574, %v2782
    %v2784 = vpop.f32.mrf.mxu0
    %2785 = vmatprep.mubr.bf16.mxu0 0
    %2786 = vmatmul.mubr.bf16.gmra.mxu0 %v1984
    %v2787 = vpop.f32.mrf.mxu0
    %v2788 = vadd.f32 %v2579, %v2787
    %v2789 = vpop.f32.mrf.mxu0
    %v2790 = vpop.f32.mrf.mxu0
    %v2791 = vadd.f32 %v2582, %v2790
    %v2792 = vpop.f32.mrf.mxu0
    %2793 = vmatprep.mubr.bf16.mxu0 0
    %2794 = vmatmul.mubr.bf16.gmra.mxu0 %v1985
    %v2795 = vpop.f32.mrf.mxu0
    %v2796 = vadd.f32 %v2587, %v2795
    %v2797 = vpop.f32.mrf.mxu0
    %v2798 = vpop.f32.mrf.mxu0
    %v2799 = vadd.f32 %v2590, %v2798
    %v2800 = vpop.f32.mrf.mxu0
    %2801 = vmatprep.mubr.bf16.mxu0 0
    %2802 = vmatmul.mubr.bf16.gmra.mxu0 %v1986
    %v2803 = vpop.f32.mrf.mxu0
    %v2804 = vadd.f32 %v2595, %v2803
    %v2805 = vpop.f32.mrf.mxu0
    %v2806 = vpop.f32.mrf.mxu0
    %v2807 = vadd.f32 %v2598, %v2806
    %v2808 = vpop.f32.mrf.mxu0
    %2809 = vmatprep.mubr.bf16.mxu0 0
    %2810 = vmatmul.mubr.bf16.gmra.mxu0 %v1987
    %v2811 = vpop.f32.mrf.mxu0
    %v2812 = vadd.f32 %v2603, %v2811
    %v2813 = vpop.f32.mrf.mxu0
    %v2814 = vpop.f32.mrf.mxu0
    %v2815 = vadd.f32 %v2606, %v2814
    %v2816 = vpop.f32.mrf.mxu0
    %2817 = vmatprep.mubr.bf16.mxu0 0
    %2818 = vmatmul.mubr.bf16.gmra.mxu0 %v1988
    %v2819 = vpop.f32.mrf.mxu0
    %v2820 = vadd.f32 %v2611, %v2819
    %v2821 = vpop.f32.mrf.mxu0
    %v2822 = vpop.f32.mrf.mxu0
    %v2823 = vadd.f32 %v2614, %v2822
    %v2824 = vpop.f32.mrf.mxu0
    %2825 = vmatprep.mubr.bf16.mxu0 0
    %2826 = vmatmul.mubr.bf16.gmra.mxu0 %v1989
    %v2827 = vpop.f32.mrf.mxu0
    %v2828 = vadd.f32 %v2619, %v2827
    %v2829 = vpop.f32.mrf.mxu0
    %v2830 = vpop.f32.mrf.mxu0
    %v2831 = vadd.f32 %v2622, %v2830
    %v2832 = vpop.f32.mrf.mxu0
    %2833 = vmatprep.mubr.bf16.mxu0 0
    %2834 = vmatmul.mubr.bf16.gmra.mxu0 %v1990
    %v2835 = vpop.f32.mrf.mxu0
    %v2836 = vadd.f32 %v2627, %v2835
    %v2837 = vpop.f32.mrf.mxu0
    %v2838 = vpop.f32.mrf.mxu0
    %v2839 = vadd.f32 %v2630, %v2838
    %v2840 = vpop.f32.mrf.mxu0
    %2841 = vmatprep.mubr.bf16.mxu0 0
    %2842 = vmatmul.mubr.bf16.gmra.mxu0 %v1991
    %v2843 = vpop.f32.mrf.mxu0
    %v2844 = vadd.f32 %v2635, %v2843
    %v2845 = vpop.f32.mrf.mxu0
    %v2846 = vpop.f32.mrf.mxu0
    %v2847 = vadd.f32 %v2638, %v2846
    %v2848 = vpop.f32.mrf.mxu0
    %2849 = vdwg.mxu0
    %v2850 = vld [vmem:[%s11] sm:$0x1]
    %v2852 = vlaneseq
    %v2853 = vshrl.u32 %v2852, 7
    %v2854 = vsub.s32 0, %v2853
    %v2855 = vrot.slane %v2850, %v2854
    %v2857 = vadd.f32 %v2724, %v2855
    %v2858 = vadd.f32 %v2727, %v2855
    %v2859 = vadd.f32 %v2732, %v2855
    %v2860 = vadd.f32 %v2735, %v2855
    %v2861 = vadd.f32 %v2740, %v2855
    %v2862 = vadd.f32 %v2743, %v2855
    %v2863 = vadd.f32 %v2748, %v2855
    %v2864 = vadd.f32 %v2751, %v2855
    %v2865 = vadd.f32 %v2756, %v2855
    %v2866 = vadd.f32 %v2759, %v2855
    %v2867 = vadd.f32 %v2764, %v2855
    %v2868 = vadd.f32 %v2767, %v2855
    %v2869 = vadd.f32 %v2772, %v2855
    %v2870 = vadd.f32 %v2775, %v2855
    %v2871 = vadd.f32 %v2780, %v2855
    %v2872 = vadd.f32 %v2783, %v2855
    %v2873 = vadd.f32 %v2788, %v2855
    %v2874 = vadd.f32 %v2791, %v2855
    %v2875 = vadd.f32 %v2796, %v2855
    %v2876 = vadd.f32 %v2799, %v2855
    %v2877 = vadd.f32 %v2804, %v2855
    %v2878 = vadd.f32 %v2807, %v2855
    %v2879 = vadd.f32 %v2812, %v2855
    %v2880 = vadd.f32 %v2815, %v2855
    %v2881 = vadd.f32 %v2820, %v2855
    %v2882 = vadd.f32 %v2823, %v2855
    %v2883 = vadd.f32 %v2828, %v2855
    %v2884 = vadd.f32 %v2831, %v2855
    %v2885 = vadd.f32 %v2836, %v2855
    %v2886 = vadd.f32 %v2839, %v2855
    %v2887 = vadd.f32 %v2844, %v2855
    %v2888 = vadd.f32 %v2847, %v2855
    %v2889 = vmul.f32 %v2857, %v2857
    %v2890 = vmul.f32 %v2858, %v2858
    %v2891 = vmul.f32 %v2859, %v2859
    %v2892 = vmul.f32 %v2860, %v2860
    %v2893 = vmul.f32 %v2861, %v2861
    %v2894 = vmul.f32 %v2862, %v2862
    %v2895 = vmul.f32 %v2863, %v2863
    %v2896 = vmul.f32 %v2864, %v2864
    %v2897 = vmul.f32 %v2865, %v2865
    %v2898 = vmul.f32 %v2866, %v2866
    %v2899 = vmul.f32 %v2867, %v2867
    %v2900 = vmul.f32 %v2868, %v2868
    %v2901 = vmul.f32 %v2869, %v2869
    %v2902 = vmul.f32 %v2870, %v2870
    %v2903 = vmul.f32 %v2871, %v2871
    %v2904 = vmul.f32 %v2872, %v2872
    %v2905 = vmul.f32 %v2873, %v2873
    %v2906 = vmul.f32 %v2874, %v2874
    %v2907 = vmul.f32 %v2875, %v2875
    %v2908 = vmul.f32 %v2876, %v2876
    %v2909 = vmul.f32 %v2877, %v2877
    %v2910 = vmul.f32 %v2878, %v2878
    %v2911 = vmul.f32 %v2879, %v2879
    %v2912 = vmul.f32 %v2880, %v2880
    %v2913 = vmul.f32 %v2881, %v2881
    %v2914 = vmul.f32 %v2882, %v2882
    %v2915 = vmul.f32 %v2883, %v2883
    %v2916 = vmul.f32 %v2884, %v2884
    %v2917 = vmul.f32 %v2885, %v2885
    %v2918 = vmul.f32 %v2886, %v2886
    %v2919 = vmul.f32 %v2887, %v2887
    %v2920 = vmul.f32 %v2888, %v2888
    %2921 = vadd.xlane.f32.xlu0 %v2889
    %v2922 = vpop.xlane.xlu0 %2921
    %2923 = vadd.xlane.f32.xlu0 %v2890
    %v2924 = vpop.xlane.xlu0 %2923
    %2925 = vadd.xlane.f32.xlu0 %v2891
    %v2926 = vpop.xlane.xlu0 %2925
    %2927 = vadd.xlane.f32.xlu0 %v2892
    %v2928 = vpop.xlane.xlu0 %2927
    %2929 = vadd.xlane.f32.xlu0 %v2893
    %v2930 = vpop.xlane.xlu0 %2929
    %2931 = vadd.xlane.f32.xlu0 %v2894
    %v2932 = vpop.xlane.xlu0 %2931
    %2933 = vadd.xlane.f32.xlu0 %v2895
    %v2934 = vpop.xlane.xlu0 %2933
    %2935 = vadd.xlane.f32.xlu0 %v2896
    %v2936 = vpop.xlane.xlu0 %2935
    %2937 = vadd.xlane.f32.xlu0 %v2897
    %v2938 = vpop.xlane.xlu0 %2937
    %2939 = vadd.xlane.f32.xlu0 %v2898
    %v2940 = vpop.xlane.xlu0 %2939
    %2941 = vadd.xlane.f32.xlu0 %v2899
    %v2942 = vpop.xlane.xlu0 %2941
    %2943 = vadd.xlane.f32.xlu0 %v2900
    %v2944 = vpop.xlane.xlu0 %2943
    %2945 = vadd.xlane.f32.xlu0 %v2901
    %v2946 = vpop.xlane.xlu0 %2945
    %2947 = vadd.xlane.f32.xlu0 %v2902
    %v2948 = vpop.xlane.xlu0 %2947
    %2949 = vadd.xlane.f32.xlu0 %v2903
    %v2950 = vpop.xlane.xlu0 %2949
    %2951 = vadd.xlane.f32.xlu0 %v2904
    %v2952 = vpop.xlane.xlu0 %2951
    %2953 = vadd.xlane.f32.xlu0 %v2905
    %v2954 = vpop.xlane.xlu0 %2953
    %2955 = vadd.xlane.f32.xlu0 %v2906
    %v2956 = vpop.xlane.xlu0 %2955
    %2957 = vadd.xlane.f32.xlu0 %v2907
    %v2958 = vpop.xlane.xlu0 %2957
    %2959 = vadd.xlane.f32.xlu0 %v2908
    %v2960 = vpop.xlane.xlu0 %2959
    %2961 = vadd.xlane.f32.xlu0 %v2909
    %v2962 = vpop.xlane.xlu0 %2961
    %2963 = vadd.xlane.f32.xlu0 %v2910
    %v2964 = vpop.xlane.xlu0 %2963
    %2965 = vadd.xlane.f32.xlu0 %v2911
    %v2966 = vpop.xlane.xlu0 %2965
    %2967 = vadd.xlane.f32.xlu0 %v2912
    %v2968 = vpop.xlane.xlu0 %2967
    %2969 = vadd.xlane.f32.xlu0 %v2913
    %v2970 = vpop.xlane.xlu0 %2969
    %2971 = vadd.xlane.f32.xlu0 %v2914
    %v2972 = vpop.xlane.xlu0 %2971
    %2973 = vadd.xlane.f32.xlu0 %v2915
    %v2974 = vpop.xlane.xlu0 %2973
    %2975 = vadd.xlane.f32.xlu0 %v2916
    %v2976 = vpop.xlane.xlu0 %2975
    %2977 = vadd.xlane.f32.xlu0 %v2917
    %v2978 = vpop.xlane.xlu0 %2977
    %2979 = vadd.xlane.f32.xlu0 %v2918
    %v2980 = vpop.xlane.xlu0 %2979
    %2981 = vadd.xlane.f32.xlu0 %v2919
    %v2982 = vpop.xlane.xlu0 %2981
    %2983 = vadd.xlane.f32.xlu0 %v2920
    %v2984 = vpop.xlane.xlu0 %2983
    %v2985 = vmax.f32 %v2922, 1e-24
    %v2986 = vmax.f32 %v2924, 1e-24
    %v2987 = vmax.f32 %v2926, 1e-24
    %v2988 = vmax.f32 %v2928, 1e-24
    %v2989 = vmax.f32 %v2930, 1e-24
    %v2990 = vmax.f32 %v2932, 1e-24
    %v2991 = vmax.f32 %v2934, 1e-24
    %v2992 = vmax.f32 %v2936, 1e-24
    %v2993 = vmax.f32 %v2938, 1e-24
    %v2994 = vmax.f32 %v2940, 1e-24
    %v2995 = vmax.f32 %v2942, 1e-24
    %v2996 = vmax.f32 %v2944, 1e-24
    %v2997 = vmax.f32 %v2946, 1e-24
    %v2998 = vmax.f32 %v2948, 1e-24
    %v2999 = vmax.f32 %v2950, 1e-24
    %v3000 = vmax.f32 %v2952, 1e-24
    %v3001 = vmax.f32 %v2954, 1e-24
    %v3002 = vmax.f32 %v2956, 1e-24
    %v3003 = vmax.f32 %v2958, 1e-24
    %v3004 = vmax.f32 %v2960, 1e-24
    %v3005 = vmax.f32 %v2962, 1e-24
    %v3006 = vmax.f32 %v2964, 1e-24
    %v3007 = vmax.f32 %v2966, 1e-24
    %v3008 = vmax.f32 %v2968, 1e-24
    %v3009 = vmax.f32 %v2970, 1e-24
    %v3010 = vmax.f32 %v2972, 1e-24
    %v3011 = vmax.f32 %v2974, 1e-24
    %v3012 = vmax.f32 %v2976, 1e-24
    %v3013 = vmax.f32 %v2978, 1e-24
    %v3014 = vmax.f32 %v2980, 1e-24
    %v3015 = vmax.f32 %v2982, 1e-24
    %v3016 = vmax.f32 %v2984, 1e-24
    %v3017 = vrsqrt.pop %v2985
    %v3018 = vrsqrt.pop %v2986
    %v3019 = vrsqrt.pop %v2987
    %v3020 = vrsqrt.pop %v2988
    %v3021 = vrsqrt.pop %v2989
    %v3022 = vrsqrt.pop %v2990
    %v3023 = vrsqrt.pop %v2991
    %v3024 = vrsqrt.pop %v2992
    %v3025 = vrsqrt.pop %v2993
    %v3026 = vrsqrt.pop %v2994
    %v3027 = vrsqrt.pop %v2995
    %v3028 = vrsqrt.pop %v2996
    %v3029 = vrsqrt.pop %v2997
    %v3030 = vrsqrt.pop %v2998
    %v3031 = vrsqrt.pop %v2999
    %v3032 = vrsqrt.pop %v3000
    %v3033 = vrsqrt.pop %v3001
    %v3034 = vrsqrt.pop %v3002
    %v3035 = vrsqrt.pop %v3003
    %v3036 = vrsqrt.pop %v3004
    %v3037 = vrsqrt.pop %v3005
    %v3038 = vrsqrt.pop %v3006
    %v3039 = vrsqrt.pop %v3007
    %v3040 = vrsqrt.pop %v3008
    %v3041 = vrsqrt.pop %v3009
    %v3042 = vrsqrt.pop %v3010
    %v3043 = vrsqrt.pop %v3011
    %v3044 = vrsqrt.pop %v3012
    %v3045 = vrsqrt.pop %v3013
    %v3046 = vrsqrt.pop %v3014
    %v3047 = vrsqrt.pop %v3015
    %v3048 = vrsqrt.pop %v3016
    %v3049 = vmul.f32 %v2857, %v3017
    %v3050 = vmul.f32 %v2858, %v3018
    %v3051 = vmul.f32 %v2859, %v3019
    %v3052 = vmul.f32 %v2860, %v3020
    %v3053 = vmul.f32 %v2861, %v3021
    %v3054 = vmul.f32 %v2862, %v3022
    %v3055 = vmul.f32 %v2863, %v3023
    %v3056 = vmul.f32 %v2864, %v3024
    %v3057 = vmul.f32 %v2865, %v3025
    %v3058 = vmul.f32 %v2866, %v3026
    %v3059 = vmul.f32 %v2867, %v3027
    %v3060 = vmul.f32 %v2868, %v3028
    %v3061 = vmul.f32 %v2869, %v3029
    %v3062 = vmul.f32 %v2870, %v3030
    %v3063 = vmul.f32 %v2871, %v3031
    %v3064 = vmul.f32 %v2872, %v3032
    %v3065 = vmul.f32 %v2873, %v3033
    %v3066 = vmul.f32 %v2874, %v3034
    %v3067 = vmul.f32 %v2875, %v3035
    %v3068 = vmul.f32 %v2876, %v3036
    %v3069 = vmul.f32 %v2877, %v3037
    %v3070 = vmul.f32 %v2878, %v3038
    %v3071 = vmul.f32 %v2879, %v3039
    %v3072 = vmul.f32 %v2880, %v3040
    %v3073 = vmul.f32 %v2881, %v3041
    %v3074 = vmul.f32 %v2882, %v3042
    %v3075 = vmul.f32 %v2883, %v3043
    %v3076 = vmul.f32 %v2884, %v3044
    %v3077 = vmul.f32 %v2885, %v3045
    %v3078 = vmul.f32 %v2886, %v3046
    %v3079 = vmul.f32 %v2887, %v3047
    %v3080 = vmul.f32 %v2888, %v3048
    %v3081 = vmax.f32 %v3049, 0.0
    %v3082 = vmax.f32 %v3050, 0.0
    %v3083 = vmax.f32 %v3051, 0.0
    %v3084 = vmax.f32 %v3052, 0.0
    %v3085 = vmax.f32 %v3053, 0.0
    %v3086 = vmax.f32 %v3054, 0.0
    %v3087 = vmax.f32 %v3055, 0.0
    %v3088 = vmax.f32 %v3056, 0.0
    %v3089 = vmax.f32 %v3057, 0.0
    %v3090 = vmax.f32 %v3058, 0.0
    %v3091 = vmax.f32 %v3059, 0.0
    %v3092 = vmax.f32 %v3060, 0.0
    %v3093 = vmax.f32 %v3061, 0.0
    %v3094 = vmax.f32 %v3062, 0.0
    %v3095 = vmax.f32 %v3063, 0.0
    %v3096 = vmax.f32 %v3064, 0.0
    %v3097 = vmax.f32 %v3065, 0.0
    %v3098 = vmax.f32 %v3066, 0.0
    %v3099 = vmax.f32 %v3067, 0.0
    %v3100 = vmax.f32 %v3068, 0.0
    %v3101 = vmax.f32 %v3069, 0.0
    %v3102 = vmax.f32 %v3070, 0.0
    %v3103 = vmax.f32 %v3071, 0.0
    %v3104 = vmax.f32 %v3072, 0.0
    %v3105 = vmax.f32 %v3073, 0.0
    %v3106 = vmax.f32 %v3074, 0.0
    %v3107 = vmax.f32 %v3075, 0.0
    %v3108 = vmax.f32 %v3076, 0.0
    %v3109 = vmax.f32 %v3077, 0.0
    %v3110 = vmax.f32 %v3078, 0.0
    %v3111 = vmax.f32 %v3079, 0.0
    %v3112 = vmax.f32 %v3080, 0.0
    %v3113 = vadd.f32 %v3081, %v3082
    %v3114 = vadd.f32 %v3113, %v3083
    %v3115 = vadd.f32 %v3114, %v3084
    %v3116 = vadd.f32 %v3115, %v3085
    %v3117 = vadd.f32 %v3116, %v3086
    %v3118 = vadd.f32 %v3117, %v3087
    %v3119 = vadd.f32 %v3118, %v3088
    %v3120 = vadd.f32 %v3119, %v3089
    %v3121 = vadd.f32 %v3120, %v3090
    %v3122 = vadd.f32 %v3121, %v3091
    %v3123 = vadd.f32 %v3122, %v3092
    %v3124 = vadd.f32 %v3123, %v3093
    %v3125 = vadd.f32 %v3124, %v3094
    %v3126 = vadd.f32 %v3125, %v3095
    %v3127 = vadd.f32 %v3126, %v3096
    %v3128 = vadd.f32 %v3127, %v3097
    %v3129 = vadd.f32 %v3128, %v3098
    %v3130 = vadd.f32 %v3129, %v3099
    %v3131 = vadd.f32 %v3130, %v3100
    %v3132 = vadd.f32 %v3131, %v3101
    %v3133 = vadd.f32 %v3132, %v3102
    %v3134 = vadd.f32 %v3133, %v3103
    %v3135 = vadd.f32 %v3134, %v3104
    %v3136 = vadd.f32 %v3135, %v3105
    %v3137 = vadd.f32 %v3136, %v3106
    %v3138 = vadd.f32 %v3137, %v3107
    %v3139 = vadd.f32 %v3138, %v3108
    %v3140 = vadd.f32 %v3139, %v3109
    %v3141 = vadd.f32 %v3140, %v3110
    %v3142 = vadd.f32 %v3141, %v3111
    %v3143 = vadd.f32 %v3142, %v3112
    %v3144 = vrot.slane %v3143, 4
    %v3145 = vadd.f32 %v3143, %v3144
    %v3146 = vrot.slane %v3145, 2
    %v3147 = vadd.f32 %v3145, %v3146
    %v3148 = vrot.slane %v3147, 1
    %v3149 = vadd.f32 %v3147, %v3148
    %v3150 = vmul.f32 %v3149, %v1757
    %v3151 = vmul.f32 %v3081, %v3081
    %v3152 = vmul.f32 %v3082, %v3082
    %v3153 = vmul.f32 %v3083, %v3083
    %v3154 = vmul.f32 %v3084, %v3084
    %v3155 = vmul.f32 %v3085, %v3085
    %v3156 = vmul.f32 %v3086, %v3086
    %v3157 = vmul.f32 %v3087, %v3087
    %v3158 = vmul.f32 %v3088, %v3088
    %v3159 = vmul.f32 %v3089, %v3089
    %v3160 = vmul.f32 %v3090, %v3090
    %v3161 = vmul.f32 %v3091, %v3091
    %v3162 = vmul.f32 %v3092, %v3092
    %v3163 = vmul.f32 %v3093, %v3093
    %v3164 = vmul.f32 %v3094, %v3094
    %v3165 = vmul.f32 %v3095, %v3095
    %v3166 = vmul.f32 %v3096, %v3096
    %v3167 = vmul.f32 %v3097, %v3097
    %v3168 = vmul.f32 %v3098, %v3098
    %v3169 = vmul.f32 %v3099, %v3099
    %v3170 = vmul.f32 %v3100, %v3100
    %v3171 = vmul.f32 %v3101, %v3101
    %v3172 = vmul.f32 %v3102, %v3102
    %v3173 = vmul.f32 %v3103, %v3103
    %v3174 = vmul.f32 %v3104, %v3104
    %v3175 = vmul.f32 %v3105, %v3105
    %v3176 = vmul.f32 %v3106, %v3106
    %v3177 = vmul.f32 %v3107, %v3107
    %v3178 = vmul.f32 %v3108, %v3108
    %v3179 = vmul.f32 %v3109, %v3109
    %v3180 = vmul.f32 %v3110, %v3110
    %v3181 = vmul.f32 %v3111, %v3111
    %v3182 = vmul.f32 %v3112, %v3112
    %v3183 = vadd.f32 %v3151, %v3152
    %v3184 = vadd.f32 %v3183, %v3153
    %v3185 = vadd.f32 %v3184, %v3154
    %v3186 = vadd.f32 %v3185, %v3155
    %v3187 = vadd.f32 %v3186, %v3156
    %v3188 = vadd.f32 %v3187, %v3157
    %v3189 = vadd.f32 %v3188, %v3158
    %v3190 = vadd.f32 %v3189, %v3159
    %v3191 = vadd.f32 %v3190, %v3160
    %v3192 = vadd.f32 %v3191, %v3161
    %v3193 = vadd.f32 %v3192, %v3162
    %v3194 = vadd.f32 %v3193, %v3163
    %v3195 = vadd.f32 %v3194, %v3164
    %v3196 = vadd.f32 %v3195, %v3165
    %v3197 = vadd.f32 %v3196, %v3166
    %v3198 = vadd.f32 %v3197, %v3167
    %v3199 = vadd.f32 %v3198, %v3168
    %v3200 = vadd.f32 %v3199, %v3169
    %v3201 = vadd.f32 %v3200, %v3170
    %v3202 = vadd.f32 %v3201, %v3171
    %v3203 = vadd.f32 %v3202, %v3172
    %v3204 = vadd.f32 %v3203, %v3173
    %v3205 = vadd.f32 %v3204, %v3174
    %v3206 = vadd.f32 %v3205, %v3175
    %v3207 = vadd.f32 %v3206, %v3176
    %v3208 = vadd.f32 %v3207, %v3177
    %v3209 = vadd.f32 %v3208, %v3178
    %v3210 = vadd.f32 %v3209, %v3179
    %v3211 = vadd.f32 %v3210, %v3180
    %v3212 = vadd.f32 %v3211, %v3181
    %v3213 = vadd.f32 %v3212, %v3182
    %v3214 = vrot.slane %v3213, 4
    %v3215 = vadd.f32 %v3213, %v3214
    %v3216 = vrot.slane %v3215, 2
    %v3217 = vadd.f32 %v3215, %v3216
    %v3218 = vrot.slane %v3217, 1
    %v3219 = vadd.f32 %v3217, %v3218
    %v3220 = vmul.f32 %v3219, %v1757
    %v3221 = vmul.f32 %v3150, %v3150
    %v3222 = vsub.f32 %v3220, %v3221
    %v3223 = vmax.f32 %v3222, 0.0
    %v3224 = vsub.f32 %v3081, %v3150
    %v3225 = vsub.f32 %v3082, %v3150
    %v3226 = vsub.f32 %v3083, %v3150
    %v3227 = vsub.f32 %v3084, %v3150
    %v3228 = vsub.f32 %v3085, %v3150
    %v3229 = vsub.f32 %v3086, %v3150
    %v3230 = vsub.f32 %v3087, %v3150
    %v3231 = vsub.f32 %v3088, %v3150
    %v3232 = vsub.f32 %v3089, %v3150
    %v3233 = vsub.f32 %v3090, %v3150
    %v3234 = vsub.f32 %v3091, %v3150
    %v3235 = vsub.f32 %v3092, %v3150
    %v3236 = vsub.f32 %v3093, %v3150
    %v3237 = vsub.f32 %v3094, %v3150
    %v3238 = vsub.f32 %v3095, %v3150
    %v3239 = vsub.f32 %v3096, %v3150
    %v3240 = vsub.f32 %v3097, %v3150
    %v3241 = vsub.f32 %v3098, %v3150
    %v3242 = vsub.f32 %v3099, %v3150
    %v3243 = vsub.f32 %v3100, %v3150
    %v3244 = vsub.f32 %v3101, %v3150
    %v3245 = vsub.f32 %v3102, %v3150
    %v3246 = vsub.f32 %v3103, %v3150
    %v3247 = vsub.f32 %v3104, %v3150
    %v3248 = vsub.f32 %v3105, %v3150
    %v3249 = vsub.f32 %v3106, %v3150
    %v3250 = vsub.f32 %v3107, %v3150
    %v3251 = vsub.f32 %v3108, %v3150
    %v3252 = vsub.f32 %v3109, %v3150
    %v3253 = vsub.f32 %v3110, %v3150
    %v3254 = vsub.f32 %v3111, %v3150
    %v3255 = vsub.f32 %v3112, %v3150
    %v3256 = vadd.f32 %v3223, 1e-05
    %v3257 = vrsqrt.pop %v3256
    %v3258 = vmul.f32 %v3224, %v3257
    %v3259 = vmul.f32 %v3225, %v3257
    %v3260 = vmul.f32 %v3226, %v3257
    %v3261 = vmul.f32 %v3227, %v3257
    %v3262 = vmul.f32 %v3228, %v3257
    %v3263 = vmul.f32 %v3229, %v3257
    %v3264 = vmul.f32 %v3230, %v3257
    %v3265 = vmul.f32 %v3231, %v3257
    %v3266 = vmul.f32 %v3232, %v3257
    %v3267 = vmul.f32 %v3233, %v3257
    %v3268 = vmul.f32 %v3234, %v3257
    %v3269 = vmul.f32 %v3235, %v3257
    %v3270 = vmul.f32 %v3236, %v3257
    %v3271 = vmul.f32 %v3237, %v3257
    %v3272 = vmul.f32 %v3238, %v3257
    %v3273 = vmul.f32 %v3239, %v3257
    %v3274 = vmul.f32 %v3240, %v3257
    %v3275 = vmul.f32 %v3241, %v3257
    %v3276 = vmul.f32 %v3242, %v3257
    %v3277 = vmul.f32 %v3243, %v3257
    %v3278 = vmul.f32 %v3244, %v3257
    %v3279 = vmul.f32 %v3245, %v3257
    %v3280 = vmul.f32 %v3246, %v3257
    %v3281 = vmul.f32 %v3247, %v3257
    %v3282 = vmul.f32 %v3248, %v3257
    %v3283 = vmul.f32 %v3249, %v3257
    %v3284 = vmul.f32 %v3250, %v3257
    %v3285 = vmul.f32 %v3251, %v3257
    %v3286 = vmul.f32 %v3252, %v3257
    %v3287 = vmul.f32 %v3253, %v3257
    %v3288 = vmul.f32 %v3254, %v3257
    %v3289 = vmul.f32 %v3255, %v3257
    %v3290 = vld [vmem:[%s12] sm:$0x1]
    %v3292 = vlaneseq
    %v3293 = vshrl.u32 %v3292, 7
    %v3294 = vsub.s32 0, %v3293
    %v3295 = vrot.slane %v3290, %v3294
    %v3297 = vmul.f32 %v3258, %v3295
    %v3298 = vmul.f32 %v3259, %v3295
    %v3299 = vmul.f32 %v3260, %v3295
    %v3300 = vmul.f32 %v3261, %v3295
    %v3301 = vmul.f32 %v3262, %v3295
    %v3302 = vmul.f32 %v3263, %v3295
    %v3303 = vmul.f32 %v3264, %v3295
    %v3304 = vmul.f32 %v3265, %v3295
    %v3305 = vmul.f32 %v3266, %v3295
    %v3306 = vmul.f32 %v3267, %v3295
    %v3307 = vmul.f32 %v3268, %v3295
    %v3308 = vmul.f32 %v3269, %v3295
    %v3309 = vmul.f32 %v3270, %v3295
    %v3310 = vmul.f32 %v3271, %v3295
    %v3311 = vmul.f32 %v3272, %v3295
    %v3312 = vmul.f32 %v3273, %v3295
    %v3313 = vmul.f32 %v3274, %v3295
    %v3314 = vmul.f32 %v3275, %v3295
    %v3315 = vmul.f32 %v3276, %v3295
    %v3316 = vmul.f32 %v3277, %v3295
    %v3317 = vmul.f32 %v3278, %v3295
    %v3318 = vmul.f32 %v3279, %v3295
    %v3319 = vmul.f32 %v3280, %v3295
    %v3320 = vmul.f32 %v3281, %v3295
    %v3321 = vmul.f32 %v3282, %v3295
    %v3322 = vmul.f32 %v3283, %v3295
    %v3323 = vmul.f32 %v3284, %v3295
    %v3324 = vmul.f32 %v3285, %v3295
    %v3325 = vmul.f32 %v3286, %v3295
    %v3326 = vmul.f32 %v3287, %v3295
    %v3327 = vmul.f32 %v3288, %v3295
    %v3328 = vmul.f32 %v3289, %v3295
    %v3329 = vld [vmem:[%s13] sm:$0x1]
    %v3331 = vlaneseq
    %v3332 = vshrl.u32 %v3331, 7
    %v3333 = vsub.s32 0, %v3332
    %v3334 = vrot.slane %v3329, %v3333
    %v3336 = vadd.f32 %v3297, %v3334
    %v3337 = vadd.f32 %v3298, %v3334
    %v3338 = vadd.f32 %v3299, %v3334
    %v3339 = vadd.f32 %v3300, %v3334
    %v3340 = vadd.f32 %v3301, %v3334
    %v3341 = vadd.f32 %v3302, %v3334
    %v3342 = vadd.f32 %v3303, %v3334
    %v3343 = vadd.f32 %v3304, %v3334
    %v3344 = vadd.f32 %v3305, %v3334
    %v3345 = vadd.f32 %v3306, %v3334
    %v3346 = vadd.f32 %v3307, %v3334
    %v3347 = vadd.f32 %v3308, %v3334
    %v3348 = vadd.f32 %v3309, %v3334
    %v3349 = vadd.f32 %v3310, %v3334
    %v3350 = vadd.f32 %v3311, %v3334
    %v3351 = vadd.f32 %v3312, %v3334
    %v3352 = vadd.f32 %v3313, %v3334
    %v3353 = vadd.f32 %v3314, %v3334
    %v3354 = vadd.f32 %v3315, %v3334
    %v3355 = vadd.f32 %v3316, %v3334
    %v3356 = vadd.f32 %v3317, %v3334
    %v3357 = vadd.f32 %v3318, %v3334
    %v3358 = vadd.f32 %v3319, %v3334
    %v3359 = vadd.f32 %v3320, %v3334
    %v3360 = vadd.f32 %v3321, %v3334
    %v3361 = vadd.f32 %v3322, %v3334
    %v3362 = vadd.f32 %v3323, %v3334
    %v3363 = vadd.f32 %v3324, %v3334
    %v3364 = vadd.f32 %v3325, %v3334
    %v3365 = vadd.f32 %v3326, %v3334
    %v3366 = vadd.f32 %v3327, %v3334
    %v3367 = vadd.f32 %v3328, %v3334
    %v3368 = vadd.f32 %v3336, %v3337
    %v3369 = vadd.f32 %v3368, %v3338
    %v3370 = vadd.f32 %v3369, %v3339
    %v3371 = vrot.slane %v3370, 4
    %v3372 = vadd.f32 %v3370, %v3371
    %v3373 = vrot.slane %v3372, 2
    %v3374 = vadd.f32 %v3372, %v3373
    %v3375 = vrot.slane %v3374, 1
    %v3376 = vadd.f32 %v3374, %v3375
    %v3377 = vadd.f32 %v3340, %v3341
    %v3378 = vadd.f32 %v3377, %v3342
    %v3379 = vadd.f32 %v3378, %v3343
    %v3380 = vrot.slane %v3379, 4
    %v3381 = vadd.f32 %v3379, %v3380
    %v3382 = vrot.slane %v3381, 2
    %v3383 = vadd.f32 %v3381, %v3382
    %v3384 = vrot.slane %v3383, 1
    %v3385 = vadd.f32 %v3383, %v3384
    %v3386 = vadd.f32 %v3344, %v3345
    %v3387 = vadd.f32 %v3386, %v3346
    %v3388 = vadd.f32 %v3387, %v3347
    %v3389 = vrot.slane %v3388, 4
    %v3390 = vadd.f32 %v3388, %v3389
    %v3391 = vrot.slane %v3390, 2
    %v3392 = vadd.f32 %v3390, %v3391
    %v3393 = vrot.slane %v3392, 1
    %v3394 = vadd.f32 %v3392, %v3393
    %v3395 = vadd.f32 %v3348, %v3349
    %v3396 = vadd.f32 %v3395, %v3350
    %v3397 = vadd.f32 %v3396, %v3351
    %v3398 = vrot.slane %v3397, 4
    %v3399 = vadd.f32 %v3397, %v3398
    %v3400 = vrot.slane %v3399, 2
    %v3401 = vadd.f32 %v3399, %v3400
    %v3402 = vrot.slane %v3401, 1
    %v3403 = vadd.f32 %v3401, %v3402
    %v3404 = vadd.f32 %v3352, %v3353
    %v3405 = vadd.f32 %v3404, %v3354
    %v3406 = vadd.f32 %v3405, %v3355
    %v3407 = vrot.slane %v3406, 4
    %v3408 = vadd.f32 %v3406, %v3407
    %v3409 = vrot.slane %v3408, 2
    %v3410 = vadd.f32 %v3408, %v3409
    %v3411 = vrot.slane %v3410, 1
    %v3412 = vadd.f32 %v3410, %v3411
    %v3413 = vadd.f32 %v3356, %v3357
    %v3414 = vadd.f32 %v3413, %v3358
    %v3415 = vadd.f32 %v3414, %v3359
    %v3416 = vrot.slane %v3415, 4
    %v3417 = vadd.f32 %v3415, %v3416
    %v3418 = vrot.slane %v3417, 2
    %v3419 = vadd.f32 %v3417, %v3418
    %v3420 = vrot.slane %v3419, 1
    %v3421 = vadd.f32 %v3419, %v3420
    %v3422 = vadd.f32 %v3360, %v3361
    %v3423 = vadd.f32 %v3422, %v3362
    %v3424 = vadd.f32 %v3423, %v3363
    %v3425 = vrot.slane %v3424, 4
    %v3426 = vadd.f32 %v3424, %v3425
    %v3427 = vrot.slane %v3426, 2
    %v3428 = vadd.f32 %v3426, %v3427
    %v3429 = vrot.slane %v3428, 1
    %v3430 = vadd.f32 %v3428, %v3429
    %v3431 = vadd.f32 %v3364, %v3365
    %v3432 = vadd.f32 %v3431, %v3366
    %v3433 = vadd.f32 %v3432, %v3367
    %v3434 = vrot.slane %v3433, 4
    %v3435 = vadd.f32 %v3433, %v3434
    %v3436 = vrot.slane %v3435, 2
    %v3437 = vadd.f32 %v3435, %v3436
    %v3438 = vrot.slane %v3437, 1
    %v3439 = vadd.f32 %v3437, %v3438
    %v3440 = vrcp.pop 32.0
    %v3441 = vmul.f32 %v3376, %v3440
    %v3442 = vmul.f32 %v3385, %v3440
    %v3443 = vmul.f32 %v3394, %v3440
    %v3444 = vmul.f32 %v3403, %v3440
    %v3445 = vmul.f32 %v3412, %v3440
    %v3446 = vmul.f32 %v3421, %v3440
    %v3447 = vmul.f32 %v3430, %v3440
    %v3448 = vmul.f32 %v3439, %v3440
    %v3449 = vpack.c.bf16 %v3441, %v3441
    %v3450 = vpack.c.bf16 %v3442, %v3442
    %v3451 = vpack.c.bf16 %v3443, %v3443
    %v3452 = vpack.c.bf16 %v3444, %v3444
    %v3453 = vpack.c.bf16 %v3445, %v3445
    %v3454 = vpack.c.bf16 %v3446, %v3446
    %v3455 = vpack.c.bf16 %v3447, %v3447
    %v3456 = vpack.c.bf16 %v3448, %v3448
    %v3457 = vld [vmem:[%s14] sm:$0xf]
    %v3458 = vld [vmem:[%s14 + $0x4] sm:$0xf]
    %v3459 = vld [vmem:[%s14 + $0x8] sm:$0xf]
    %v3460 = vld [vmem:[%s14 + $0xc] sm:$0xf]
    %v3461 = vld [vmem:[%s14 + $0x10] sm:$0xf]
    %v3462 = vld [vmem:[%s14 + $0x14] sm:$0xf]
    %v3463 = vld [vmem:[%s14 + $0x18] sm:$0xf]
    %v3464 = vld [vmem:[%s14 + $0x1c] sm:$0xf]
    %v3465 = vld [vmem:[%s14 + $0x20] sm:$0xf]
    %v3466 = vld [vmem:[%s14 + $0x24] sm:$0xf]
    %v3467 = vld [vmem:[%s14 + $0x28] sm:$0xf]
    %v3468 = vld [vmem:[%s14 + $0x2c] sm:$0xf]
    %v3469 = vld [vmem:[%s14 + $0x30] sm:$0xf]
    %v3470 = vld [vmem:[%s14 + $0x34] sm:$0xf]
    %v3471 = vld [vmem:[%s14 + $0x38] sm:$0xf]
    %v3472 = vld [vmem:[%s14 + $0x3c] sm:$0xf]
    %v3481 = vunpack.c.l.b16 %v3449
    %v3482 = vunpack.c.l.b16 %v3450
    %v3483 = vunpack.c.l.b16 %v3451
    %v3484 = vunpack.c.l.b16 %v3452
    %v3485 = vunpack.c.l.b16 %v3453
    %v3486 = vunpack.c.l.b16 %v3454
    %v3487 = vunpack.c.l.b16 %v3455
    %v3488 = vunpack.c.l.b16 %v3456
    %vm3489 = vcmask 1041409
    %v3490 = vsel %vm3489, %v3482, %v3481
    %vm3491 = vcmask 1042434
    %v3492 = vsel %vm3491, %v3483, %v3490
    %vm3493 = vcmask 1043459
    %v3494 = vsel %vm3493, %v3484, %v3492
    %vm3495 = vcmask 1044484
    %v3496 = vsel %vm3495, %v3485, %v3494
    %vm3497 = vcmask 1045509
    %v3498 = vsel %vm3497, %v3486, %v3496
    %vm3499 = vcmask 1046534
    %v3500 = vsel %vm3499, %v3487, %v3498
    %vm3501 = vcmask 1047559
    %v3502 = vsel %vm3501, %v3488, %v3500
    %v3503 = vpack.c.b16 %v3502, %v3502
    %v3521 = vunpack.c.l.b16 %v3457
    %v3522 = vunpack.c.l.b16 %v3458
    %v3523 = vunpack.c.l.b16 %v3459
    %v3524 = vunpack.c.l.b16 %v3460
    %v3525 = vunpack.c.l.b16 %v3461
    %v3526 = vunpack.c.l.b16 %v3462
    %v3527 = vunpack.c.l.b16 %v3463
    %v3528 = vunpack.c.l.b16 %v3464
    %v3529 = vunpack.c.l.b16 %v3465
    %v3530 = vunpack.c.l.b16 %v3466
    %v3531 = vunpack.c.l.b16 %v3467
    %v3532 = vunpack.c.l.b16 %v3468
    %v3533 = vunpack.c.l.b16 %v3469
    %v3534 = vunpack.c.l.b16 %v3470
    %v3535 = vunpack.c.l.b16 %v3471
    %v3536 = vunpack.c.l.b16 %v3472
    %v3537 = vpack.c.b16 %v3522, %v3521
    %v3538 = vpack.c.b16 %v3524, %v3523
    %v3539 = vpack.c.b16 %v3526, %v3525
    %v3540 = vpack.c.b16 %v3528, %v3527
    %v3541 = vpack.c.b16 %v3530, %v3529
    %v3542 = vpack.c.b16 %v3532, %v3531
    %v3543 = vpack.c.b16 %v3534, %v3533
    %v3544 = vpack.c.b16 %v3536, %v3535
    %3553 = vmatprep.subr.bf16.mxu0 0
    %3554 = vmatpush1.bf16.msra.mxu0 %v3544
    %3555 = vmatprep.subr.bf16.mxu0 0
    %3556 = vmatpush1.bf16.msra.mxu0 %v3543
    %3557 = vmatprep.subr.bf16.mxu0 0
    %3558 = vmatpush1.bf16.msra.mxu0 %v3542
    %3559 = vmatprep.subr.bf16.mxu0 0
    %3560 = vmatpush1.bf16.msra.mxu0 %v3541
    %3561 = vmatprep.subr.bf16.mxu0 0
    %3562 = vmatpush1.bf16.msra.mxu0 %v3540
    %3563 = vmatprep.subr.bf16.mxu0 0
    %3564 = vmatpush1.bf16.msra.mxu0 %v3539
    %3565 = vmatprep.subr.bf16.mxu0 0
    %3566 = vmatpush1.bf16.msra.mxu0 %v3538
    %3567 = vmatprep.subr.bf16.mxu0 0
    %3568 = vmatpush1.bf16.msra.mxu0 %v3537
    %3569 = vmatprep.subr.bf16.mxu0 0
    %3570 = vmatpush2.bf16.msra.mxu0 0
    %3571 = vmatprep.subr.bf16.mxu0 0
    %3572 = vmatpush2.bf16.msra.mxu0 0
    %3573 = vmatprep.subr.bf16.mxu0 0
    %3574 = vmatpush2.bf16.msra.mxu0 0
    %3575 = vmatprep.subr.bf16.mxu0 0
    %3576 = vmatpush2.bf16.msra.mxu0 0
    %3577 = vmatprep.subr.bf16.mxu0 0
    %3578 = vmatpush2.bf16.msra.mxu0 0
    %3579 = vmatprep.subr.bf16.mxu0 0
    %3580 = vmatpush2.bf16.msra.mxu0 0
    %3581 = vmatprep.subr.bf16.mxu0 0
    %3582 = vmatpush2.bf16.msra.mxu0 0
    %3583 = vmatprep.subr.bf16.mxu0 0
    %3584 = vmatpush2.bf16.msra.mxu0 0
    %3585 = vmatprep.mubr.bf16.mxu0 0
    %3586 = vmatmul.mubr.bf16.gmra.mxu0 %v3503
    %v3587 = vpop.f32.mrf.mxu0
    %v3588 = vadd.f32 0.0, %v3587
    %v3589 = vpop.f32.mrf.mxu0
    %v3590 = vpop.f32.mrf.mxu0
    %v3591 = vpop.f32.mrf.mxu0
    %3592 = vdwg.mxu0
    %3593 = vst [vmem:[#allocation2] sm:$0xff] %v3588
    // Predicated region
    $region62: #{graphsage_net_forward.1} parent=1 // pred_check
      _
    $region63: #{graphsage_net_forward.1} parent=1 // pred_check_branch
      %3595 = sbr.rel (0) target = $region65
    $region64: #{graphsage_net_forward.1} parent=1 // pred_region
      %s3597 = ssub.s32 128, 128
      %3598 = vsyncadd [#allocation3], %s3597
      %s3600 = sshll.u32 [#allocation2], 4
      %s3601 = int_to_ptr.vmem [resolvable:$true] %s3600
      %3603 = dma.vmem_to_hbm [thread:$0]  %s3601, 128, %s15, [#allocation3]
    $region65: #{graphsage_net_forward.1} parent=1 // pred_fallthru
      _
    // Predicated region
    $region66: #{graphsage_net_forward.1} parent=1 // pred_check
      _
    $region67: #{graphsage_net_forward.1} parent=1 // pred_check_branch
      %3605 = sbr.rel (0) target = $region69
    $region68: #{graphsage_net_forward.1} parent=1 // pred_region
      %3606 = dma.done [#allocation3], 128
    $region69: #{graphsage_net_forward.1} parent=1 // pred_fallthru
      _
    %3607 = vsyncpa [#allocation3], 1

</llo_original>
